<compile_context>
chip_gen: v7x
topology: tpu7x:2x2x1
jax: 0.10.0
libtpu: 0.0.40
codegen_flags: <defaults>
</compile_context>

<pallas_src>
import functools

import jax
import jax.numpy as jnp
from jax.experimental import pallas as pl
from jax.experimental.pallas import tpu as pltpu


def _round_up(x: int, m: int) -> int:
    return ((x + m - 1) // m) * m


def _gcn_kernel(x_ref, at_ref, w_ref, b_ref, o_ref, g_ref, *, order: int,
                n_support: int):
    """One position-tile.

    x_ref : (C, V8, TP)   input features (nodes on sublanes, positions on lanes)
    at_ref: (S, V8, V8)   transposed supports, At[s] = A_s^T           (resident)
    w_ref : (O, KC)       1x1-conv weight                              (resident)
    b_ref : (1, O, 1)     bias, f32                                    (resident)
    o_ref : (V8, O, TP)   output tile
    g_ref : (V8, KC, TP)  VMEM scratch holding the channel-concat of all K parts
    """
    c_in, v8, tp = x_ref.shape
    dt = x_ref.dtype

    x = x_ref[...]                                        # (C, V8, TP)
    # Part 0 (identity): stash into the concat scratch (nodes -> leading axis).
    g_ref[:, 0:c_in, :] = jnp.transpose(x, (1, 0, 2))     # (V8, C, TP)

    # Graph propagation: for each support, `order` hops. Each hop is a batched-over-C
    # set of (V8, V8) @ (V8, TP) MXU matmuls: A^T stationary, the large position axis
    # streams through the lanes. f32 accumulation on the MXU.
    for s in range(n_support):
        at_b = jnp.broadcast_to(at_ref[s], (c_in, v8, v8))   # hoisted out of the hop loop
        cur = x
        for m in range(order):
            cur = jnp.einsum(
                "cwv,cvp->cwp", at_b, cur,
                preferred_element_type=jnp.float32,
            ).astype(dt)
            k = 1 + s * order + m
            g_ref[:, k * c_in:(k + 1) * c_in, :] = jnp.transpose(cur, (1, 0, 2))

    # Fused 1x1 conv (channel mix): per node v, (O, KC) @ (KC, TP) on the MXU with f32
    # accumulation. The concatenated `h` only ever exists in the VMEM scratch.
    g = g_ref[...]                                        # (V8, KC, TP)
    w_b = jnp.broadcast_to(w_ref[...], (v8,) + w_ref.shape)   # (V8, O, KC)
    acc = jnp.einsum("voq,vqp->vop", w_b, g,
                     preferred_element_type=jnp.float32)  # (V8, O, TP), f32
    acc = acc + b_ref[...]                                # bias (1, O, 1) broadcast
    o_ref[...] = acc.astype(o_ref.dtype)


def _vmem_bytes_estimate(tp, c_in, v8, o_out, kc, n_sup, itemsize):
    """Rough per-grid-step VMEM footprint (double-buffered IO + scratch + live values)."""
    dbl_io = 2 * c_in * v8 * tp * itemsize + 2 * v8 * o_out * tp * itemsize
    resident = n_sup * v8 * v8 * itemsize + o_out * kc * itemsize + o_out * 4
    scratch = v8 * kc * tp * itemsize
    live = 3 * c_in * v8 * tp * itemsize          # x, cur, transposed part
    live += c_in * v8 * v8 * itemsize             # broadcast A^T
    live += v8 * o_out * kc * itemsize            # broadcast W
    live += 2 * v8 * o_out * tp * 4               # f32 accumulator + store staging
    return dbl_io + resident + scratch + live


def gcn_forward(x, supports, w, b, *, order=2, tile_p=None):
    """Fused GCN forward.

    x        : (N, C, V, L)   batch, channels, nodes, time
    supports : list of (V, V) support matrices
    w        : (c_out, (order*len(supports)+1)*C)  1x1-conv weight (spatial dims squeezed)
    b        : (c_out,)
    returns  : (N, c_out, V, L)
    """
    N, C, V, L = x.shape
    S = len(supports)
    K = order * S + 1
    KC = K * C
    O = w.shape[0]
    assert w.shape == (O, KC), f"weight must be (c_out, {KC}), got {w.shape}"
    assert b.shape == (O,)

    dtype = x.dtype
    itemsize = jnp.dtype(dtype).itemsize
    P = N * L
    V8 = _round_up(V, 8)

    # --- VMEM budget (generation aware: v7x 64 MiB/TC, v5e/v6e 128 MiB) ------------
    vmem_cap = 64 * 1024 * 1024
    try:
        vmem_cap = int(getattr(pltpu.get_tpu_info(), "vmem_capacity_bytes", vmem_cap))
    except Exception:
        pass
    budget = min(int(vmem_cap * 0.75), 100 * 1024 * 1024)

    # --- position-tile selection ----------------------------------------------------
    # Multi-tile blocks keep the lane (last) dim a multiple of 128; small problems use a
    # single tile equal to the (8-rounded) full position extent.
    if tile_p is None:
        if P <= 256:
            tile_p = _round_up(P, 8)
        else:
            tile_p = 512
            while tile_p > 128 and (
                _vmem_bytes_estimate(tile_p, C, V8, O, KC, S, itemsize) > budget
                or P // tile_p < 2
            ):
                tile_p //= 2
    else:
        tile_p = int(tile_p)
        if tile_p >= P:
            tile_p = _round_up(P, 8)
        else:
            tile_p = _round_up(tile_p, 128)
    P_pad = _round_up(P, tile_p)

    est = _vmem_bytes_estimate(tile_p, C, V8, O, KC, S, itemsize)
    vmem_limit = int(min(max(budget, est + (8 << 20)), int(vmem_cap * 0.9)))
    vmem_limit = max(vmem_limit, 32 * 1024 * 1024)

    # --- layout plumbing --------------------------------------------------------------
    # (N, C, V, L) -> (C, V8, P_pad): nodes on sublanes, positions (large) on lanes.
    x_cvp = jnp.transpose(x, (1, 2, 0, 3)).reshape(C, V, P)
    x_cvp = jnp.pad(x_cvp, ((0, 0), (0, V8 - V), (0, P_pad - P)))

    at = jnp.stack([jnp.transpose(a) for a in supports]).astype(dtype)   # (S, V, V)
    at = jnp.pad(at, ((0, 0), (0, V8 - V), (0, V8 - V)))

    w_k = w.astype(dtype)                                   # (O, KC)
    b_k = b.astype(jnp.float32).reshape(1, O, 1)

    grid = (P_pad // tile_p,)
    kernel = functools.partial(_gcn_kernel, order=order, n_support=S)

    out = pl.pallas_call(
        kernel,
        out_shape=jax.ShapeDtypeStruct((V8, O, P_pad), dtype),
        grid_spec=pltpu.PrefetchScalarGridSpec(
            num_scalar_prefetch=0,
            grid=grid,
            in_specs=[
                pl.BlockSpec((C, V8, tile_p), lambda i: (0, 0, i)),   # x          (streamed)
                # TODO(synk): pipeline_mode=pl.Buffered(1) on the resident operands would
                # save their second pipeline buffer; left at defaults for portability.
                pl.BlockSpec((S, V8, V8), lambda i: (0, 0, 0)),       # supports^T (resident)
                pl.BlockSpec((O, KC), lambda i: (0, 0)),              # weight     (resident)
                pl.BlockSpec((1, O, 1), lambda i: (0, 0, 0)),         # bias       (resident)
            ],
            out_specs=pl.BlockSpec((V8, O, tile_p), lambda i: (0, 0, i)),
            scratch_shapes=[pltpu.VMEM((V8, KC, tile_p), dtype)],
        ),
        compiler_params=pltpu.CompilerParams(
            dimension_semantics=("parallel",),
            vmem_limit_bytes=vmem_limit,
        ),
    )(x_cvp, at, w_k, b_k)

    # Strip padding, back to (N, c_out, V, L).
    out = out[:V, :, :P].reshape(V, O, N, L)
    return jnp.transpose(out, (2, 1, 0, 3))
    # TODO(synk): F.dropout omitted (inference / eval semantics -> identity).


def gcn_reference(x, supports, w, b, *, order=2):
    """Pure-JAX reference matching PyTorch GCN.forward (eval mode)."""
    out = [x]
    for a in supports:
        x1 = jnp.einsum("ncvl,vw->ncwl", x, a)
        out.append(x1)
        for _ in range(2, order + 1):
            x2 = jnp.einsum("ncvl,vw->ncwl", x1, a)
            out.append(x2)
            x1 = x2
    h = jnp.concatenate(out, axis=1)                        # (N, K*C, V, L)
    return jnp.einsum("nkvl,ok->novl", h, w) + b[None, :, None, None]


if __name__ == "__main__":
    key = jax.random.PRNGKey(0)
    configs = [
        # (N, C_in, V, L, support_len, order, C_out, tile_p)
        dict(N=2, C_in=4, V=16, L=16, support_len=3, order=2, C_out=8, tile_p=None),
        # larger P and non-multiple-of-8 V to exercise the multi-tile grid + node padding
        dict(N=2, C_in=4, V=12, L=256, support_len=3, order=2, C_out=8, tile_p=128),
    ]
    for cfg in configs:
        N, C_in, V, L = cfg["N"], cfg["C_in"], cfg["V"], cfg["L"]
        support_len, order, C_out = cfg["support_len"], cfg["order"], cfg["C_out"]
        KC = (order * support_len + 1) * C_in

        keys = jax.random.split(key, 3 + support_len)
        x = jax.random.normal(keys[0], (N, C_in, V, L), dtype=jnp.float32)
        supports = [
            jax.random.normal(keys[3 + i], (V, V), dtype=jnp.float32) * 0.25
            for i in range(support_len)
        ]
        # 1x1 Conv2d parameters (kernel spatial dims squeezed away).
        w = jax.random.normal(keys[1], (C_out, KC), dtype=jnp.float32) * 0.05
        b = jax.random.normal(keys[2], (C_out,), dtype=jnp.float32) * 0.05

        out = gcn_forward(x, supports, w, b, order=order, tile_p=cfg["tile_p"])
        out = jax.block_until_ready(out)

        ref = gcn_reference(x, supports, w, b, order=order)
        assert out.shape == (N, C_out, V, L)
        err = float(jnp.max(jnp.abs(out - ref)))
        assert jnp.allclose(out, ref, atol=2e-4, rtol=2e-4), err

    print("KERNEL_OK")
</pallas_src>

<mosaic_0001>
module attributes {stable_mosaic.version = 11 : i64} {
  func.func @_gcn_kernel(%arg0: i32, %arg1: memref<4x16x32xf32, #tpu.memory_space<vmem>>, %arg2: memref<3x16x16xf32, #tpu.memory_space<vmem>>, %arg3: memref<8x28xf32, #tpu.memory_space<vmem>>, %arg4: memref<1x8x1xf32, #tpu.memory_space<vmem>>, %arg5: memref<16x8x32xf32, #tpu.memory_space<vmem>>, %arg6: memref<16x28x32xf32, #tpu.memory_space<vmem>>) attributes {dimension_semantics = [#tpu.dimension_semantics<parallel>], iteration_bounds = array<i64: 1>, scalar_prefetch = 0 : i64, scratch_operands = 1 : i64, tpu.core_type = #tpu.core_type<tc>, window_params = [{transform_indices = @transform_0, window_bounds = array<i64: 4, 16, 32>}, {pipeline_mode = #tpu.pipeline_mode<synchronous>, transform_indices = @transform_1, window_bounds = array<i64: 3, 16, 16>}, {pipeline_mode = #tpu.pipeline_mode<synchronous>, transform_indices = @transform_2, window_bounds = array<i64: 8, 28>}, {pipeline_mode = #tpu.pipeline_mode<synchronous>, transform_indices = @transform_3, window_bounds = array<i64: 1, 8, 1>}, {transform_indices = @transform_4, window_bounds = array<i64: 16, 8, 32>}]} {
    %c0 = arith.constant 0 : index
    %c0_0 = arith.constant 0 : index
    %c0_1 = arith.constant 0 : index
    %0 = vector.load %arg1[%c0, %c0_0, %c0_1] : memref<4x16x32xf32, #tpu.memory_space<vmem>>, vector<4x16x32xf32>
    %1 = tpu.transpose %0, [1, 0, 2] : vector<4x16x32xf32> -> vector<16x4x32xf32>
    %c0_2 = arith.constant 0 : index
    %c0_3 = arith.constant 0 : index
    %c0_4 = arith.constant 0 : index
    %2 = vector.load %arg6[%c0_2, %c0_3, %c0_4] : memref<16x28x32xf32, #tpu.memory_space<vmem>>, vector<16x4x32xf32>
    tpu.vector_store %arg6[%c0_2, %c0_3, %c0_4], %1 {strides = array<i32>} : memref<16x28x32xf32, #tpu.memory_space<vmem>>, vector<16x4x32xf32>,
    %c0_5 = arith.constant 0 : index
    %c0_6 = arith.constant 0 : index
    %c0_7 = arith.constant 0 : index
    %3 = vector.load %arg2[%c0_5, %c0_6, %c0_7] : memref<3x16x16xf32, #tpu.memory_space<vmem>>, vector<1x16x16xf32>
    %4 = vector.shape_cast %3 : vector<1x16x16xf32> to vector<16x16xf32>
    %5 = vector.shape_cast %4 : vector<16x16xf32> to vector<1x16x16xf32>
    %6 = vector.broadcast %5 : vector<1x16x16xf32> to vector<4x16x16xf32>
    "tpu.trace_start"() <{level = 10 : i32, message = "cwv,cvp->cwp"}> : () -> ()
    %cst = arith.constant dense<0.000000e+00> : vector<4x16x32xf32>
    %7 = tpu.matmul %6, %0, %cst {dimension_numbers = #tpu.dot_dimension_numbers<[2], [1], [1], [2], [0, 0, 0, 1, 1, 2], [0], [0]>} : vector<4x16x16xf32>, vector<4x16x32xf32>, vector<4x16x32xf32> -> vector<4x16x32xf32>
    "tpu.trace_stop"() : () -> ()
    %8 = tpu.transpose %7, [1, 0, 2] : vector<4x16x32xf32> -> vector<16x4x32xf32>
    %c0_8 = arith.constant 0 : index
    %c4 = arith.constant 4 : index
    %c0_9 = arith.constant 0 : index
    %9 = vector.load %arg6[%c0_8, %c4, %c0_9] : memref<16x28x32xf32, #tpu.memory_space<vmem>>, vector<16x4x32xf32>
    tpu.vector_store %arg6[%c0_8, %c4, %c0_9], %8 {strides = array<i32>} : memref<16x28x32xf32, #tpu.memory_space<vmem>>, vector<16x4x32xf32>,
    "tpu.trace_start"() <{level = 10 : i32, message = "cwv,cvp->cwp"}> : () -> ()
    %cst_10 = arith.constant dense<0.000000e+00> : vector<4x16x32xf32>
    %10 = tpu.matmul %6, %7, %cst_10 {dimension_numbers = #tpu.dot_dimension_numbers<[2], [1], [1], [2], [0, 0, 0, 1, 1, 2], [0], [0]>} : vector<4x16x16xf32>, vector<4x16x32xf32>, vector<4x16x32xf32> -> vector<4x16x32xf32>
    "tpu.trace_stop"() : () -> ()
    %11 = tpu.transpose %10, [1, 0, 2] : vector<4x16x32xf32> -> vector<16x4x32xf32>
    %c0_11 = arith.constant 0 : index
    %c8 = arith.constant 8 : index
    %c0_12 = arith.constant 0 : index
    %12 = vector.load %arg6[%c0_11, %c8, %c0_12] : memref<16x28x32xf32, #tpu.memory_space<vmem>>, vector<16x4x32xf32>
    tpu.vector_store %arg6[%c0_11, %c8, %c0_12], %11 {strides = array<i32>} : memref<16x28x32xf32, #tpu.memory_space<vmem>>, vector<16x4x32xf32>,
    %c1 = arith.constant 1 : index
    %c0_13 = arith.constant 0 : index
    %c0_14 = arith.constant 0 : index
    %13 = vector.load %arg2[%c1, %c0_13, %c0_14] : memref<3x16x16xf32, #tpu.memory_space<vmem>>, vector<1x16x16xf32>
    %14 = vector.shape_cast %13 : vector<1x16x16xf32> to vector<16x16xf32>
    %15 = vector.shape_cast %14 : vector<16x16xf32> to vector<1x16x16xf32>
    %16 = vector.broadcast %15 : vector<1x16x16xf32> to vector<4x16x16xf32>
    "tpu.trace_start"() <{level = 10 : i32, message = "cwv,cvp->cwp"}> : () -> ()
    %cst_15 = arith.constant dense<0.000000e+00> : vector<4x16x32xf32>
    %17 = tpu.matmul %16, %0, %cst_15 {dimension_numbers = #tpu.dot_dimension_numbers<[2], [1], [1], [2], [0, 0, 0, 1, 1, 2], [0], [0]>} : vector<4x16x16xf32>, vector<4x16x32xf32>, vector<4x16x32xf32> -> vector<4x16x32xf32>
    "tpu.trace_stop"() : () -> ()
    %18 = tpu.transpose %17, [1, 0, 2] : vector<4x16x32xf32> -> vector<16x4x32xf32>
    %c0_16 = arith.constant 0 : index
    %c12 = arith.constant 12 : index
    %c0_17 = arith.constant 0 : index
    %19 = vector.load %arg6[%c0_16, %c12, %c0_17] : memref<16x28x32xf32, #tpu.memory_space<vmem>>, vector<16x4x32xf32>
    tpu.vector_store %arg6[%c0_16, %c12, %c0_17], %18 {strides = array<i32>} : memref<16x28x32xf32, #tpu.memory_space<vmem>>, vector<16x4x32xf32>,
    "tpu.trace_start"() <{level = 10 : i32, message = "cwv,cvp->cwp"}> : () -> ()
    %cst_18 = arith.constant dense<0.000000e+00> : vector<4x16x32xf32>
    %20 = tpu.matmul %16, %17, %cst_18 {dimension_numbers = #tpu.dot_dimension_numbers<[2], [1], [1], [2], [0, 0, 0, 1, 1, 2], [0], [0]>} : vector<4x16x16xf32>, vector<4x16x32xf32>, vector<4x16x32xf32> -> vector<4x16x32xf32>
    "tpu.trace_stop"() : () -> ()
    %21 = tpu.transpose %20, [1, 0, 2] : vector<4x16x32xf32> -> vector<16x4x32xf32>
    %c0_19 = arith.constant 0 : index
    %c16 = arith.constant 16 : index
    %c0_20 = arith.constant 0 : index
    %22 = vector.load %arg6[%c0_19, %c16, %c0_20] : memref<16x28x32xf32, #tpu.memory_space<vmem>>, vector<16x4x32xf32>
    tpu.vector_store %arg6[%c0_19, %c16, %c0_20], %21 {strides = array<i32>} : memref<16x28x32xf32, #tpu.memory_space<vmem>>, vector<16x4x32xf32>,
    %c2 = arith.constant 2 : index
    %c0_21 = arith.constant 0 : index
    %c0_22 = arith.constant 0 : index
    %23 = vector.load %arg2[%c2, %c0_21, %c0_22] : memref<3x16x16xf32, #tpu.memory_space<vmem>>, vector<1x16x16xf32>
    %24 = vector.shape_cast %23 : vector<1x16x16xf32> to vector<16x16xf32>
    %25 = vector.shape_cast %24 : vector<16x16xf32> to vector<1x16x16xf32>
    %26 = vector.broadcast %25 : vector<1x16x16xf32> to vector<4x16x16xf32>
    "tpu.trace_start"() <{level = 10 : i32, message = "cwv,cvp->cwp"}> : () -> ()
    %cst_23 = arith.constant dense<0.000000e+00> : vector<4x16x32xf32>
    %27 = tpu.matmul %26, %0, %cst_23 {dimension_numbers = #tpu.dot_dimension_numbers<[2], [1], [1], [2], [0, 0, 0, 1, 1, 2], [0], [0]>} : vector<4x16x16xf32>, vector<4x16x32xf32>, vector<4x16x32xf32> -> vector<4x16x32xf32>
    "tpu.trace_stop"() : () -> ()
    %28 = tpu.transpose %27, [1, 0, 2] : vector<4x16x32xf32> -> vector<16x4x32xf32>
    %c0_24 = arith.constant 0 : index
    %c20 = arith.constant 20 : index
    %c0_25 = arith.constant 0 : index
    %29 = vector.load %arg6[%c0_24, %c20, %c0_25] : memref<16x28x32xf32, #tpu.memory_space<vmem>>, vector<16x4x32xf32>
    tpu.vector_store %arg6[%c0_24, %c20, %c0_25], %28 {strides = array<i32>} : memref<16x28x32xf32, #tpu.memory_space<vmem>>, vector<16x4x32xf32>,
    "tpu.trace_start"() <{level = 10 : i32, message = "cwv,cvp->cwp"}> : () -> ()
    %cst_26 = arith.constant dense<0.000000e+00> : vector<4x16x32xf32>
    %30 = tpu.matmul %26, %27, %cst_26 {dimension_numbers = #tpu.dot_dimension_numbers<[2], [1], [1], [2], [0, 0, 0, 1, 1, 2], [0], [0]>} : vector<4x16x16xf32>, vector<4x16x32xf32>, vector<4x16x32xf32> -> vector<4x16x32xf32>
    "tpu.trace_stop"() : () -> ()
    %31 = tpu.transpose %30, [1, 0, 2] : vector<4x16x32xf32> -> vector<16x4x32xf32>
    %c0_27 = arith.constant 0 : index
    %c24 = arith.constant 24 : index
    %c0_28 = arith.constant 0 : index
    %32 = vector.load %arg6[%c0_27, %c24, %c0_28] : memref<16x28x32xf32, #tpu.memory_space<vmem>>, vector<16x4x32xf32>
    tpu.vector_store %arg6[%c0_27, %c24, %c0_28], %31 {strides = array<i32>} : memref<16x28x32xf32, #tpu.memory_space<vmem>>, vector<16x4x32xf32>,
    %c0_29 = arith.constant 0 : index
    %c0_30 = arith.constant 0 : index
    %c0_31 = arith.constant 0 : index
    %33 = vector.load %arg6[%c0_29, %c0_30, %c0_31] : memref<16x28x32xf32, #tpu.memory_space<vmem>>, vector<16x28x32xf32>
    %c0_32 = arith.constant 0 : index
    %c0_33 = arith.constant 0 : index
    %34 = vector.load %arg3[%c0_32, %c0_33] : memref<8x28xf32, #tpu.memory_space<vmem>>, vector<8x28xf32>
    %35 = vector.shape_cast %34 : vector<8x28xf32> to vector<1x8x28xf32>
    %36 = vector.broadcast %35 : vector<1x8x28xf32> to vector<16x8x28xf32>
    "tpu.trace_start"() <{level = 10 : i32, message = "voq,vqp->vop"}> : () -> ()
    %cst_34 = arith.constant dense<0.000000e+00> : vector<16x8x32xf32>
    %37 = tpu.matmul %36, %33, %cst_34 {dimension_numbers = #tpu.dot_dimension_numbers<[2], [1], [1], [2], [0, 0, 0, 1, 1, 2], [0], [0]>} : vector<16x8x28xf32>, vector<16x28x32xf32>, vector<16x8x32xf32> -> vector<16x8x32xf32>
    "tpu.trace_stop"() : () -> ()
    %c0_35 = arith.constant 0 : index
    %c0_36 = arith.constant 0 : index
    %c0_37 = arith.constant 0 : index
    %38 = vector.load %arg4[%c0_35, %c0_36, %c0_37] : memref<1x8x1xf32, #tpu.memory_space<vmem>>, vector<1x8x1xf32>
    %39 = vector.broadcast %38 : vector<1x8x1xf32> to vector<16x8x32xf32>
    %40 = arith.addf %37, %39 : vector<16x8x32xf32>
    %c0_38 = arith.constant 0 : index
    %c0_39 = arith.constant 0 : index
    %c0_40 = arith.constant 0 : index
    %41 = vector.load %arg5[%c0_38, %c0_39, %c0_40] : memref<16x8x32xf32, #tpu.memory_space<vmem>>, vector<16x8x32xf32>
    tpu.vector_store %arg5[%c0_38, %c0_39, %c0_40], %40 {strides = array<i32>} : memref<16x8x32xf32, #tpu.memory_space<vmem>>, vector<16x8x32xf32>,
    return
  }
  func.func @transform_0(%arg0: i32) -> (i32, i32, i32) {
    %c0_i32 = arith.constant 0 : i32
    %c0_i32_0 = arith.constant 0 : i32
    %c0_i32_1 = arith.constant 0 : i32
    return %c0_i32, %c0_i32_0, %arg0 : i32, i32, i32
  }
  func.func @transform_1(%arg0: i32) -> (i32, i32, i32) {
    %c0_i32 = arith.constant 0 : i32
    %c0_i32_0 = arith.constant 0 : i32
    %c0_i32_1 = arith.constant 0 : i32
    %c0_i32_2 = arith.constant 0 : i32
    return %c0_i32, %c0_i32_0, %c0_i32_1 : i32, i32, i32
  }
  func.func @transform_2(%arg0: i32) -> (i32, i32) {
    %c0_i32 = arith.constant 0 : i32
    %c0_i32_0 = arith.constant 0 : i32
    %c0_i32_1 = arith.constant 0 : i32
    return %c0_i32, %c0_i32_0 : i32, i32
  }
  func.func @transform_3(%arg0: i32) -> (i32, i32, i32) {
    %c0_i32 = arith.constant 0 : i32
    %c0_i32_0 = arith.constant 0 : i32
    %c0_i32_1 = arith.constant 0 : i32
    %c0_i32_2 = arith.constant 0 : i32
    return %c0_i32, %c0_i32_0, %c0_i32_1 : i32, i32, i32
  }
  func.func @transform_4(%arg0: i32) -> (i32, i32, i32) {
    %c0_i32 = arith.constant 0 : i32
    %c0_i32_0 = arith.constant 0 : i32
    %c0_i32_1 = arith.constant 0 : i32
    return %c0_i32, %c0_i32_0, %arg0 : i32, i32, i32
  }
}

</mosaic_0001>

<llo_original>
// kernel: tpu_custom_call.1
$region0: #{tpu_custom_call.1}
  #allocation0 [shape = 'u32[]', space=smem, size = 0x4, offset = 0x4, fixed_abs, tag = 'smem constant byte address 0x4 - core index']
  #allocation1 [shape = 'u32[144,128]{1,0:T(1,128)}', space=vmem, size = 0x12000, scoped, tag = 'internal scratch']
  #allocation2 [shape = 'f32[16,28,32]{2,1,0:T(8,128)}', space=vmem, size = 0x40000, scoped, tag = 'scratch operand']
  %s0 = inlined_call_operand.hbm [shape: f32[4,16,32], index: 0, kind: input, shape index: {}]
  %s1 = inlined_call_operand.hbm [shape: f32[3,16,16], index: 1, kind: input, shape index: {}]
  %s2 = inlined_call_operand.vmem [shape: f32[8,28], index: 2, kind: input, shape index: {}]
  %s3 = inlined_call_operand.vmem [shape: f32[1,8,1], index: 3, kind: input, shape index: {}]
  %s4 = inlined_call_operand.hbm [shape: f32[16,8,32], index: 4, kind: output, shape index: {}]
  %s5 = sld [smem:[#allocation0]]
  $region34: #{tpu_custom_call.1} parent=0
    _
  %s7 = ssub.s32 1, %s5
  %s8 = scalar_select 0, %s7, %s5
  $region1: #{tpu_custom_call.1} parent=0
    #allocation3 [shape = 'u8[32768]{0}', space=vmem, size = 0x8000, scoped, tag = 'input window, operand 0, single buffered']
    #allocation4 [shape = 's32[1]{0}', space=sflag, size = 0x4, scoped, tag = 'scoped memory for tpu_custom_call.1']
    #allocation5 [shape = 's32[1]{0}', space=sflag, size = 0x4, scoped, tag = 'scoped memory for tpu_custom_call.1']
    #allocation6 [shape = 'u8[24576]{0}', space=vmem, size = 0x6000, scoped, tag = 'input window, operand 1, single buffered']
    #allocation7 [shape = 's32[1]{0}', space=sflag, size = 0x4, scoped, tag = 'scoped memory for tpu_custom_call.1']
    #allocation8 [shape = 'u8[65536]{0}', space=vmem, size = 0x10000, scoped, tag = 'output window, operand 0, single buffered']
    %9 = vsyncpa [#allocation4], 0
    %10 = vsyncpa [#allocation7], 0
    %11 = vsyncpa [#allocation5], 0
    // Predicated region
    $region2: #{tpu_custom_call.1} parent=1 // pred_check
      _
    $region3: #{tpu_custom_call.1} parent=1 // pred_check_branch
      %13 = sbr.rel (0) target = $region5
    $region4: #{tpu_custom_call.1} parent=1 // pred_region
      %s15 = ssub.s32 1024, 1024
      %16 = vsyncadd [#allocation4], %s15
      %s17 = sshll.u32 [#allocation3], 4
      %s18 = int_to_ptr.vmem [resolvable:$true] %s17
      %23 = dma.hbm_to_vmem [thread:$0]  %s0, 1024, %s18, [#allocation4], 128, 128, 8
    $region5: #{tpu_custom_call.1} parent=1 // pred_fallthru
      _
    // Predicated region
    $region6: #{tpu_custom_call.1} parent=1 // pred_check
      _
    $region7: #{tpu_custom_call.1} parent=1 // pred_check_branch
      %25 = sbr.rel (0) target = $region9
    $region8: #{tpu_custom_call.1} parent=1 // pred_region
      %s27 = ssub.s32 768, 768
      %28 = vsyncadd [#allocation7], %s27
      %s29 = sshll.u32 [#allocation6], 4
      %s30 = int_to_ptr.vmem [resolvable:$true] %s29
      %35 = dma.hbm_to_vmem [thread:$0]  %s1, 768, %s30, [#allocation7], 128, 128, 8
    $region9: #{tpu_custom_call.1} parent=1 // pred_fallthru
      _
    // Predicated region
    $region10: #{tpu_custom_call.1} parent=1 // pred_check
      _
    $region11: #{tpu_custom_call.1} parent=1 // pred_check_branch
      %37 = sbr.rel (0) target = $region13
    $region12: #{tpu_custom_call.1} parent=1 // pred_region
      _
    $region13: #{tpu_custom_call.1} parent=1 // pred_fallthru
      _
    // Predicated region
    $region14: #{tpu_custom_call.1} parent=1 // pred_check
      _
    $region15: #{tpu_custom_call.1} parent=1 // pred_check_branch
      %39 = sbr.rel (0) target = $region17
    $region16: #{tpu_custom_call.1} parent=1 // pred_region
      _
    $region17: #{tpu_custom_call.1} parent=1 // pred_fallthru
      _
    // Predicated region
    $region18: #{tpu_custom_call.1} parent=1 // pred_check
      _
    $region19: #{tpu_custom_call.1} parent=1 // pred_check_branch
      %41 = sbr.rel (0) target = $region21
    $region20: #{tpu_custom_call.1} parent=1 // pred_region
      %42 = dma.done [#allocation4], 1024
    $region21: #{tpu_custom_call.1} parent=1 // pred_fallthru
      _
    // Predicated region
    $region22: #{tpu_custom_call.1} parent=1 // pred_check
      _
    $region23: #{tpu_custom_call.1} parent=1 // pred_check_branch
      %44 = sbr.rel (0) target = $region25
    $region24: #{tpu_custom_call.1} parent=1 // pred_region
      %45 = dma.done [#allocation7], 768
    $region25: #{tpu_custom_call.1} parent=1 // pred_fallthru
      _
    %v46 = vld [vmem:[#allocation3] sm:$0xff]
    %v47 = vld [vmem:[#allocation3 + $0x8] sm:$0xff]
    %v48 = vld [vmem:[#allocation3 + $0x10] sm:$0xff]
    %v49 = vld [vmem:[#allocation3 + $0x18] sm:$0xff]
    %v50 = vld [vmem:[#allocation3 + $0x20] sm:$0xff]
    %v51 = vld [vmem:[#allocation3 + $0x28] sm:$0xff]
    %v52 = vld [vmem:[#allocation3 + $0x30] sm:$0xff]
    %v53 = vld [vmem:[#allocation3 + $0x38] sm:$0xff]
    %v54 = vcombine.low %v46, %v50
    %v55 = vcombine.high %v46, %v50
    %v57 = vunpack.c.l.s4 1983009808
    %v58 = vunpack.c.0.s8 %v57
    %v59 = vlaneseq
    %v60 = vshrl.u32 %v59, 7
    %v61 = vsub.s32 %v58, %v60
    %v62 = vrot.slane %v54, %v61
    %v64 = vunpack.c.l.s4 1983009808
    %v65 = vunpack.c.0.s8 %v64
    %v66 = vlaneseq
    %v67 = vshrl.u32 %v66, 7
    %v68 = vsub.s32 %v65, %v67
    %v69 = vrot.slane %v55, %v68
    %v70 = vcombine.low %v48, %v52
    %v71 = vcombine.high %v48, %v52
    %v73 = vunpack.c.l.s4 1983009808
    %v74 = vunpack.c.0.s8 %v73
    %v75 = vlaneseq
    %v76 = vshrl.u32 %v75, 7
    %v77 = vsub.s32 %v74, %v76
    %v78 = vrot.slane %v70, %v77
    %v80 = vunpack.c.l.s4 1983009808
    %v81 = vunpack.c.0.s8 %v80
    %v82 = vlaneseq
    %v83 = vshrl.u32 %v82, 7
    %v84 = vsub.s32 %v81, %v83
    %v85 = vrot.slane %v71, %v84
    %v86 = vcombine.low %v62, %v78
    %v87 = vcombine.high %v62, %v78
    %v89 = vunpack.c.l.s4 1934713408
    %v90 = vunpack.c.0.s8 %v89
    %v91 = vlaneseq
    %v92 = vshrl.u32 %v91, 7
    %v93 = vsub.s32 %v90, %v92
    %v94 = vrot.slane %v86, %v93
    %v96 = vunpack.c.l.s4 1934713408
    %v97 = vunpack.c.0.s8 %v96
    %v98 = vlaneseq
    %v99 = vshrl.u32 %v98, 7
    %v100 = vsub.s32 %v97, %v99
    %v101 = vrot.slane %v87, %v100
    %v102 = vcombine.low %v69, %v85
    %v103 = vcombine.high %v69, %v85
    %v105 = vunpack.c.l.s4 1934713408
    %v106 = vunpack.c.0.s8 %v105
    %v107 = vlaneseq
    %v108 = vshrl.u32 %v107, 7
    %v109 = vsub.s32 %v106, %v108
    %v110 = vrot.slane %v102, %v109
    %v112 = vunpack.c.l.s4 1934713408
    %v113 = vunpack.c.0.s8 %v112
    %v114 = vlaneseq
    %v115 = vshrl.u32 %v114, 7
    %v116 = vsub.s32 %v113, %v115
    %v117 = vrot.slane %v103, %v116
    %v118 = vcombine.high %v94, 0.0
    %v119 = vcombine.high %v101, 0.0
    %v120 = vcombine.high %v110, 0.0
    %v121 = vcombine.high %v117, 0.0
    %v122 = vcombine.low %v47, %v51
    %v123 = vcombine.high %v47, %v51
    %v125 = vunpack.c.l.s4 1983009808
    %v126 = vunpack.c.0.s8 %v125
    %v127 = vlaneseq
    %v128 = vshrl.u32 %v127, 7
    %v129 = vsub.s32 %v126, %v128
    %v130 = vrot.slane %v122, %v129
    %v132 = vunpack.c.l.s4 1983009808
    %v133 = vunpack.c.0.s8 %v132
    %v134 = vlaneseq
    %v135 = vshrl.u32 %v134, 7
    %v136 = vsub.s32 %v133, %v135
    %v137 = vrot.slane %v123, %v136
    %v138 = vcombine.low %v49, %v53
    %v139 = vcombine.high %v49, %v53
    %v141 = vunpack.c.l.s4 1983009808
    %v142 = vunpack.c.0.s8 %v141
    %v143 = vlaneseq
    %v144 = vshrl.u32 %v143, 7
    %v145 = vsub.s32 %v142, %v144
    %v146 = vrot.slane %v138, %v145
    %v148 = vunpack.c.l.s4 1983009808
    %v149 = vunpack.c.0.s8 %v148
    %v150 = vlaneseq
    %v151 = vshrl.u32 %v150, 7
    %v152 = vsub.s32 %v149, %v151
    %v153 = vrot.slane %v139, %v152
    %v154 = vcombine.low %v130, %v146
    %v155 = vcombine.high %v130, %v146
    %v157 = vunpack.c.l.s4 1934713408
    %v158 = vunpack.c.0.s8 %v157
    %v159 = vlaneseq
    %v160 = vshrl.u32 %v159, 7
    %v161 = vsub.s32 %v158, %v160
    %v162 = vrot.slane %v154, %v161
    %v164 = vunpack.c.l.s4 1934713408
    %v165 = vunpack.c.0.s8 %v164
    %v166 = vlaneseq
    %v167 = vshrl.u32 %v166, 7
    %v168 = vsub.s32 %v165, %v167
    %v169 = vrot.slane %v155, %v168
    %v170 = vcombine.low %v137, %v153
    %v171 = vcombine.high %v137, %v153
    %v173 = vunpack.c.l.s4 1934713408
    %v174 = vunpack.c.0.s8 %v173
    %v175 = vlaneseq
    %v176 = vshrl.u32 %v175, 7
    %v177 = vsub.s32 %v174, %v176
    %v178 = vrot.slane %v170, %v177
    %v180 = vunpack.c.l.s4 1934713408
    %v181 = vunpack.c.0.s8 %v180
    %v182 = vlaneseq
    %v183 = vshrl.u32 %v182, 7
    %v184 = vsub.s32 %v181, %v183
    %v185 = vrot.slane %v171, %v184
    %v186 = vcombine.high %v162, 0.0
    %v187 = vcombine.high %v169, 0.0
    %v188 = vcombine.high %v178, 0.0
    %v189 = vcombine.high %v185, 0.0
    %vm190 = vcmask 257024
    %191 = vst.msk [vmem:[#allocation2] sm:$0xf] %vm190, %v94
    %192 = vst.msk [vmem:[#allocation2 + $0x20] sm:$0xf] %vm190, %v118
    %193 = vst.msk [vmem:[#allocation2 + $0x40] sm:$0xf] %vm190, %v101
    %194 = vst.msk [vmem:[#allocation2 + $0x60] sm:$0xf] %vm190, %v119
    %195 = vst.msk [vmem:[#allocation2 + $0x80] sm:$0xf] %vm190, %v110
    %196 = vst.msk [vmem:[#allocation2 + $0xa0] sm:$0xf] %vm190, %v120
    %197 = vst.msk [vmem:[#allocation2 + $0xc0] sm:$0xf] %vm190, %v117
    %198 = vst.msk [vmem:[#allocation2 + $0xe0] sm:$0xf] %vm190, %v121
    %199 = vst.msk [vmem:[#allocation2 + $0x100] sm:$0xf] %vm190, %v162
    %200 = vst.msk [vmem:[#allocation2 + $0x120] sm:$0xf] %vm190, %v186
    %201 = vst.msk [vmem:[#allocation2 + $0x140] sm:$0xf] %vm190, %v169
    %202 = vst.msk [vmem:[#allocation2 + $0x160] sm:$0xf] %vm190, %v187
    %203 = vst.msk [vmem:[#allocation2 + $0x180] sm:$0xf] %vm190, %v178
    %204 = vst.msk [vmem:[#allocation2 + $0x1a0] sm:$0xf] %vm190, %v188
    %205 = vst.msk [vmem:[#allocation2 + $0x1c0] sm:$0xf] %vm190, %v185
    %206 = vst.msk [vmem:[#allocation2 + $0x1e0] sm:$0xf] %vm190, %v189
    %v207 = vld [vmem:[#allocation6] sm:$0xff]
    %v208 = vld [vmem:[#allocation6 + $0x8] sm:$0xff]
    %vm209 = vcmask 130048
    %v211 = vsel %vm209, %v207, 0
    %v214 = vsel %vm209, %v208, 0
    %216 = vmatprep.subr.mxu0 0.0
    %217 = vmatpush1.msra.mxu0 %v46
    %218 = vmatprep.subr.mxu0 0.0
    %219 = vmatpush1.msra.mxu0 %v47
    %220 = vmatprep.subr.mxu0 0.0
    %221 = vmatpush1.msra.mxu0 0.0
    %222 = vmatprep.subr.mxu0 0.0
    %223 = vmatpush1.msra.mxu0 0.0
    %224 = vmatprep.subr.mxu0 0.0
    %225 = vmatpush1.msra.mxu0 0.0
    %226 = vmatprep.subr.mxu0 0.0
    %227 = vmatpush1.msra.mxu0 0.0
    %228 = vmatprep.subr.mxu0 0.0
    %229 = vmatpush1.msra.mxu0 0.0
    %230 = vmatprep.subr.mxu0 0.0
    %231 = vmatpush1.msra.mxu0 0.0
    %232 = vmatprep.subr.mxu0 0.0
    %233 = vmatpush1.msra.mxu0 0.0
    %234 = vmatprep.subr.mxu0 0.0
    %235 = vmatpush1.msra.mxu0 0.0
    %236 = vmatprep.subr.mxu0 0.0
    %237 = vmatpush1.msra.mxu0 0.0
    %238 = vmatprep.subr.mxu0 0.0
    %239 = vmatpush1.msra.mxu0 0.0
    %240 = vmatprep.subr.mxu0 0.0
    %241 = vmatpush1.msra.mxu0 0.0
    %242 = vmatprep.subr.mxu0 0.0
    %243 = vmatpush1.msra.mxu0 0.0
    %244 = vmatprep.subr.mxu0 0.0
    %245 = vmatpush1.msra.mxu0 0.0
    %246 = vmatprep.subr.mxu0 0.0
    %247 = vmatpush1.msra.mxu0 0.0
    %248 = vmatprep.subr.mxu0 0.0
    %249 = vmatpush1.msra.mxu0 0.0
    %250 = vmatprep.subr.mxu0 0.0
    %251 = vmatpush1.msra.mxu0 0.0
    %252 = vmatprep.subr.mxu0 0.0
    %253 = vmatpush1.msra.mxu0 0.0
    %254 = vmatprep.subr.mxu0 0.0
    %255 = vmatpush1.msra.mxu0 0.0
    %256 = vmatprep.subr.mxu0 0.0
    %257 = vmatpush1.msra.mxu0 0.0
    %258 = vmatprep.subr.mxu0 0.0
    %259 = vmatpush1.msra.mxu0 0.0
    %260 = vmatprep.subr.mxu0 0.0
    %261 = vmatpush1.msra.mxu0 0.0
    %262 = vmatprep.subr.mxu0 0.0
    %263 = vmatpush1.msra.mxu0 0.0
    %264 = vmatprep.subr.mxu0 0.0
    %265 = vmatpush1.msra.mxu0 0.0
    %266 = vmatprep.subr.mxu0 0.0
    %267 = vmatpush1.msra.mxu0 0.0
    %268 = vmatprep.subr.mxu0 0.0
    %269 = vmatpush1.msra.mxu0 0.0
    %270 = vmatprep.subr.mxu0 0.0
    %271 = vmatpush1.msra.mxu0 0.0
    %272 = vmatprep.subr.mxu0 0.0
    %273 = vmatpush1.msra.mxu0 0.0
    %274 = vmatprep.subr.mxu0 0.0
    %275 = vmatpush1.msra.mxu0 0.0
    %276 = vmatprep.subr.mxu0 0.0
    %277 = vmatpush1.msra.mxu0 0.0
    %278 = vmatprep.subr.mxu0 0.0
    %279 = vmatpush1.msra.mxu0 0.0
    %280 = vmatprep.mubr.f32.mxu0 0.0
    %281 = vmatmul.mubr.f32.gmra.mrb[0].mxu0 %v211
    %v282 = vpop.f32.mrb[0].mxu0
    %v283 = vadd.f32 0.0, %v282
    %v284 = vpop.f32.mrb[0].mxu0
    %285 = vmatprep.mubr.f32.mxu0 0.0
    %286 = vmatmul.mubr.f32.gmra.mrb[0].mxu0 %v214
    %v287 = vpop.f32.mrb[0].mxu0
    %v288 = vadd.f32 0.0, %v287
    %v289 = vpop.f32.mrb[0].mxu0
    %290 = vdwg.mxu0
    %291 = vmatprep.subr.mxu0 0.0
    %292 = vmatpush1.msra.mxu0 %v48
    %293 = vmatprep.subr.mxu0 0.0
    %294 = vmatpush1.msra.mxu0 %v49
    %295 = vmatprep.subr.mxu0 0.0
    %296 = vmatpush1.msra.mxu0 0.0
    %297 = vmatprep.subr.mxu0 0.0
    %298 = vmatpush1.msra.mxu0 0.0
    %299 = vmatprep.subr.mxu0 0.0
    %300 = vmatpush1.msra.mxu0 0.0
    %301 = vmatprep.subr.mxu0 0.0
    %302 = vmatpush1.msra.mxu0 0.0
    %303 = vmatprep.subr.mxu0 0.0
    %304 = vmatpush1.msra.mxu0 0.0
    %305 = vmatprep.subr.mxu0 0.0
    %306 = vmatpush1.msra.mxu0 0.0
    %307 = vmatprep.subr.mxu0 0.0
    %308 = vmatpush1.msra.mxu0 0.0
    %309 = vmatprep.subr.mxu0 0.0
    %310 = vmatpush1.msra.mxu0 0.0
    %311 = vmatprep.subr.mxu0 0.0
    %312 = vmatpush1.msra.mxu0 0.0
    %313 = vmatprep.subr.mxu0 0.0
    %314 = vmatpush1.msra.mxu0 0.0
    %315 = vmatprep.subr.mxu0 0.0
    %316 = vmatpush1.msra.mxu0 0.0
    %317 = vmatprep.subr.mxu0 0.0
    %318 = vmatpush1.msra.mxu0 0.0
    %319 = vmatprep.subr.mxu0 0.0
    %320 = vmatpush1.msra.mxu0 0.0
    %321 = vmatprep.subr.mxu0 0.0
    %322 = vmatpush1.msra.mxu0 0.0
    %323 = vmatprep.subr.mxu0 0.0
    %324 = vmatpush1.msra.mxu0 0.0
    %325 = vmatprep.subr.mxu0 0.0
    %326 = vmatpush1.msra.mxu0 0.0
    %327 = vmatprep.subr.mxu0 0.0
    %328 = vmatpush1.msra.mxu0 0.0
    %329 = vmatprep.subr.mxu0 0.0
    %330 = vmatpush1.msra.mxu0 0.0
    %331 = vmatprep.subr.mxu0 0.0
    %332 = vmatpush1.msra.mxu0 0.0
    %333 = vmatprep.subr.mxu0 0.0
    %334 = vmatpush1.msra.mxu0 0.0
    %335 = vmatprep.subr.mxu0 0.0
    %336 = vmatpush1.msra.mxu0 0.0
    %337 = vmatprep.subr.mxu0 0.0
    %338 = vmatpush1.msra.mxu0 0.0
    %339 = vmatprep.subr.mxu0 0.0
    %340 = vmatpush1.msra.mxu0 0.0
    %341 = vmatprep.subr.mxu0 0.0
    %342 = vmatpush1.msra.mxu0 0.0
    %343 = vmatprep.subr.mxu0 0.0
    %344 = vmatpush1.msra.mxu0 0.0
    %345 = vmatprep.subr.mxu0 0.0
    %346 = vmatpush1.msra.mxu0 0.0
    %347 = vmatprep.subr.mxu0 0.0
    %348 = vmatpush1.msra.mxu0 0.0
    %349 = vmatprep.subr.mxu0 0.0
    %350 = vmatpush1.msra.mxu0 0.0
    %351 = vmatprep.subr.mxu0 0.0
    %352 = vmatpush1.msra.mxu0 0.0
    %353 = vmatprep.subr.mxu0 0.0
    %354 = vmatpush1.msra.mxu0 0.0
    %355 = vmatprep.mubr.f32.mxu0 0.0
    %356 = vmatmul.mubr.f32.gmra.mrb[0].mxu0 %v211
    %v357 = vpop.f32.mrb[0].mxu0
    %v358 = vadd.f32 0.0, %v357
    %v359 = vpop.f32.mrb[0].mxu0
    %360 = vmatprep.mubr.f32.mxu0 0.0
    %361 = vmatmul.mubr.f32.gmra.mrb[0].mxu0 %v214
    %v362 = vpop.f32.mrb[0].mxu0
    %v363 = vadd.f32 0.0, %v362
    %v364 = vpop.f32.mrb[0].mxu0
    %365 = vdwg.mxu0
    %366 = vmatprep.subr.mxu0 0.0
    %367 = vmatpush1.msra.mxu0 %v50
    %368 = vmatprep.subr.mxu0 0.0
    %369 = vmatpush1.msra.mxu0 %v51
    %370 = vmatprep.subr.mxu0 0.0
    %371 = vmatpush1.msra.mxu0 0.0
    %372 = vmatprep.subr.mxu0 0.0
    %373 = vmatpush1.msra.mxu0 0.0
    %374 = vmatprep.subr.mxu0 0.0
    %375 = vmatpush1.msra.mxu0 0.0
    %376 = vmatprep.subr.mxu0 0.0
    %377 = vmatpush1.msra.mxu0 0.0
    %378 = vmatprep.subr.mxu0 0.0
    %379 = vmatpush1.msra.mxu0 0.0
    %380 = vmatprep.subr.mxu0 0.0
    %381 = vmatpush1.msra.mxu0 0.0
    %382 = vmatprep.subr.mxu0 0.0
    %383 = vmatpush1.msra.mxu0 0.0
    %384 = vmatprep.subr.mxu0 0.0
    %385 = vmatpush1.msra.mxu0 0.0
    %386 = vmatprep.subr.mxu0 0.0
    %387 = vmatpush1.msra.mxu0 0.0
    %388 = vmatprep.subr.mxu0 0.0
    %389 = vmatpush1.msra.mxu0 0.0
    %390 = vmatprep.subr.mxu0 0.0
    %391 = vmatpush1.msra.mxu0 0.0
    %392 = vmatprep.subr.mxu0 0.0
    %393 = vmatpush1.msra.mxu0 0.0
    %394 = vmatprep.subr.mxu0 0.0
    %395 = vmatpush1.msra.mxu0 0.0
    %396 = vmatprep.subr.mxu0 0.0
    %397 = vmatpush1.msra.mxu0 0.0
    %398 = vmatprep.subr.mxu0 0.0
    %399 = vmatpush1.msra.mxu0 0.0
    %400 = vmatprep.subr.mxu0 0.0
    %401 = vmatpush1.msra.mxu0 0.0
    %402 = vmatprep.subr.mxu0 0.0
    %403 = vmatpush1.msra.mxu0 0.0
    %404 = vmatprep.subr.mxu0 0.0
    %405 = vmatpush1.msra.mxu0 0.0
    %406 = vmatprep.subr.mxu0 0.0
    %407 = vmatpush1.msra.mxu0 0.0
    %408 = vmatprep.subr.mxu0 0.0
    %409 = vmatpush1.msra.mxu0 0.0
    %410 = vmatprep.subr.mxu0 0.0
    %411 = vmatpush1.msra.mxu0 0.0
    %412 = vmatprep.subr.mxu0 0.0
    %413 = vmatpush1.msra.mxu0 0.0
    %414 = vmatprep.subr.mxu0 0.0
    %415 = vmatpush1.msra.mxu0 0.0
    %416 = vmatprep.subr.mxu0 0.0
    %417 = vmatpush1.msra.mxu0 0.0
    %418 = vmatprep.subr.mxu0 0.0
    %419 = vmatpush1.msra.mxu0 0.0
    %420 = vmatprep.subr.mxu0 0.0
    %421 = vmatpush1.msra.mxu0 0.0
    %422 = vmatprep.subr.mxu0 0.0
    %423 = vmatpush1.msra.mxu0 0.0
    %424 = vmatprep.subr.mxu0 0.0
    %425 = vmatpush1.msra.mxu0 0.0
    %426 = vmatprep.subr.mxu0 0.0
    %427 = vmatpush1.msra.mxu0 0.0
    %428 = vmatprep.subr.mxu0 0.0
    %429 = vmatpush1.msra.mxu0 0.0
    %430 = vmatprep.mubr.f32.mxu0 0.0
    %431 = vmatmul.mubr.f32.gmra.mrb[0].mxu0 %v211
    %v432 = vpop.f32.mrb[0].mxu0
    %v433 = vadd.f32 0.0, %v432
    %v434 = vpop.f32.mrb[0].mxu0
    %435 = vmatprep.mubr.f32.mxu0 0.0
    %436 = vmatmul.mubr.f32.gmra.mrb[0].mxu0 %v214
    %v437 = vpop.f32.mrb[0].mxu0
    %v438 = vadd.f32 0.0, %v437
    %v439 = vpop.f32.mrb[0].mxu0
    %440 = vdwg.mxu0
    %441 = vmatprep.subr.mxu0 0.0
    %442 = vmatpush1.msra.mxu0 %v52
    %443 = vmatprep.subr.mxu0 0.0
    %444 = vmatpush1.msra.mxu0 %v53
    %445 = vmatprep.subr.mxu0 0.0
    %446 = vmatpush1.msra.mxu0 0.0
    %447 = vmatprep.subr.mxu0 0.0
    %448 = vmatpush1.msra.mxu0 0.0
    %449 = vmatprep.subr.mxu0 0.0
    %450 = vmatpush1.msra.mxu0 0.0
    %451 = vmatprep.subr.mxu0 0.0
    %452 = vmatpush1.msra.mxu0 0.0
    %453 = vmatprep.subr.mxu0 0.0
    %454 = vmatpush1.msra.mxu0 0.0
    %455 = vmatprep.subr.mxu0 0.0
    %456 = vmatpush1.msra.mxu0 0.0
    %457 = vmatprep.subr.mxu0 0.0
    %458 = vmatpush1.msra.mxu0 0.0
    %459 = vmatprep.subr.mxu0 0.0
    %460 = vmatpush1.msra.mxu0 0.0
    %461 = vmatprep.subr.mxu0 0.0
    %462 = vmatpush1.msra.mxu0 0.0
    %463 = vmatprep.subr.mxu0 0.0
    %464 = vmatpush1.msra.mxu0 0.0
    %465 = vmatprep.subr.mxu0 0.0
    %466 = vmatpush1.msra.mxu0 0.0
    %467 = vmatprep.subr.mxu0 0.0
    %468 = vmatpush1.msra.mxu0 0.0
    %469 = vmatprep.subr.mxu0 0.0
    %470 = vmatpush1.msra.mxu0 0.0
    %471 = vmatprep.subr.mxu0 0.0
    %472 = vmatpush1.msra.mxu0 0.0
    %473 = vmatprep.subr.mxu0 0.0
    %474 = vmatpush1.msra.mxu0 0.0
    %475 = vmatprep.subr.mxu0 0.0
    %476 = vmatpush1.msra.mxu0 0.0
    %477 = vmatprep.subr.mxu0 0.0
    %478 = vmatpush1.msra.mxu0 0.0
    %479 = vmatprep.subr.mxu0 0.0
    %480 = vmatpush1.msra.mxu0 0.0
    %481 = vmatprep.subr.mxu0 0.0
    %482 = vmatpush1.msra.mxu0 0.0
    %483 = vmatprep.subr.mxu0 0.0
    %484 = vmatpush1.msra.mxu0 0.0
    %485 = vmatprep.subr.mxu0 0.0
    %486 = vmatpush1.msra.mxu0 0.0
    %487 = vmatprep.subr.mxu0 0.0
    %488 = vmatpush1.msra.mxu0 0.0
    %489 = vmatprep.subr.mxu0 0.0
    %490 = vmatpush1.msra.mxu0 0.0
    %491 = vmatprep.subr.mxu0 0.0
    %492 = vmatpush1.msra.mxu0 0.0
    %493 = vmatprep.subr.mxu0 0.0
    %494 = vmatpush1.msra.mxu0 0.0
    %495 = vmatprep.subr.mxu0 0.0
    %496 = vmatpush1.msra.mxu0 0.0
    %497 = vmatprep.subr.mxu0 0.0
    %498 = vmatpush1.msra.mxu0 0.0
    %499 = vmatprep.subr.mxu0 0.0
    %500 = vmatpush1.msra.mxu0 0.0
    %501 = vmatprep.subr.mxu0 0.0
    %502 = vmatpush1.msra.mxu0 0.0
    %503 = vmatprep.subr.mxu0 0.0
    %504 = vmatpush1.msra.mxu0 0.0
    %505 = vmatprep.mubr.f32.mxu0 0.0
    %506 = vmatmul.mubr.f32.gmra.mrb[0].mxu0 %v211
    %v507 = vpop.f32.mrb[0].mxu0
    %v508 = vadd.f32 0.0, %v507
    %v509 = vpop.f32.mrb[0].mxu0
    %510 = vmatprep.mubr.f32.mxu0 0.0
    %511 = vmatmul.mubr.f32.gmra.mrb[0].mxu0 %v214
    %v512 = vpop.f32.mrb[0].mxu0
    %v513 = vadd.f32 0.0, %v512
    %v514 = vpop.f32.mrb[0].mxu0
    %515 = vdwg.mxu0
    %v516 = vcombine.low %v283, %v433
    %v517 = vcombine.high %v283, %v433
    %v519 = vunpack.c.l.s4 1983009808
    %v520 = vunpack.c.0.s8 %v519
    %v521 = vlaneseq
    %v522 = vshrl.u32 %v521, 7
    %v523 = vsub.s32 %v520, %v522
    %v524 = vrot.slane %v516, %v523
    %v526 = vunpack.c.l.s4 1983009808
    %v527 = vunpack.c.0.s8 %v526
    %v528 = vlaneseq
    %v529 = vshrl.u32 %v528, 7
    %v530 = vsub.s32 %v527, %v529
    %v531 = vrot.slane %v517, %v530
    %v532 = vcombine.low %v358, %v508
    %v533 = vcombine.high %v358, %v508
    %v535 = vunpack.c.l.s4 1983009808
    %v536 = vunpack.c.0.s8 %v535
    %v537 = vlaneseq
    %v538 = vshrl.u32 %v537, 7
    %v539 = vsub.s32 %v536, %v538
    %v540 = vrot.slane %v532, %v539
    %v542 = vunpack.c.l.s4 1983009808
    %v543 = vunpack.c.0.s8 %v542
    %v544 = vlaneseq
    %v545 = vshrl.u32 %v544, 7
    %v546 = vsub.s32 %v543, %v545
    %v547 = vrot.slane %v533, %v546
    %v548 = vcombine.low %v524, %v540
    %v549 = vcombine.high %v524, %v540
    %v551 = vunpack.c.l.s4 1934713408
    %v552 = vunpack.c.0.s8 %v551
    %v553 = vlaneseq
    %v554 = vshrl.u32 %v553, 7
    %v555 = vsub.s32 %v552, %v554
    %v556 = vrot.slane %v548, %v555
    %v558 = vunpack.c.l.s4 1934713408
    %v559 = vunpack.c.0.s8 %v558
    %v560 = vlaneseq
    %v561 = vshrl.u32 %v560, 7
    %v562 = vsub.s32 %v559, %v561
    %v563 = vrot.slane %v549, %v562
    %v564 = vcombine.low %v531, %v547
    %v565 = vcombine.high %v531, %v547
    %v567 = vunpack.c.l.s4 1934713408
    %v568 = vunpack.c.0.s8 %v567
    %v569 = vlaneseq
    %v570 = vshrl.u32 %v569, 7
    %v571 = vsub.s32 %v568, %v570
    %v572 = vrot.slane %v564, %v571
    %v574 = vunpack.c.l.s4 1934713408
    %v575 = vunpack.c.0.s8 %v574
    %v576 = vlaneseq
    %v577 = vshrl.u32 %v576, 7
    %v578 = vsub.s32 %v575, %v577
    %v579 = vrot.slane %v565, %v578
    %v580 = vcombine.high %v556, 0.0
    %v581 = vcombine.high %v563, 0.0
    %v582 = vcombine.high %v572, 0.0
    %v583 = vcombine.high %v579, 0.0
    %v584 = vcombine.low %v288, %v438
    %v585 = vcombine.high %v288, %v438
    %v587 = vunpack.c.l.s4 1983009808
    %v588 = vunpack.c.0.s8 %v587
    %v589 = vlaneseq
    %v590 = vshrl.u32 %v589, 7
    %v591 = vsub.s32 %v588, %v590
    %v592 = vrot.slane %v584, %v591
    %v594 = vunpack.c.l.s4 1983009808
    %v595 = vunpack.c.0.s8 %v594
    %v596 = vlaneseq
    %v597 = vshrl.u32 %v596, 7
    %v598 = vsub.s32 %v595, %v597
    %v599 = vrot.slane %v585, %v598
    %v600 = vcombine.low %v363, %v513
    %v601 = vcombine.high %v363, %v513
    %v603 = vunpack.c.l.s4 1983009808
    %v604 = vunpack.c.0.s8 %v603
    %v605 = vlaneseq
    %v606 = vshrl.u32 %v605, 7
    %v607 = vsub.s32 %v604, %v606
    %v608 = vrot.slane %v600, %v607
    %v610 = vunpack.c.l.s4 1983009808
    %v611 = vunpack.c.0.s8 %v610
    %v612 = vlaneseq
    %v613 = vshrl.u32 %v612, 7
    %v614 = vsub.s32 %v611, %v613
    %v615 = vrot.slane %v601, %v614
    %v616 = vcombine.low %v592, %v608
    %v617 = vcombine.high %v592, %v608
    %v619 = vunpack.c.l.s4 1934713408
    %v620 = vunpack.c.0.s8 %v619
    %v621 = vlaneseq
    %v622 = vshrl.u32 %v621, 7
    %v623 = vsub.s32 %v620, %v622
    %v624 = vrot.slane %v616, %v623
    %v626 = vunpack.c.l.s4 1934713408
    %v627 = vunpack.c.0.s8 %v626
    %v628 = vlaneseq
    %v629 = vshrl.u32 %v628, 7
    %v630 = vsub.s32 %v627, %v629
    %v631 = vrot.slane %v617, %v630
    %v632 = vcombine.low %v599, %v615
    %v633 = vcombine.high %v599, %v615
    %v635 = vunpack.c.l.s4 1934713408
    %v636 = vunpack.c.0.s8 %v635
    %v637 = vlaneseq
    %v638 = vshrl.u32 %v637, 7
    %v639 = vsub.s32 %v636, %v638
    %v640 = vrot.slane %v632, %v639
    %v642 = vunpack.c.l.s4 1934713408
    %v643 = vunpack.c.0.s8 %v642
    %v644 = vlaneseq
    %v645 = vshrl.u32 %v644, 7
    %v646 = vsub.s32 %v643, %v645
    %v647 = vrot.slane %v633, %v646
    %v648 = vcombine.high %v624, 0.0
    %v649 = vcombine.high %v631, 0.0
    %v650 = vcombine.high %v640, 0.0
    %v651 = vcombine.high %v647, 0.0
    %652 = vst.msk [vmem:[#allocation2 + $0x4] sm:$0xf] %vm190, %v556
    %653 = vst.msk [vmem:[#allocation2 + $0x24] sm:$0xf] %vm190, %v580
    %654 = vst.msk [vmem:[#allocation2 + $0x44] sm:$0xf] %vm190, %v563
    %655 = vst.msk [vmem:[#allocation2 + $0x64] sm:$0xf] %vm190, %v581
    %656 = vst.msk [vmem:[#allocation2 + $0x84] sm:$0xf] %vm190, %v572
    %657 = vst.msk [vmem:[#allocation2 + $0xa4] sm:$0xf] %vm190, %v582
    %658 = vst.msk [vmem:[#allocation2 + $0xc4] sm:$0xf] %vm190, %v579
    %659 = vst.msk [vmem:[#allocation2 + $0xe4] sm:$0xf] %vm190, %v583
    %660 = vst.msk [vmem:[#allocation2 + $0x104] sm:$0xf] %vm190, %v624
    %661 = vst.msk [vmem:[#allocation2 + $0x124] sm:$0xf] %vm190, %v648
    %662 = vst.msk [vmem:[#allocation2 + $0x144] sm:$0xf] %vm190, %v631
    %663 = vst.msk [vmem:[#allocation2 + $0x164] sm:$0xf] %vm190, %v649
    %664 = vst.msk [vmem:[#allocation2 + $0x184] sm:$0xf] %vm190, %v640
    %665 = vst.msk [vmem:[#allocation2 + $0x1a4] sm:$0xf] %vm190, %v650
    %666 = vst.msk [vmem:[#allocation2 + $0x1c4] sm:$0xf] %vm190, %v647
    %667 = vst.msk [vmem:[#allocation2 + $0x1e4] sm:$0xf] %vm190, %v651
    %668 = vmatprep.subr.mxu0 0.0
    %669 = vmatpush1.msra.mxu0 %v283
    %670 = vmatprep.subr.mxu0 0.0
    %671 = vmatpush1.msra.mxu0 %v288
    %672 = vmatprep.subr.mxu0 0.0
    %673 = vmatpush1.msra.mxu0 0.0
    %674 = vmatprep.subr.mxu0 0.0
    %675 = vmatpush1.msra.mxu0 0.0
    %676 = vmatprep.subr.mxu0 0.0
    %677 = vmatpush1.msra.mxu0 0.0
    %678 = vmatprep.subr.mxu0 0.0
    %679 = vmatpush1.msra.mxu0 0.0
    %680 = vmatprep.subr.mxu0 0.0
    %681 = vmatpush1.msra.mxu0 0.0
    %682 = vmatprep.subr.mxu0 0.0
    %683 = vmatpush1.msra.mxu0 0.0
    %684 = vmatprep.subr.mxu0 0.0
    %685 = vmatpush1.msra.mxu0 0.0
    %686 = vmatprep.subr.mxu0 0.0
    %687 = vmatpush1.msra.mxu0 0.0
    %688 = vmatprep.subr.mxu0 0.0
    %689 = vmatpush1.msra.mxu0 0.0
    %690 = vmatprep.subr.mxu0 0.0
    %691 = vmatpush1.msra.mxu0 0.0
    %692 = vmatprep.subr.mxu0 0.0
    %693 = vmatpush1.msra.mxu0 0.0
    %694 = vmatprep.subr.mxu0 0.0
    %695 = vmatpush1.msra.mxu0 0.0
    %696 = vmatprep.subr.mxu0 0.0
    %697 = vmatpush1.msra.mxu0 0.0
    %698 = vmatprep.subr.mxu0 0.0
    %699 = vmatpush1.msra.mxu0 0.0
    %700 = vmatprep.subr.mxu0 0.0
    %701 = vmatpush1.msra.mxu0 0.0
    %702 = vmatprep.subr.mxu0 0.0
    %703 = vmatpush1.msra.mxu0 0.0
    %704 = vmatprep.subr.mxu0 0.0
    %705 = vmatpush1.msra.mxu0 0.0
    %706 = vmatprep.subr.mxu0 0.0
    %707 = vmatpush1.msra.mxu0 0.0
    %708 = vmatprep.subr.mxu0 0.0
    %709 = vmatpush1.msra.mxu0 0.0
    %710 = vmatprep.subr.mxu0 0.0
    %711 = vmatpush1.msra.mxu0 0.0
    %712 = vmatprep.subr.mxu0 0.0
    %713 = vmatpush1.msra.mxu0 0.0
    %714 = vmatprep.subr.mxu0 0.0
    %715 = vmatpush1.msra.mxu0 0.0
    %716 = vmatprep.subr.mxu0 0.0
    %717 = vmatpush1.msra.mxu0 0.0
    %718 = vmatprep.subr.mxu0 0.0
    %719 = vmatpush1.msra.mxu0 0.0
    %720 = vmatprep.subr.mxu0 0.0
    %721 = vmatpush1.msra.mxu0 0.0
    %722 = vmatprep.subr.mxu0 0.0
    %723 = vmatpush1.msra.mxu0 0.0
    %724 = vmatprep.subr.mxu0 0.0
    %725 = vmatpush1.msra.mxu0 0.0
    %726 = vmatprep.subr.mxu0 0.0
    %727 = vmatpush1.msra.mxu0 0.0
    %728 = vmatprep.subr.mxu0 0.0
    %729 = vmatpush1.msra.mxu0 0.0
    %730 = vmatprep.subr.mxu0 0.0
    %731 = vmatpush1.msra.mxu0 0.0
    %732 = vmatprep.mubr.f32.mxu0 0.0
    %733 = vmatmul.mubr.f32.gmra.mrb[0].mxu0 %v211
    %v734 = vpop.f32.mrb[0].mxu0
    %v735 = vadd.f32 0.0, %v734
    %v736 = vpop.f32.mrb[0].mxu0
    %737 = vmatprep.mubr.f32.mxu0 0.0
    %738 = vmatmul.mubr.f32.gmra.mrb[0].mxu0 %v214
    %v739 = vpop.f32.mrb[0].mxu0
    %v740 = vadd.f32 0.0, %v739
    %v741 = vpop.f32.mrb[0].mxu0
    %742 = vdwg.mxu0
    %743 = vmatprep.subr.mxu0 0.0
    %744 = vmatpush1.msra.mxu0 %v358
    %745 = vmatprep.subr.mxu0 0.0
    %746 = vmatpush1.msra.mxu0 %v363
    %747 = vmatprep.subr.mxu0 0.0
    %748 = vmatpush1.msra.mxu0 0.0
    %749 = vmatprep.subr.mxu0 0.0
    %750 = vmatpush1.msra.mxu0 0.0
    %751 = vmatprep.subr.mxu0 0.0
    %752 = vmatpush1.msra.mxu0 0.0
    %753 = vmatprep.subr.mxu0 0.0
    %754 = vmatpush1.msra.mxu0 0.0
    %755 = vmatprep.subr.mxu0 0.0
    %756 = vmatpush1.msra.mxu0 0.0
    %757 = vmatprep.subr.mxu0 0.0
    %758 = vmatpush1.msra.mxu0 0.0
    %759 = vmatprep.subr.mxu0 0.0
    %760 = vmatpush1.msra.mxu0 0.0
    %761 = vmatprep.subr.mxu0 0.0
    %762 = vmatpush1.msra.mxu0 0.0
    %763 = vmatprep.subr.mxu0 0.0
    %764 = vmatpush1.msra.mxu0 0.0
    %765 = vmatprep.subr.mxu0 0.0
    %766 = vmatpush1.msra.mxu0 0.0
    %767 = vmatprep.subr.mxu0 0.0
    %768 = vmatpush1.msra.mxu0 0.0
    %769 = vmatprep.subr.mxu0 0.0
    %770 = vmatpush1.msra.mxu0 0.0
    %771 = vmatprep.subr.mxu0 0.0
    %772 = vmatpush1.msra.mxu0 0.0
    %773 = vmatprep.subr.mxu0 0.0
    %774 = vmatpush1.msra.mxu0 0.0
    %775 = vmatprep.subr.mxu0 0.0
    %776 = vmatpush1.msra.mxu0 0.0
    %777 = vmatprep.subr.mxu0 0.0
    %778 = vmatpush1.msra.mxu0 0.0
    %779 = vmatprep.subr.mxu0 0.0
    %780 = vmatpush1.msra.mxu0 0.0
    %781 = vmatprep.subr.mxu0 0.0
    %782 = vmatpush1.msra.mxu0 0.0
    %783 = vmatprep.subr.mxu0 0.0
    %784 = vmatpush1.msra.mxu0 0.0
    %785 = vmatprep.subr.mxu0 0.0
    %786 = vmatpush1.msra.mxu0 0.0
    %787 = vmatprep.subr.mxu0 0.0
    %788 = vmatpush1.msra.mxu0 0.0
    %789 = vmatprep.subr.mxu0 0.0
    %790 = vmatpush1.msra.mxu0 0.0
    %791 = vmatprep.subr.mxu0 0.0
    %792 = vmatpush1.msra.mxu0 0.0
    %793 = vmatprep.subr.mxu0 0.0
    %794 = vmatpush1.msra.mxu0 0.0
    %795 = vmatprep.subr.mxu0 0.0
    %796 = vmatpush1.msra.mxu0 0.0
    %797 = vmatprep.subr.mxu0 0.0
    %798 = vmatpush1.msra.mxu0 0.0
    %799 = vmatprep.subr.mxu0 0.0
    %800 = vmatpush1.msra.mxu0 0.0
    %801 = vmatprep.subr.mxu0 0.0
    %802 = vmatpush1.msra.mxu0 0.0
    %803 = vmatprep.subr.mxu0 0.0
    %804 = vmatpush1.msra.mxu0 0.0
    %805 = vmatprep.subr.mxu0 0.0
    %806 = vmatpush1.msra.mxu0 0.0
    %807 = vmatprep.mubr.f32.mxu0 0.0
    %808 = vmatmul.mubr.f32.gmra.mrb[0].mxu0 %v211
    %v809 = vpop.f32.mrb[0].mxu0
    %v810 = vadd.f32 0.0, %v809
    %v811 = vpop.f32.mrb[0].mxu0
    %812 = vmatprep.mubr.f32.mxu0 0.0
    %813 = vmatmul.mubr.f32.gmra.mrb[0].mxu0 %v214
    %v814 = vpop.f32.mrb[0].mxu0
    %v815 = vadd.f32 0.0, %v814
    %v816 = vpop.f32.mrb[0].mxu0
    %817 = vdwg.mxu0
    %818 = vmatprep.subr.mxu0 0.0
    %819 = vmatpush1.msra.mxu0 %v433
    %820 = vmatprep.subr.mxu0 0.0
    %821 = vmatpush1.msra.mxu0 %v438
    %822 = vmatprep.subr.mxu0 0.0
    %823 = vmatpush1.msra.mxu0 0.0
    %824 = vmatprep.subr.mxu0 0.0
    %825 = vmatpush1.msra.mxu0 0.0
    %826 = vmatprep.subr.mxu0 0.0
    %827 = vmatpush1.msra.mxu0 0.0
    %828 = vmatprep.subr.mxu0 0.0
    %829 = vmatpush1.msra.mxu0 0.0
    %830 = vmatprep.subr.mxu0 0.0
    %831 = vmatpush1.msra.mxu0 0.0
    %832 = vmatprep.subr.mxu0 0.0
    %833 = vmatpush1.msra.mxu0 0.0
    %834 = vmatprep.subr.mxu0 0.0
    %835 = vmatpush1.msra.mxu0 0.0
    %836 = vmatprep.subr.mxu0 0.0
    %837 = vmatpush1.msra.mxu0 0.0
    %838 = vmatprep.subr.mxu0 0.0
    %839 = vmatpush1.msra.mxu0 0.0
    %840 = vmatprep.subr.mxu0 0.0
    %841 = vmatpush1.msra.mxu0 0.0
    %842 = vmatprep.subr.mxu0 0.0
    %843 = vmatpush1.msra.mxu0 0.0
    %844 = vmatprep.subr.mxu0 0.0
    %845 = vmatpush1.msra.mxu0 0.0
    %846 = vmatprep.subr.mxu0 0.0
    %847 = vmatpush1.msra.mxu0 0.0
    %848 = vmatprep.subr.mxu0 0.0
    %849 = vmatpush1.msra.mxu0 0.0
    %850 = vmatprep.subr.mxu0 0.0
    %851 = vmatpush1.msra.mxu0 0.0
    %852 = vmatprep.subr.mxu0 0.0
    %853 = vmatpush1.msra.mxu0 0.0
    %854 = vmatprep.subr.mxu0 0.0
    %855 = vmatpush1.msra.mxu0 0.0
    %856 = vmatprep.subr.mxu0 0.0
    %857 = vmatpush1.msra.mxu0 0.0
    %858 = vmatprep.subr.mxu0 0.0
    %859 = vmatpush1.msra.mxu0 0.0
    %860 = vmatprep.subr.mxu0 0.0
    %861 = vmatpush1.msra.mxu0 0.0
    %862 = vmatprep.subr.mxu0 0.0
    %863 = vmatpush1.msra.mxu0 0.0
    %864 = vmatprep.subr.mxu0 0.0
    %865 = vmatpush1.msra.mxu0 0.0
    %866 = vmatprep.subr.mxu0 0.0
    %867 = vmatpush1.msra.mxu0 0.0
    %868 = vmatprep.subr.mxu0 0.0
    %869 = vmatpush1.msra.mxu0 0.0
    %870 = vmatprep.subr.mxu0 0.0
    %871 = vmatpush1.msra.mxu0 0.0
    %872 = vmatprep.subr.mxu0 0.0
    %873 = vmatpush1.msra.mxu0 0.0
    %874 = vmatprep.subr.mxu0 0.0
    %875 = vmatpush1.msra.mxu0 0.0
    %876 = vmatprep.subr.mxu0 0.0
    %877 = vmatpush1.msra.mxu0 0.0
    %878 = vmatprep.subr.mxu0 0.0
    %879 = vmatpush1.msra.mxu0 0.0
    %880 = vmatprep.subr.mxu0 0.0
    %881 = vmatpush1.msra.mxu0 0.0
    %882 = vmatprep.mubr.f32.mxu0 0.0
    %883 = vmatmul.mubr.f32.gmra.mrb[0].mxu0 %v211
    %v884 = vpop.f32.mrb[0].mxu0
    %v885 = vadd.f32 0.0, %v884
    %v886 = vpop.f32.mrb[0].mxu0
    %887 = vmatprep.mubr.f32.mxu0 0.0
    %888 = vmatmul.mubr.f32.gmra.mrb[0].mxu0 %v214
    %v889 = vpop.f32.mrb[0].mxu0
    %v890 = vadd.f32 0.0, %v889
    %v891 = vpop.f32.mrb[0].mxu0
    %892 = vdwg.mxu0
    %893 = vmatprep.subr.mxu0 0.0
    %894 = vmatpush1.msra.mxu0 %v508
    %895 = vmatprep.subr.mxu0 0.0
    %896 = vmatpush1.msra.mxu0 %v513
    %897 = vmatprep.subr.mxu0 0.0
    %898 = vmatpush1.msra.mxu0 0.0
    %899 = vmatprep.subr.mxu0 0.0
    %900 = vmatpush1.msra.mxu0 0.0
    %901 = vmatprep.subr.mxu0 0.0
    %902 = vmatpush1.msra.mxu0 0.0
    %903 = vmatprep.subr.mxu0 0.0
    %904 = vmatpush1.msra.mxu0 0.0
    %905 = vmatprep.subr.mxu0 0.0
    %906 = vmatpush1.msra.mxu0 0.0
    %907 = vmatprep.subr.mxu0 0.0
    %908 = vmatpush1.msra.mxu0 0.0
    %909 = vmatprep.subr.mxu0 0.0
    %910 = vmatpush1.msra.mxu0 0.0
    %911 = vmatprep.subr.mxu0 0.0
    %912 = vmatpush1.msra.mxu0 0.0
    %913 = vmatprep.subr.mxu0 0.0
    %914 = vmatpush1.msra.mxu0 0.0
    %915 = vmatprep.subr.mxu0 0.0
    %916 = vmatpush1.msra.mxu0 0.0
    %917 = vmatprep.subr.mxu0 0.0
    %918 = vmatpush1.msra.mxu0 0.0
    %919 = vmatprep.subr.mxu0 0.0
    %920 = vmatpush1.msra.mxu0 0.0
    %921 = vmatprep.subr.mxu0 0.0
    %922 = vmatpush1.msra.mxu0 0.0
    %923 = vmatprep.subr.mxu0 0.0
    %924 = vmatpush1.msra.mxu0 0.0
    %925 = vmatprep.subr.mxu0 0.0
    %926 = vmatpush1.msra.mxu0 0.0
    %927 = vmatprep.subr.mxu0 0.0
    %928 = vmatpush1.msra.mxu0 0.0
    %929 = vmatprep.subr.mxu0 0.0
    %930 = vmatpush1.msra.mxu0 0.0
    %931 = vmatprep.subr.mxu0 0.0
    %932 = vmatpush1.msra.mxu0 0.0
    %933 = vmatprep.subr.mxu0 0.0
    %934 = vmatpush1.msra.mxu0 0.0
    %935 = vmatprep.subr.mxu0 0.0
    %936 = vmatpush1.msra.mxu0 0.0
    %937 = vmatprep.subr.mxu0 0.0
    %938 = vmatpush1.msra.mxu0 0.0
    %939 = vmatprep.subr.mxu0 0.0
    %940 = vmatpush1.msra.mxu0 0.0
    %941 = vmatprep.subr.mxu0 0.0
    %942 = vmatpush1.msra.mxu0 0.0
    %943 = vmatprep.subr.mxu0 0.0
    %944 = vmatpush1.msra.mxu0 0.0
    %945 = vmatprep.subr.mxu0 0.0
    %946 = vmatpush1.msra.mxu0 0.0
    %947 = vmatprep.subr.mxu0 0.0
    %948 = vmatpush1.msra.mxu0 0.0
    %949 = vmatprep.subr.mxu0 0.0
    %950 = vmatpush1.msra.mxu0 0.0
    %951 = vmatprep.subr.mxu0 0.0
    %952 = vmatpush1.msra.mxu0 0.0
    %953 = vmatprep.subr.mxu0 0.0
    %954 = vmatpush1.msra.mxu0 0.0
    %955 = vmatprep.subr.mxu0 0.0
    %956 = vmatpush1.msra.mxu0 0.0
    %957 = vmatprep.mubr.f32.mxu0 0.0
    %958 = vmatmul.mubr.f32.gmra.mrb[0].mxu0 %v211
    %v959 = vpop.f32.mrb[0].mxu0
    %v960 = vadd.f32 0.0, %v959
    %v961 = vpop.f32.mrb[0].mxu0
    %962 = vmatprep.mubr.f32.mxu0 0.0
    %963 = vmatmul.mubr.f32.gmra.mrb[0].mxu0 %v214
    %v964 = vpop.f32.mrb[0].mxu0
    %v965 = vadd.f32 0.0, %v964
    %v966 = vpop.f32.mrb[0].mxu0
    %967 = vdwg.mxu0
    %v968 = vcombine.low %v735, %v885
    %v969 = vcombine.high %v735, %v885
    %v971 = vunpack.c.l.s4 1983009808
    %v972 = vunpack.c.0.s8 %v971
    %v973 = vlaneseq
    %v974 = vshrl.u32 %v973, 7
    %v975 = vsub.s32 %v972, %v974
    %v976 = vrot.slane %v968, %v975
    %v978 = vunpack.c.l.s4 1983009808
    %v979 = vunpack.c.0.s8 %v978
    %v980 = vlaneseq
    %v981 = vshrl.u32 %v980, 7
    %v982 = vsub.s32 %v979, %v981
    %v983 = vrot.slane %v969, %v982
    %v984 = vcombine.low %v810, %v960
    %v985 = vcombine.high %v810, %v960
    %v987 = vunpack.c.l.s4 1983009808
    %v988 = vunpack.c.0.s8 %v987
    %v989 = vlaneseq
    %v990 = vshrl.u32 %v989, 7
    %v991 = vsub.s32 %v988, %v990
    %v992 = vrot.slane %v984, %v991
    %v994 = vunpack.c.l.s4 1983009808
    %v995 = vunpack.c.0.s8 %v994
    %v996 = vlaneseq
    %v997 = vshrl.u32 %v996, 7
    %v998 = vsub.s32 %v995, %v997
    %v999 = vrot.slane %v985, %v998
    %v1000 = vcombine.low %v976, %v992
    %v1001 = vcombine.high %v976, %v992
    %v1003 = vunpack.c.l.s4 1934713408
    %v1004 = vunpack.c.0.s8 %v1003
    %v1005 = vlaneseq
    %v1006 = vshrl.u32 %v1005, 7
    %v1007 = vsub.s32 %v1004, %v1006
    %v1008 = vrot.slane %v1000, %v1007
    %v1010 = vunpack.c.l.s4 1934713408
    %v1011 = vunpack.c.0.s8 %v1010
    %v1012 = vlaneseq
    %v1013 = vshrl.u32 %v1012, 7
    %v1014 = vsub.s32 %v1011, %v1013
    %v1015 = vrot.slane %v1001, %v1014
    %v1016 = vcombine.low %v983, %v999
    %v1017 = vcombine.high %v983, %v999
    %v1019 = vunpack.c.l.s4 1934713408
    %v1020 = vunpack.c.0.s8 %v1019
    %v1021 = vlaneseq
    %v1022 = vshrl.u32 %v1021, 7
    %v1023 = vsub.s32 %v1020, %v1022
    %v1024 = vrot.slane %v1016, %v1023
    %v1026 = vunpack.c.l.s4 1934713408
    %v1027 = vunpack.c.0.s8 %v1026
    %v1028 = vlaneseq
    %v1029 = vshrl.u32 %v1028, 7
    %v1030 = vsub.s32 %v1027, %v1029
    %v1031 = vrot.slane %v1017, %v1030
    %v1032 = vcombine.high %v1008, 0.0
    %v1033 = vcombine.high %v1015, 0.0
    %v1034 = vcombine.high %v1024, 0.0
    %v1035 = vcombine.high %v1031, 0.0
    %v1036 = vcombine.low %v740, %v890
    %v1037 = vcombine.high %v740, %v890
    %v1039 = vunpack.c.l.s4 1983009808
    %v1040 = vunpack.c.0.s8 %v1039
    %v1041 = vlaneseq
    %v1042 = vshrl.u32 %v1041, 7
    %v1043 = vsub.s32 %v1040, %v1042
    %v1044 = vrot.slane %v1036, %v1043
    %v1046 = vunpack.c.l.s4 1983009808
    %v1047 = vunpack.c.0.s8 %v1046
    %v1048 = vlaneseq
    %v1049 = vshrl.u32 %v1048, 7
    %v1050 = vsub.s32 %v1047, %v1049
    %v1051 = vrot.slane %v1037, %v1050
    %v1052 = vcombine.low %v815, %v965
    %v1053 = vcombine.high %v815, %v965
    %v1055 = vunpack.c.l.s4 1983009808
    %v1056 = vunpack.c.0.s8 %v1055
    %v1057 = vlaneseq
    %v1058 = vshrl.u32 %v1057, 7
    %v1059 = vsub.s32 %v1056, %v1058
    %v1060 = vrot.slane %v1052, %v1059
    %v1062 = vunpack.c.l.s4 1983009808
    %v1063 = vunpack.c.0.s8 %v1062
    %v1064 = vlaneseq
    %v1065 = vshrl.u32 %v1064, 7
    %v1066 = vsub.s32 %v1063, %v1065
    %v1067 = vrot.slane %v1053, %v1066
    %v1068 = vcombine.low %v1044, %v1060
    %v1069 = vcombine.high %v1044, %v1060
    %v1071 = vunpack.c.l.s4 1934713408
    %v1072 = vunpack.c.0.s8 %v1071
    %v1073 = vlaneseq
    %v1074 = vshrl.u32 %v1073, 7
    %v1075 = vsub.s32 %v1072, %v1074
    %v1076 = vrot.slane %v1068, %v1075
    %v1078 = vunpack.c.l.s4 1934713408
    %v1079 = vunpack.c.0.s8 %v1078
    %v1080 = vlaneseq
    %v1081 = vshrl.u32 %v1080, 7
    %v1082 = vsub.s32 %v1079, %v1081
    %v1083 = vrot.slane %v1069, %v1082
    %v1084 = vcombine.low %v1051, %v1067
    %v1085 = vcombine.high %v1051, %v1067
    %v1087 = vunpack.c.l.s4 1934713408
    %v1088 = vunpack.c.0.s8 %v1087
    %v1089 = vlaneseq
    %v1090 = vshrl.u32 %v1089, 7
    %v1091 = vsub.s32 %v1088, %v1090
    %v1092 = vrot.slane %v1084, %v1091
    %v1094 = vunpack.c.l.s4 1934713408
    %v1095 = vunpack.c.0.s8 %v1094
    %v1096 = vlaneseq
    %v1097 = vshrl.u32 %v1096, 7
    %v1098 = vsub.s32 %v1095, %v1097
    %v1099 = vrot.slane %v1085, %v1098
    %v1100 = vcombine.high %v1076, 0.0
    %v1101 = vcombine.high %v1083, 0.0
    %v1102 = vcombine.high %v1092, 0.0
    %v1103 = vcombine.high %v1099, 0.0
    %1104 = vst.msk [vmem:[#allocation2 + $0x8] sm:$0xf] %vm190, %v1008
    %1105 = vst.msk [vmem:[#allocation2 + $0x28] sm:$0xf] %vm190, %v1032
    %1106 = vst.msk [vmem:[#allocation2 + $0x48] sm:$0xf] %vm190, %v1015
    %1107 = vst.msk [vmem:[#allocation2 + $0x68] sm:$0xf] %vm190, %v1033
    %1108 = vst.msk [vmem:[#allocation2 + $0x88] sm:$0xf] %vm190, %v1024
    %1109 = vst.msk [vmem:[#allocation2 + $0xa8] sm:$0xf] %vm190, %v1034
    %1110 = vst.msk [vmem:[#allocation2 + $0xc8] sm:$0xf] %vm190, %v1031
    %1111 = vst.msk [vmem:[#allocation2 + $0xe8] sm:$0xf] %vm190, %v1035
    %1112 = vst.msk [vmem:[#allocation2 + $0x108] sm:$0xf] %vm190, %v1076
    %1113 = vst.msk [vmem:[#allocation2 + $0x128] sm:$0xf] %vm190, %v1100
    %1114 = vst.msk [vmem:[#allocation2 + $0x148] sm:$0xf] %vm190, %v1083
    %1115 = vst.msk [vmem:[#allocation2 + $0x168] sm:$0xf] %vm190, %v1101
    %1116 = vst.msk [vmem:[#allocation2 + $0x188] sm:$0xf] %vm190, %v1092
    %1117 = vst.msk [vmem:[#allocation2 + $0x1a8] sm:$0xf] %vm190, %v1102
    %1118 = vst.msk [vmem:[#allocation2 + $0x1c8] sm:$0xf] %vm190, %v1099
    %1119 = vst.msk [vmem:[#allocation2 + $0x1e8] sm:$0xf] %vm190, %v1103
    %s1120 = scalar_lea.vmem [#allocation6], 16
    %v1121 = vld [vmem:[%s1120] sm:$0xff]
    %v1122 = vld [vmem:[%s1120 + $0x8] sm:$0xff]
    %v1124 = vsel %vm209, %v1121, 0
    %v1127 = vsel %vm209, %v1122, 0
    %1129 = vmatprep.subr.mxu0 0.0
    %1130 = vmatpush1.msra.mxu0 %v46
    %1131 = vmatprep.subr.mxu0 0.0
    %1132 = vmatpush1.msra.mxu0 %v47
    %1133 = vmatprep.subr.mxu0 0.0
    %1134 = vmatpush1.msra.mxu0 0.0
    %1135 = vmatprep.subr.mxu0 0.0
    %1136 = vmatpush1.msra.mxu0 0.0
    %1137 = vmatprep.subr.mxu0 0.0
    %1138 = vmatpush1.msra.mxu0 0.0
    %1139 = vmatprep.subr.mxu0 0.0
    %1140 = vmatpush1.msra.mxu0 0.0
    %1141 = vmatprep.subr.mxu0 0.0
    %1142 = vmatpush1.msra.mxu0 0.0
    %1143 = vmatprep.subr.mxu0 0.0
    %1144 = vmatpush1.msra.mxu0 0.0
    %1145 = vmatprep.subr.mxu0 0.0
    %1146 = vmatpush1.msra.mxu0 0.0
    %1147 = vmatprep.subr.mxu0 0.0
    %1148 = vmatpush1.msra.mxu0 0.0
    %1149 = vmatprep.subr.mxu0 0.0
    %1150 = vmatpush1.msra.mxu0 0.0
    %1151 = vmatprep.subr.mxu0 0.0
    %1152 = vmatpush1.msra.mxu0 0.0
    %1153 = vmatprep.subr.mxu0 0.0
    %1154 = vmatpush1.msra.mxu0 0.0
    %1155 = vmatprep.subr.mxu0 0.0
    %1156 = vmatpush1.msra.mxu0 0.0
    %1157 = vmatprep.subr.mxu0 0.0
    %1158 = vmatpush1.msra.mxu0 0.0
    %1159 = vmatprep.subr.mxu0 0.0
    %1160 = vmatpush1.msra.mxu0 0.0
    %1161 = vmatprep.subr.mxu0 0.0
    %1162 = vmatpush1.msra.mxu0 0.0
    %1163 = vmatprep.subr.mxu0 0.0
    %1164 = vmatpush1.msra.mxu0 0.0
    %1165 = vmatprep.subr.mxu0 0.0
    %1166 = vmatpush1.msra.mxu0 0.0
    %1167 = vmatprep.subr.mxu0 0.0
    %1168 = vmatpush1.msra.mxu0 0.0
    %1169 = vmatprep.subr.mxu0 0.0
    %1170 = vmatpush1.msra.mxu0 0.0
    %1171 = vmatprep.subr.mxu0 0.0
    %1172 = vmatpush1.msra.mxu0 0.0
    %1173 = vmatprep.subr.mxu0 0.0
    %1174 = vmatpush1.msra.mxu0 0.0
    %1175 = vmatprep.subr.mxu0 0.0
    %1176 = vmatpush1.msra.mxu0 0.0
    %1177 = vmatprep.subr.mxu0 0.0
    %1178 = vmatpush1.msra.mxu0 0.0
    %1179 = vmatprep.subr.mxu0 0.0
    %1180 = vmatpush1.msra.mxu0 0.0
    %1181 = vmatprep.subr.mxu0 0.0
    %1182 = vmatpush1.msra.mxu0 0.0
    %1183 = vmatprep.subr.mxu0 0.0
    %1184 = vmatpush1.msra.mxu0 0.0
    %1185 = vmatprep.subr.mxu0 0.0
    %1186 = vmatpush1.msra.mxu0 0.0
    %1187 = vmatprep.subr.mxu0 0.0
    %1188 = vmatpush1.msra.mxu0 0.0
    %1189 = vmatprep.subr.mxu0 0.0
    %1190 = vmatpush1.msra.mxu0 0.0
    %1191 = vmatprep.subr.mxu0 0.0
    %1192 = vmatpush1.msra.mxu0 0.0
    %1193 = vmatprep.mubr.f32.mxu0 0.0
    %1194 = vmatmul.mubr.f32.gmra.mrb[0].mxu0 %v1124
    %v1195 = vpop.f32.mrb[0].mxu0
    %v1196 = vadd.f32 0.0, %v1195
    %v1197 = vpop.f32.mrb[0].mxu0
    %1198 = vmatprep.mubr.f32.mxu0 0.0
    %1199 = vmatmul.mubr.f32.gmra.mrb[0].mxu0 %v1127
    %v1200 = vpop.f32.mrb[0].mxu0
    %v1201 = vadd.f32 0.0, %v1200
    %v1202 = vpop.f32.mrb[0].mxu0
    %1203 = vdwg.mxu0
    %1204 = vmatprep.subr.mxu0 0.0
    %1205 = vmatpush1.msra.mxu0 %v48
    %1206 = vmatprep.subr.mxu0 0.0
    %1207 = vmatpush1.msra.mxu0 %v49
    %1208 = vmatprep.subr.mxu0 0.0
    %1209 = vmatpush1.msra.mxu0 0.0
    %1210 = vmatprep.subr.mxu0 0.0
    %1211 = vmatpush1.msra.mxu0 0.0
    %1212 = vmatprep.subr.mxu0 0.0
    %1213 = vmatpush1.msra.mxu0 0.0
    %1214 = vmatprep.subr.mxu0 0.0
    %1215 = vmatpush1.msra.mxu0 0.0
    %1216 = vmatprep.subr.mxu0 0.0
    %1217 = vmatpush1.msra.mxu0 0.0
    %1218 = vmatprep.subr.mxu0 0.0
    %1219 = vmatpush1.msra.mxu0 0.0
    %1220 = vmatprep.subr.mxu0 0.0
    %1221 = vmatpush1.msra.mxu0 0.0
    %1222 = vmatprep.subr.mxu0 0.0
    %1223 = vmatpush1.msra.mxu0 0.0
    %1224 = vmatprep.subr.mxu0 0.0
    %1225 = vmatpush1.msra.mxu0 0.0
    %1226 = vmatprep.subr.mxu0 0.0
    %1227 = vmatpush1.msra.mxu0 0.0
    %1228 = vmatprep.subr.mxu0 0.0
    %1229 = vmatpush1.msra.mxu0 0.0
    %1230 = vmatprep.subr.mxu0 0.0
    %1231 = vmatpush1.msra.mxu0 0.0
    %1232 = vmatprep.subr.mxu0 0.0
    %1233 = vmatpush1.msra.mxu0 0.0
    %1234 = vmatprep.subr.mxu0 0.0
    %1235 = vmatpush1.msra.mxu0 0.0
    %1236 = vmatprep.subr.mxu0 0.0
    %1237 = vmatpush1.msra.mxu0 0.0
    %1238 = vmatprep.subr.mxu0 0.0
    %1239 = vmatpush1.msra.mxu0 0.0
    %1240 = vmatprep.subr.mxu0 0.0
    %1241 = vmatpush1.msra.mxu0 0.0
    %1242 = vmatprep.subr.mxu0 0.0
    %1243 = vmatpush1.msra.mxu0 0.0
    %1244 = vmatprep.subr.mxu0 0.0
    %1245 = vmatpush1.msra.mxu0 0.0
    %1246 = vmatprep.subr.mxu0 0.0
    %1247 = vmatpush1.msra.mxu0 0.0
    %1248 = vmatprep.subr.mxu0 0.0
    %1249 = vmatpush1.msra.mxu0 0.0
    %1250 = vmatprep.subr.mxu0 0.0
    %1251 = vmatpush1.msra.mxu0 0.0
    %1252 = vmatprep.subr.mxu0 0.0
    %1253 = vmatpush1.msra.mxu0 0.0
    %1254 = vmatprep.subr.mxu0 0.0
    %1255 = vmatpush1.msra.mxu0 0.0
    %1256 = vmatprep.subr.mxu0 0.0
    %1257 = vmatpush1.msra.mxu0 0.0
    %1258 = vmatprep.subr.mxu0 0.0
    %1259 = vmatpush1.msra.mxu0 0.0
    %1260 = vmatprep.subr.mxu0 0.0
    %1261 = vmatpush1.msra.mxu0 0.0
    %1262 = vmatprep.subr.mxu0 0.0
    %1263 = vmatpush1.msra.mxu0 0.0
    %1264 = vmatprep.subr.mxu0 0.0
    %1265 = vmatpush1.msra.mxu0 0.0
    %1266 = vmatprep.subr.mxu0 0.0
    %1267 = vmatpush1.msra.mxu0 0.0
    %1268 = vmatprep.mubr.f32.mxu0 0.0
    %1269 = vmatmul.mubr.f32.gmra.mrb[0].mxu0 %v1124
    %v1270 = vpop.f32.mrb[0].mxu0
    %v1271 = vadd.f32 0.0, %v1270
    %v1272 = vpop.f32.mrb[0].mxu0
    %1273 = vmatprep.mubr.f32.mxu0 0.0
    %1274 = vmatmul.mubr.f32.gmra.mrb[0].mxu0 %v1127
    %v1275 = vpop.f32.mrb[0].mxu0
    %v1276 = vadd.f32 0.0, %v1275
    %v1277 = vpop.f32.mrb[0].mxu0
    %1278 = vdwg.mxu0
    %1279 = vmatprep.subr.mxu0 0.0
    %1280 = vmatpush1.msra.mxu0 %v50
    %1281 = vmatprep.subr.mxu0 0.0
    %1282 = vmatpush1.msra.mxu0 %v51
    %1283 = vmatprep.subr.mxu0 0.0
    %1284 = vmatpush1.msra.mxu0 0.0
    %1285 = vmatprep.subr.mxu0 0.0
    %1286 = vmatpush1.msra.mxu0 0.0
    %1287 = vmatprep.subr.mxu0 0.0
    %1288 = vmatpush1.msra.mxu0 0.0
    %1289 = vmatprep.subr.mxu0 0.0
    %1290 = vmatpush1.msra.mxu0 0.0
    %1291 = vmatprep.subr.mxu0 0.0
    %1292 = vmatpush1.msra.mxu0 0.0
    %1293 = vmatprep.subr.mxu0 0.0
    %1294 = vmatpush1.msra.mxu0 0.0
    %1295 = vmatprep.subr.mxu0 0.0
    %1296 = vmatpush1.msra.mxu0 0.0
    %1297 = vmatprep.subr.mxu0 0.0
    %1298 = vmatpush1.msra.mxu0 0.0
    %1299 = vmatprep.subr.mxu0 0.0
    %1300 = vmatpush1.msra.mxu0 0.0
    %1301 = vmatprep.subr.mxu0 0.0
    %1302 = vmatpush1.msra.mxu0 0.0
    %1303 = vmatprep.subr.mxu0 0.0
    %1304 = vmatpush1.msra.mxu0 0.0
    %1305 = vmatprep.subr.mxu0 0.0
    %1306 = vmatpush1.msra.mxu0 0.0
    %1307 = vmatprep.subr.mxu0 0.0
    %1308 = vmatpush1.msra.mxu0 0.0
    %1309 = vmatprep.subr.mxu0 0.0
    %1310 = vmatpush1.msra.mxu0 0.0
    %1311 = vmatprep.subr.mxu0 0.0
    %1312 = vmatpush1.msra.mxu0 0.0
    %1313 = vmatprep.subr.mxu0 0.0
    %1314 = vmatpush1.msra.mxu0 0.0
    %1315 = vmatprep.subr.mxu0 0.0
    %1316 = vmatpush1.msra.mxu0 0.0
    %1317 = vmatprep.subr.mxu0 0.0
    %1318 = vmatpush1.msra.mxu0 0.0
    %1319 = vmatprep.subr.mxu0 0.0
    %1320 = vmatpush1.msra.mxu0 0.0
    %1321 = vmatprep.subr.mxu0 0.0
    %1322 = vmatpush1.msra.mxu0 0.0
    %1323 = vmatprep.subr.mxu0 0.0
    %1324 = vmatpush1.msra.mxu0 0.0
    %1325 = vmatprep.subr.mxu0 0.0
    %1326 = vmatpush1.msra.mxu0 0.0
    %1327 = vmatprep.subr.mxu0 0.0
    %1328 = vmatpush1.msra.mxu0 0.0
    %1329 = vmatprep.subr.mxu0 0.0
    %1330 = vmatpush1.msra.mxu0 0.0
    %1331 = vmatprep.subr.mxu0 0.0
    %1332 = vmatpush1.msra.mxu0 0.0
    %1333 = vmatprep.subr.mxu0 0.0
    %1334 = vmatpush1.msra.mxu0 0.0
    %1335 = vmatprep.subr.mxu0 0.0
    %1336 = vmatpush1.msra.mxu0 0.0
    %1337 = vmatprep.subr.mxu0 0.0
    %1338 = vmatpush1.msra.mxu0 0.0
    %1339 = vmatprep.subr.mxu0 0.0
    %1340 = vmatpush1.msra.mxu0 0.0
    %1341 = vmatprep.subr.mxu0 0.0
    %1342 = vmatpush1.msra.mxu0 0.0
    %1343 = vmatprep.mubr.f32.mxu0 0.0
    %1344 = vmatmul.mubr.f32.gmra.mrb[0].mxu0 %v1124
    %v1345 = vpop.f32.mrb[0].mxu0
    %v1346 = vadd.f32 0.0, %v1345
    %v1347 = vpop.f32.mrb[0].mxu0
    %1348 = vmatprep.mubr.f32.mxu0 0.0
    %1349 = vmatmul.mubr.f32.gmra.mrb[0].mxu0 %v1127
    %v1350 = vpop.f32.mrb[0].mxu0
    %v1351 = vadd.f32 0.0, %v1350
    %v1352 = vpop.f32.mrb[0].mxu0
    %1353 = vdwg.mxu0
    %1354 = vmatprep.subr.mxu0 0.0
    %1355 = vmatpush1.msra.mxu0 %v52
    %1356 = vmatprep.subr.mxu0 0.0
    %1357 = vmatpush1.msra.mxu0 %v53
    %1358 = vmatprep.subr.mxu0 0.0
    %1359 = vmatpush1.msra.mxu0 0.0
    %1360 = vmatprep.subr.mxu0 0.0
    %1361 = vmatpush1.msra.mxu0 0.0
    %1362 = vmatprep.subr.mxu0 0.0
    %1363 = vmatpush1.msra.mxu0 0.0
    %1364 = vmatprep.subr.mxu0 0.0
    %1365 = vmatpush1.msra.mxu0 0.0
    %1366 = vmatprep.subr.mxu0 0.0
    %1367 = vmatpush1.msra.mxu0 0.0
    %1368 = vmatprep.subr.mxu0 0.0
    %1369 = vmatpush1.msra.mxu0 0.0
    %1370 = vmatprep.subr.mxu0 0.0
    %1371 = vmatpush1.msra.mxu0 0.0
    %1372 = vmatprep.subr.mxu0 0.0
    %1373 = vmatpush1.msra.mxu0 0.0
    %1374 = vmatprep.subr.mxu0 0.0
    %1375 = vmatpush1.msra.mxu0 0.0
    %1376 = vmatprep.subr.mxu0 0.0
    %1377 = vmatpush1.msra.mxu0 0.0
    %1378 = vmatprep.subr.mxu0 0.0
    %1379 = vmatpush1.msra.mxu0 0.0
    %1380 = vmatprep.subr.mxu0 0.0
    %1381 = vmatpush1.msra.mxu0 0.0
    %1382 = vmatprep.subr.mxu0 0.0
    %1383 = vmatpush1.msra.mxu0 0.0
    %1384 = vmatprep.subr.mxu0 0.0
    %1385 = vmatpush1.msra.mxu0 0.0
    %1386 = vmatprep.subr.mxu0 0.0
    %1387 = vmatpush1.msra.mxu0 0.0
    %1388 = vmatprep.subr.mxu0 0.0
    %1389 = vmatpush1.msra.mxu0 0.0
    %1390 = vmatprep.subr.mxu0 0.0
    %1391 = vmatpush1.msra.mxu0 0.0
    %1392 = vmatprep.subr.mxu0 0.0
    %1393 = vmatpush1.msra.mxu0 0.0
    %1394 = vmatprep.subr.mxu0 0.0
    %1395 = vmatpush1.msra.mxu0 0.0
    %1396 = vmatprep.subr.mxu0 0.0
    %1397 = vmatpush1.msra.mxu0 0.0
    %1398 = vmatprep.subr.mxu0 0.0
    %1399 = vmatpush1.msra.mxu0 0.0
    %1400 = vmatprep.subr.mxu0 0.0
    %1401 = vmatpush1.msra.mxu0 0.0
    %1402 = vmatprep.subr.mxu0 0.0
    %1403 = vmatpush1.msra.mxu0 0.0
    %1404 = vmatprep.subr.mxu0 0.0
    %1405 = vmatpush1.msra.mxu0 0.0
    %1406 = vmatprep.subr.mxu0 0.0
    %1407 = vmatpush1.msra.mxu0 0.0
    %1408 = vmatprep.subr.mxu0 0.0
    %1409 = vmatpush1.msra.mxu0 0.0
    %1410 = vmatprep.subr.mxu0 0.0
    %1411 = vmatpush1.msra.mxu0 0.0
    %1412 = vmatprep.subr.mxu0 0.0
    %1413 = vmatpush1.msra.mxu0 0.0
    %1414 = vmatprep.subr.mxu0 0.0
    %1415 = vmatpush1.msra.mxu0 0.0
    %1416 = vmatprep.subr.mxu0 0.0
    %1417 = vmatpush1.msra.mxu0 0.0
    %1418 = vmatprep.mubr.f32.mxu0 0.0
    %1419 = vmatmul.mubr.f32.gmra.mrb[0].mxu0 %v1124
    %v1420 = vpop.f32.mrb[0].mxu0
    %v1421 = vadd.f32 0.0, %v1420
    %v1422 = vpop.f32.mrb[0].mxu0
    %1423 = vmatprep.mubr.f32.mxu0 0.0
    %1424 = vmatmul.mubr.f32.gmra.mrb[0].mxu0 %v1127
    %v1425 = vpop.f32.mrb[0].mxu0
    %v1426 = vadd.f32 0.0, %v1425
    %v1427 = vpop.f32.mrb[0].mxu0
    %1428 = vdwg.mxu0
    %v1429 = vcombine.low %v1196, %v1346
    %v1430 = vcombine.high %v1196, %v1346
    %v1432 = vunpack.c.l.s4 1983009808
    %v1433 = vunpack.c.0.s8 %v1432
    %v1434 = vlaneseq
    %v1435 = vshrl.u32 %v1434, 7
    %v1436 = vsub.s32 %v1433, %v1435
    %v1437 = vrot.slane %v1429, %v1436
    %v1439 = vunpack.c.l.s4 1983009808
    %v1440 = vunpack.c.0.s8 %v1439
    %v1441 = vlaneseq
    %v1442 = vshrl.u32 %v1441, 7
    %v1443 = vsub.s32 %v1440, %v1442
    %v1444 = vrot.slane %v1430, %v1443
    %v1445 = vcombine.low %v1271, %v1421
    %v1446 = vcombine.high %v1271, %v1421
    %v1448 = vunpack.c.l.s4 1983009808
    %v1449 = vunpack.c.0.s8 %v1448
    %v1450 = vlaneseq
    %v1451 = vshrl.u32 %v1450, 7
    %v1452 = vsub.s32 %v1449, %v1451
    %v1453 = vrot.slane %v1445, %v1452
    %v1455 = vunpack.c.l.s4 1983009808
    %v1456 = vunpack.c.0.s8 %v1455
    %v1457 = vlaneseq
    %v1458 = vshrl.u32 %v1457, 7
    %v1459 = vsub.s32 %v1456, %v1458
    %v1460 = vrot.slane %v1446, %v1459
    %v1461 = vcombine.low %v1437, %v1453
    %v1462 = vcombine.high %v1437, %v1453
    %v1464 = vunpack.c.l.s4 1934713408
    %v1465 = vunpack.c.0.s8 %v1464
    %v1466 = vlaneseq
    %v1467 = vshrl.u32 %v1466, 7
    %v1468 = vsub.s32 %v1465, %v1467
    %v1469 = vrot.slane %v1461, %v1468
    %v1471 = vunpack.c.l.s4 1934713408
    %v1472 = vunpack.c.0.s8 %v1471
    %v1473 = vlaneseq
    %v1474 = vshrl.u32 %v1473, 7
    %v1475 = vsub.s32 %v1472, %v1474
    %v1476 = vrot.slane %v1462, %v1475
    %v1477 = vcombine.low %v1444, %v1460
    %v1478 = vcombine.high %v1444, %v1460
    %v1480 = vunpack.c.l.s4 1934713408
    %v1481 = vunpack.c.0.s8 %v1480
    %v1482 = vlaneseq
    %v1483 = vshrl.u32 %v1482, 7
    %v1484 = vsub.s32 %v1481, %v1483
    %v1485 = vrot.slane %v1477, %v1484
    %v1487 = vunpack.c.l.s4 1934713408
    %v1488 = vunpack.c.0.s8 %v1487
    %v1489 = vlaneseq
    %v1490 = vshrl.u32 %v1489, 7
    %v1491 = vsub.s32 %v1488, %v1490
    %v1492 = vrot.slane %v1478, %v1491
    %v1493 = vcombine.high %v1469, 0.0
    %v1494 = vcombine.high %v1476, 0.0
    %v1495 = vcombine.high %v1485, 0.0
    %v1496 = vcombine.high %v1492, 0.0
    %v1497 = vcombine.low %v1201, %v1351
    %v1498 = vcombine.high %v1201, %v1351
    %v1500 = vunpack.c.l.s4 1983009808
    %v1501 = vunpack.c.0.s8 %v1500
    %v1502 = vlaneseq
    %v1503 = vshrl.u32 %v1502, 7
    %v1504 = vsub.s32 %v1501, %v1503
    %v1505 = vrot.slane %v1497, %v1504
    %v1507 = vunpack.c.l.s4 1983009808
    %v1508 = vunpack.c.0.s8 %v1507
    %v1509 = vlaneseq
    %v1510 = vshrl.u32 %v1509, 7
    %v1511 = vsub.s32 %v1508, %v1510
    %v1512 = vrot.slane %v1498, %v1511
    %v1513 = vcombine.low %v1276, %v1426
    %v1514 = vcombine.high %v1276, %v1426
    %v1516 = vunpack.c.l.s4 1983009808
    %v1517 = vunpack.c.0.s8 %v1516
    %v1518 = vlaneseq
    %v1519 = vshrl.u32 %v1518, 7
    %v1520 = vsub.s32 %v1517, %v1519
    %v1521 = vrot.slane %v1513, %v1520
    %v1523 = vunpack.c.l.s4 1983009808
    %v1524 = vunpack.c.0.s8 %v1523
    %v1525 = vlaneseq
    %v1526 = vshrl.u32 %v1525, 7
    %v1527 = vsub.s32 %v1524, %v1526
    %v1528 = vrot.slane %v1514, %v1527
    %v1529 = vcombine.low %v1505, %v1521
    %v1530 = vcombine.high %v1505, %v1521
    %v1532 = vunpack.c.l.s4 1934713408
    %v1533 = vunpack.c.0.s8 %v1532
    %v1534 = vlaneseq
    %v1535 = vshrl.u32 %v1534, 7
    %v1536 = vsub.s32 %v1533, %v1535
    %v1537 = vrot.slane %v1529, %v1536
    %v1539 = vunpack.c.l.s4 1934713408
    %v1540 = vunpack.c.0.s8 %v1539
    %v1541 = vlaneseq
    %v1542 = vshrl.u32 %v1541, 7
    %v1543 = vsub.s32 %v1540, %v1542
    %v1544 = vrot.slane %v1530, %v1543
    %v1545 = vcombine.low %v1512, %v1528
    %v1546 = vcombine.high %v1512, %v1528
    %v1548 = vunpack.c.l.s4 1934713408
    %v1549 = vunpack.c.0.s8 %v1548
    %v1550 = vlaneseq
    %v1551 = vshrl.u32 %v1550, 7
    %v1552 = vsub.s32 %v1549, %v1551
    %v1553 = vrot.slane %v1545, %v1552
    %v1555 = vunpack.c.l.s4 1934713408
    %v1556 = vunpack.c.0.s8 %v1555
    %v1557 = vlaneseq
    %v1558 = vshrl.u32 %v1557, 7
    %v1559 = vsub.s32 %v1556, %v1558
    %v1560 = vrot.slane %v1546, %v1559
    %v1561 = vcombine.high %v1537, 0.0
    %v1562 = vcombine.high %v1544, 0.0
    %v1563 = vcombine.high %v1553, 0.0
    %v1564 = vcombine.high %v1560, 0.0
    %1565 = vst.msk [vmem:[#allocation2 + $0xc] sm:$0xf] %vm190, %v1469
    %1566 = vst.msk [vmem:[#allocation2 + $0x2c] sm:$0xf] %vm190, %v1493
    %1567 = vst.msk [vmem:[#allocation2 + $0x4c] sm:$0xf] %vm190, %v1476
    %1568 = vst.msk [vmem:[#allocation2 + $0x6c] sm:$0xf] %vm190, %v1494
    %1569 = vst.msk [vmem:[#allocation2 + $0x8c] sm:$0xf] %vm190, %v1485
    %1570 = vst.msk [vmem:[#allocation2 + $0xac] sm:$0xf] %vm190, %v1495
    %1571 = vst.msk [vmem:[#allocation2 + $0xcc] sm:$0xf] %vm190, %v1492
    %1572 = vst.msk [vmem:[#allocation2 + $0xec] sm:$0xf] %vm190, %v1496
    %1573 = vst.msk [vmem:[#allocation2 + $0x10c] sm:$0xf] %vm190, %v1537
    %1574 = vst.msk [vmem:[#allocation2 + $0x12c] sm:$0xf] %vm190, %v1561
    %1575 = vst.msk [vmem:[#allocation2 + $0x14c] sm:$0xf] %vm190, %v1544
    %1576 = vst.msk [vmem:[#allocation2 + $0x16c] sm:$0xf] %vm190, %v1562
    %1577 = vst.msk [vmem:[#allocation2 + $0x18c] sm:$0xf] %vm190, %v1553
    %1578 = vst.msk [vmem:[#allocation2 + $0x1ac] sm:$0xf] %vm190, %v1563
    %1579 = vst.msk [vmem:[#allocation2 + $0x1cc] sm:$0xf] %vm190, %v1560
    %1580 = vst.msk [vmem:[#allocation2 + $0x1ec] sm:$0xf] %vm190, %v1564
    %1581 = vmatprep.subr.mxu0 0.0
    %1582 = vmatpush1.msra.mxu0 %v1196
    %1583 = vmatprep.subr.mxu0 0.0
    %1584 = vmatpush1.msra.mxu0 %v1201
    %1585 = vmatprep.subr.mxu0 0.0
    %1586 = vmatpush1.msra.mxu0 0.0
    %1587 = vmatprep.subr.mxu0 0.0
    %1588 = vmatpush1.msra.mxu0 0.0
    %1589 = vmatprep.subr.mxu0 0.0
    %1590 = vmatpush1.msra.mxu0 0.0
    %1591 = vmatprep.subr.mxu0 0.0
    %1592 = vmatpush1.msra.mxu0 0.0
    %1593 = vmatprep.subr.mxu0 0.0
    %1594 = vmatpush1.msra.mxu0 0.0
    %1595 = vmatprep.subr.mxu0 0.0
    %1596 = vmatpush1.msra.mxu0 0.0
    %1597 = vmatprep.subr.mxu0 0.0
    %1598 = vmatpush1.msra.mxu0 0.0
    %1599 = vmatprep.subr.mxu0 0.0
    %1600 = vmatpush1.msra.mxu0 0.0
    %1601 = vmatprep.subr.mxu0 0.0
    %1602 = vmatpush1.msra.mxu0 0.0
    %1603 = vmatprep.subr.mxu0 0.0
    %1604 = vmatpush1.msra.mxu0 0.0
    %1605 = vmatprep.subr.mxu0 0.0
    %1606 = vmatpush1.msra.mxu0 0.0
    %1607 = vmatprep.subr.mxu0 0.0
    %1608 = vmatpush1.msra.mxu0 0.0
    %1609 = vmatprep.subr.mxu0 0.0
    %1610 = vmatpush1.msra.mxu0 0.0
    %1611 = vmatprep.subr.mxu0 0.0
    %1612 = vmatpush1.msra.mxu0 0.0
    %1613 = vmatprep.subr.mxu0 0.0
    %1614 = vmatpush1.msra.mxu0 0.0
    %1615 = vmatprep.subr.mxu0 0.0
    %1616 = vmatpush1.msra.mxu0 0.0
    %1617 = vmatprep.subr.mxu0 0.0
    %1618 = vmatpush1.msra.mxu0 0.0
    %1619 = vmatprep.subr.mxu0 0.0
    %1620 = vmatpush1.msra.mxu0 0.0
    %1621 = vmatprep.subr.mxu0 0.0
    %1622 = vmatpush1.msra.mxu0 0.0
    %1623 = vmatprep.subr.mxu0 0.0
    %1624 = vmatpush1.msra.mxu0 0.0
    %1625 = vmatprep.subr.mxu0 0.0
    %1626 = vmatpush1.msra.mxu0 0.0
    %1627 = vmatprep.subr.mxu0 0.0
    %1628 = vmatpush1.msra.mxu0 0.0
    %1629 = vmatprep.subr.mxu0 0.0
    %1630 = vmatpush1.msra.mxu0 0.0
    %1631 = vmatprep.subr.mxu0 0.0
    %1632 = vmatpush1.msra.mxu0 0.0
    %1633 = vmatprep.subr.mxu0 0.0
    %1634 = vmatpush1.msra.mxu0 0.0
    %1635 = vmatprep.subr.mxu0 0.0
    %1636 = vmatpush1.msra.mxu0 0.0
    %1637 = vmatprep.subr.mxu0 0.0
    %1638 = vmatpush1.msra.mxu0 0.0
    %1639 = vmatprep.subr.mxu0 0.0
    %1640 = vmatpush1.msra.mxu0 0.0
    %1641 = vmatprep.subr.mxu0 0.0
    %1642 = vmatpush1.msra.mxu0 0.0
    %1643 = vmatprep.subr.mxu0 0.0
    %1644 = vmatpush1.msra.mxu0 0.0
    %1645 = vmatprep.mubr.f32.mxu0 0.0
    %1646 = vmatmul.mubr.f32.gmra.mrb[0].mxu0 %v1124
    %v1647 = vpop.f32.mrb[0].mxu0
    %v1648 = vadd.f32 0.0, %v1647
    %v1649 = vpop.f32.mrb[0].mxu0
    %1650 = vmatprep.mubr.f32.mxu0 0.0
    %1651 = vmatmul.mubr.f32.gmra.mrb[0].mxu0 %v1127
    %v1652 = vpop.f32.mrb[0].mxu0
    %v1653 = vadd.f32 0.0, %v1652
    %v1654 = vpop.f32.mrb[0].mxu0
    %1655 = vdwg.mxu0
    %1656 = vmatprep.subr.mxu0 0.0
    %1657 = vmatpush1.msra.mxu0 %v1271
    %1658 = vmatprep.subr.mxu0 0.0
    %1659 = vmatpush1.msra.mxu0 %v1276
    %1660 = vmatprep.subr.mxu0 0.0
    %1661 = vmatpush1.msra.mxu0 0.0
    %1662 = vmatprep.subr.mxu0 0.0
    %1663 = vmatpush1.msra.mxu0 0.0
    %1664 = vmatprep.subr.mxu0 0.0
    %1665 = vmatpush1.msra.mxu0 0.0
    %1666 = vmatprep.subr.mxu0 0.0
    %1667 = vmatpush1.msra.mxu0 0.0
    %1668 = vmatprep.subr.mxu0 0.0
    %1669 = vmatpush1.msra.mxu0 0.0
    %1670 = vmatprep.subr.mxu0 0.0
    %1671 = vmatpush1.msra.mxu0 0.0
    %1672 = vmatprep.subr.mxu0 0.0
    %1673 = vmatpush1.msra.mxu0 0.0
    %1674 = vmatprep.subr.mxu0 0.0
    %1675 = vmatpush1.msra.mxu0 0.0
    %1676 = vmatprep.subr.mxu0 0.0
    %1677 = vmatpush1.msra.mxu0 0.0
    %1678 = vmatprep.subr.mxu0 0.0
    %1679 = vmatpush1.msra.mxu0 0.0
    %1680 = vmatprep.subr.mxu0 0.0
    %1681 = vmatpush1.msra.mxu0 0.0
    %1682 = vmatprep.subr.mxu0 0.0
    %1683 = vmatpush1.msra.mxu0 0.0
    %1684 = vmatprep.subr.mxu0 0.0
    %1685 = vmatpush1.msra.mxu0 0.0
    %1686 = vmatprep.subr.mxu0 0.0
    %1687 = vmatpush1.msra.mxu0 0.0
    %1688 = vmatprep.subr.mxu0 0.0
    %1689 = vmatpush1.msra.mxu0 0.0
    %1690 = vmatprep.subr.mxu0 0.0
    %1691 = vmatpush1.msra.mxu0 0.0
    %1692 = vmatprep.subr.mxu0 0.0
    %1693 = vmatpush1.msra.mxu0 0.0
    %1694 = vmatprep.subr.mxu0 0.0
    %1695 = vmatpush1.msra.mxu0 0.0
    %1696 = vmatprep.subr.mxu0 0.0
    %1697 = vmatpush1.msra.mxu0 0.0
    %1698 = vmatprep.subr.mxu0 0.0
    %1699 = vmatpush1.msra.mxu0 0.0
    %1700 = vmatprep.subr.mxu0 0.0
    %1701 = vmatpush1.msra.mxu0 0.0
    %1702 = vmatprep.subr.mxu0 0.0
    %1703 = vmatpush1.msra.mxu0 0.0
    %1704 = vmatprep.subr.mxu0 0.0
    %1705 = vmatpush1.msra.mxu0 0.0
    %1706 = vmatprep.subr.mxu0 0.0
    %1707 = vmatpush1.msra.mxu0 0.0
    %1708 = vmatprep.subr.mxu0 0.0
    %1709 = vmatpush1.msra.mxu0 0.0
    %1710 = vmatprep.subr.mxu0 0.0
    %1711 = vmatpush1.msra.mxu0 0.0
    %1712 = vmatprep.subr.mxu0 0.0
    %1713 = vmatpush1.msra.mxu0 0.0
    %1714 = vmatprep.subr.mxu0 0.0
    %1715 = vmatpush1.msra.mxu0 0.0
    %1716 = vmatprep.subr.mxu0 0.0
    %1717 = vmatpush1.msra.mxu0 0.0
    %1718 = vmatprep.subr.mxu0 0.0
    %1719 = vmatpush1.msra.mxu0 0.0
    %1720 = vmatprep.mubr.f32.mxu0 0.0
    %1721 = vmatmul.mubr.f32.gmra.mrb[0].mxu0 %v1124
    %v1722 = vpop.f32.mrb[0].mxu0
    %v1723 = vadd.f32 0.0, %v1722
    %v1724 = vpop.f32.mrb[0].mxu0
    %1725 = vmatprep.mubr.f32.mxu0 0.0
    %1726 = vmatmul.mubr.f32.gmra.mrb[0].mxu0 %v1127
    %v1727 = vpop.f32.mrb[0].mxu0
    %v1728 = vadd.f32 0.0, %v1727
    %v1729 = vpop.f32.mrb[0].mxu0
    %1730 = vdwg.mxu0
    %1731 = vmatprep.subr.mxu0 0.0
    %1732 = vmatpush1.msra.mxu0 %v1346
    %1733 = vmatprep.subr.mxu0 0.0
    %1734 = vmatpush1.msra.mxu0 %v1351
    %1735 = vmatprep.subr.mxu0 0.0
    %1736 = vmatpush1.msra.mxu0 0.0
    %1737 = vmatprep.subr.mxu0 0.0
    %1738 = vmatpush1.msra.mxu0 0.0
    %1739 = vmatprep.subr.mxu0 0.0
    %1740 = vmatpush1.msra.mxu0 0.0
    %1741 = vmatprep.subr.mxu0 0.0
    %1742 = vmatpush1.msra.mxu0 0.0
    %1743 = vmatprep.subr.mxu0 0.0
    %1744 = vmatpush1.msra.mxu0 0.0
    %1745 = vmatprep.subr.mxu0 0.0
    %1746 = vmatpush1.msra.mxu0 0.0
    %1747 = vmatprep.subr.mxu0 0.0
    %1748 = vmatpush1.msra.mxu0 0.0
    %1749 = vmatprep.subr.mxu0 0.0
    %1750 = vmatpush1.msra.mxu0 0.0
    %1751 = vmatprep.subr.mxu0 0.0
    %1752 = vmatpush1.msra.mxu0 0.0
    %1753 = vmatprep.subr.mxu0 0.0
    %1754 = vmatpush1.msra.mxu0 0.0
    %1755 = vmatprep.subr.mxu0 0.0
    %1756 = vmatpush1.msra.mxu0 0.0
    %1757 = vmatprep.subr.mxu0 0.0
    %1758 = vmatpush1.msra.mxu0 0.0
    %1759 = vmatprep.subr.mxu0 0.0
    %1760 = vmatpush1.msra.mxu0 0.0
    %1761 = vmatprep.subr.mxu0 0.0
    %1762 = vmatpush1.msra.mxu0 0.0
    %1763 = vmatprep.subr.mxu0 0.0
    %1764 = vmatpush1.msra.mxu0 0.0
    %1765 = vmatprep.subr.mxu0 0.0
    %1766 = vmatpush1.msra.mxu0 0.0
    %1767 = vmatprep.subr.mxu0 0.0
    %1768 = vmatpush1.msra.mxu0 0.0
    %1769 = vmatprep.subr.mxu0 0.0
    %1770 = vmatpush1.msra.mxu0 0.0
    %1771 = vmatprep.subr.mxu0 0.0
    %1772 = vmatpush1.msra.mxu0 0.0
    %1773 = vmatprep.subr.mxu0 0.0
    %1774 = vmatpush1.msra.mxu0 0.0
    %1775 = vmatprep.subr.mxu0 0.0
    %1776 = vmatpush1.msra.mxu0 0.0
    %1777 = vmatprep.subr.mxu0 0.0
    %1778 = vmatpush1.msra.mxu0 0.0
    %1779 = vmatprep.subr.mxu0 0.0
    %1780 = vmatpush1.msra.mxu0 0.0
    %1781 = vmatprep.subr.mxu0 0.0
    %1782 = vmatpush1.msra.mxu0 0.0
    %1783 = vmatprep.subr.mxu0 0.0
    %1784 = vmatpush1.msra.mxu0 0.0
    %1785 = vmatprep.subr.mxu0 0.0
    %1786 = vmatpush1.msra.mxu0 0.0
    %1787 = vmatprep.subr.mxu0 0.0
    %1788 = vmatpush1.msra.mxu0 0.0
    %1789 = vmatprep.subr.mxu0 0.0
    %1790 = vmatpush1.msra.mxu0 0.0
    %1791 = vmatprep.subr.mxu0 0.0
    %1792 = vmatpush1.msra.mxu0 0.0
    %1793 = vmatprep.subr.mxu0 0.0
    %1794 = vmatpush1.msra.mxu0 0.0
    %1795 = vmatprep.mubr.f32.mxu0 0.0
    %1796 = vmatmul.mubr.f32.gmra.mrb[0].mxu0 %v1124
    %v1797 = vpop.f32.mrb[0].mxu0
    %v1798 = vadd.f32 0.0, %v1797
    %v1799 = vpop.f32.mrb[0].mxu0
    %1800 = vmatprep.mubr.f32.mxu0 0.0
    %1801 = vmatmul.mubr.f32.gmra.mrb[0].mxu0 %v1127
    %v1802 = vpop.f32.mrb[0].mxu0
    %v1803 = vadd.f32 0.0, %v1802
    %v1804 = vpop.f32.mrb[0].mxu0
    %1805 = vdwg.mxu0
    %1806 = vmatprep.subr.mxu0 0.0
    %1807 = vmatpush1.msra.mxu0 %v1421
    %1808 = vmatprep.subr.mxu0 0.0
    %1809 = vmatpush1.msra.mxu0 %v1426
    %1810 = vmatprep.subr.mxu0 0.0
    %1811 = vmatpush1.msra.mxu0 0.0
    %1812 = vmatprep.subr.mxu0 0.0
    %1813 = vmatpush1.msra.mxu0 0.0
    %1814 = vmatprep.subr.mxu0 0.0
    %1815 = vmatpush1.msra.mxu0 0.0
    %1816 = vmatprep.subr.mxu0 0.0
    %1817 = vmatpush1.msra.mxu0 0.0
    %1818 = vmatprep.subr.mxu0 0.0
    %1819 = vmatpush1.msra.mxu0 0.0
    %1820 = vmatprep.subr.mxu0 0.0
    %1821 = vmatpush1.msra.mxu0 0.0
    %1822 = vmatprep.subr.mxu0 0.0
    %1823 = vmatpush1.msra.mxu0 0.0
    %1824 = vmatprep.subr.mxu0 0.0
    %1825 = vmatpush1.msra.mxu0 0.0
    %1826 = vmatprep.subr.mxu0 0.0
    %1827 = vmatpush1.msra.mxu0 0.0
    %1828 = vmatprep.subr.mxu0 0.0
    %1829 = vmatpush1.msra.mxu0 0.0
    %1830 = vmatprep.subr.mxu0 0.0
    %1831 = vmatpush1.msra.mxu0 0.0
    %1832 = vmatprep.subr.mxu0 0.0
    %1833 = vmatpush1.msra.mxu0 0.0
    %1834 = vmatprep.subr.mxu0 0.0
    %1835 = vmatpush1.msra.mxu0 0.0
    %1836 = vmatprep.subr.mxu0 0.0
    %1837 = vmatpush1.msra.mxu0 0.0
    %1838 = vmatprep.subr.mxu0 0.0
    %1839 = vmatpush1.msra.mxu0 0.0
    %1840 = vmatprep.subr.mxu0 0.0
    %1841 = vmatpush1.msra.mxu0 0.0
    %1842 = vmatprep.subr.mxu0 0.0
    %1843 = vmatpush1.msra.mxu0 0.0
    %1844 = vmatprep.subr.mxu0 0.0
    %1845 = vmatpush1.msra.mxu0 0.0
    %1846 = vmatprep.subr.mxu0 0.0
    %1847 = vmatpush1.msra.mxu0 0.0
    %1848 = vmatprep.subr.mxu0 0.0
    %1849 = vmatpush1.msra.mxu0 0.0
    %1850 = vmatprep.subr.mxu0 0.0
    %1851 = vmatpush1.msra.mxu0 0.0
    %1852 = vmatprep.subr.mxu0 0.0
    %1853 = vmatpush1.msra.mxu0 0.0
    %1854 = vmatprep.subr.mxu0 0.0
    %1855 = vmatpush1.msra.mxu0 0.0
    %1856 = vmatprep.subr.mxu0 0.0
    %1857 = vmatpush1.msra.mxu0 0.0
    %1858 = vmatprep.subr.mxu0 0.0
    %1859 = vmatpush1.msra.mxu0 0.0
    %1860 = vmatprep.subr.mxu0 0.0
    %1861 = vmatpush1.msra.mxu0 0.0
    %1862 = vmatprep.subr.mxu0 0.0
    %1863 = vmatpush1.msra.mxu0 0.0
    %1864 = vmatprep.subr.mxu0 0.0
    %1865 = vmatpush1.msra.mxu0 0.0
    %1866 = vmatprep.subr.mxu0 0.0
    %1867 = vmatpush1.msra.mxu0 0.0
    %1868 = vmatprep.subr.mxu0 0.0
    %1869 = vmatpush1.msra.mxu0 0.0
    %1870 = vmatprep.mubr.f32.mxu0 0.0
    %1871 = vmatmul.mubr.f32.gmra.mrb[0].mxu0 %v1124
    %v1872 = vpop.f32.mrb[0].mxu0
    %v1873 = vadd.f32 0.0, %v1872
    %v1874 = vpop.f32.mrb[0].mxu0
    %1875 = vmatprep.mubr.f32.mxu0 0.0
    %1876 = vmatmul.mubr.f32.gmra.mrb[0].mxu0 %v1127
    %v1877 = vpop.f32.mrb[0].mxu0
    %v1878 = vadd.f32 0.0, %v1877
    %v1879 = vpop.f32.mrb[0].mxu0
    %1880 = vdwg.mxu0
    %v1881 = vcombine.low %v1648, %v1798
    %v1882 = vcombine.high %v1648, %v1798
    %v1884 = vunpack.c.l.s4 1983009808
    %v1885 = vunpack.c.0.s8 %v1884
    %v1886 = vlaneseq
    %v1887 = vshrl.u32 %v1886, 7
    %v1888 = vsub.s32 %v1885, %v1887
    %v1889 = vrot.slane %v1881, %v1888
    %v1891 = vunpack.c.l.s4 1983009808
    %v1892 = vunpack.c.0.s8 %v1891
    %v1893 = vlaneseq
    %v1894 = vshrl.u32 %v1893, 7
    %v1895 = vsub.s32 %v1892, %v1894
    %v1896 = vrot.slane %v1882, %v1895
    %v1897 = vcombine.low %v1723, %v1873
    %v1898 = vcombine.high %v1723, %v1873
    %v1900 = vunpack.c.l.s4 1983009808
    %v1901 = vunpack.c.0.s8 %v1900
    %v1902 = vlaneseq
    %v1903 = vshrl.u32 %v1902, 7
    %v1904 = vsub.s32 %v1901, %v1903
    %v1905 = vrot.slane %v1897, %v1904
    %v1907 = vunpack.c.l.s4 1983009808
    %v1908 = vunpack.c.0.s8 %v1907
    %v1909 = vlaneseq
    %v1910 = vshrl.u32 %v1909, 7
    %v1911 = vsub.s32 %v1908, %v1910
    %v1912 = vrot.slane %v1898, %v1911
    %v1913 = vcombine.low %v1889, %v1905
    %v1914 = vcombine.high %v1889, %v1905
    %v1916 = vunpack.c.l.s4 1934713408
    %v1917 = vunpack.c.0.s8 %v1916
    %v1918 = vlaneseq
    %v1919 = vshrl.u32 %v1918, 7
    %v1920 = vsub.s32 %v1917, %v1919
    %v1921 = vrot.slane %v1913, %v1920
    %v1923 = vunpack.c.l.s4 1934713408
    %v1924 = vunpack.c.0.s8 %v1923
    %v1925 = vlaneseq
    %v1926 = vshrl.u32 %v1925, 7
    %v1927 = vsub.s32 %v1924, %v1926
    %v1928 = vrot.slane %v1914, %v1927
    %v1929 = vcombine.low %v1896, %v1912
    %v1930 = vcombine.high %v1896, %v1912
    %v1932 = vunpack.c.l.s4 1934713408
    %v1933 = vunpack.c.0.s8 %v1932
    %v1934 = vlaneseq
    %v1935 = vshrl.u32 %v1934, 7
    %v1936 = vsub.s32 %v1933, %v1935
    %v1937 = vrot.slane %v1929, %v1936
    %v1939 = vunpack.c.l.s4 1934713408
    %v1940 = vunpack.c.0.s8 %v1939
    %v1941 = vlaneseq
    %v1942 = vshrl.u32 %v1941, 7
    %v1943 = vsub.s32 %v1940, %v1942
    %v1944 = vrot.slane %v1930, %v1943
    %v1945 = vcombine.high %v1921, 0.0
    %v1946 = vcombine.high %v1928, 0.0
    %v1947 = vcombine.high %v1937, 0.0
    %v1948 = vcombine.high %v1944, 0.0
    %v1949 = vcombine.low %v1653, %v1803
    %v1950 = vcombine.high %v1653, %v1803
    %v1952 = vunpack.c.l.s4 1983009808
    %v1953 = vunpack.c.0.s8 %v1952
    %v1954 = vlaneseq
    %v1955 = vshrl.u32 %v1954, 7
    %v1956 = vsub.s32 %v1953, %v1955
    %v1957 = vrot.slane %v1949, %v1956
    %v1959 = vunpack.c.l.s4 1983009808
    %v1960 = vunpack.c.0.s8 %v1959
    %v1961 = vlaneseq
    %v1962 = vshrl.u32 %v1961, 7
    %v1963 = vsub.s32 %v1960, %v1962
    %v1964 = vrot.slane %v1950, %v1963
    %v1965 = vcombine.low %v1728, %v1878
    %v1966 = vcombine.high %v1728, %v1878
    %v1968 = vunpack.c.l.s4 1983009808
    %v1969 = vunpack.c.0.s8 %v1968
    %v1970 = vlaneseq
    %v1971 = vshrl.u32 %v1970, 7
    %v1972 = vsub.s32 %v1969, %v1971
    %v1973 = vrot.slane %v1965, %v1972
    %v1975 = vunpack.c.l.s4 1983009808
    %v1976 = vunpack.c.0.s8 %v1975
    %v1977 = vlaneseq
    %v1978 = vshrl.u32 %v1977, 7
    %v1979 = vsub.s32 %v1976, %v1978
    %v1980 = vrot.slane %v1966, %v1979
    %v1981 = vcombine.low %v1957, %v1973
    %v1982 = vcombine.high %v1957, %v1973
    %v1984 = vunpack.c.l.s4 1934713408
    %v1985 = vunpack.c.0.s8 %v1984
    %v1986 = vlaneseq
    %v1987 = vshrl.u32 %v1986, 7
    %v1988 = vsub.s32 %v1985, %v1987
    %v1989 = vrot.slane %v1981, %v1988
    %v1991 = vunpack.c.l.s4 1934713408
    %v1992 = vunpack.c.0.s8 %v1991
    %v1993 = vlaneseq
    %v1994 = vshrl.u32 %v1993, 7
    %v1995 = vsub.s32 %v1992, %v1994
    %v1996 = vrot.slane %v1982, %v1995
    %v1997 = vcombine.low %v1964, %v1980
    %v1998 = vcombine.high %v1964, %v1980
    %v2000 = vunpack.c.l.s4 1934713408
    %v2001 = vunpack.c.0.s8 %v2000
    %v2002 = vlaneseq
    %v2003 = vshrl.u32 %v2002, 7
    %v2004 = vsub.s32 %v2001, %v2003
    %v2005 = vrot.slane %v1997, %v2004
    %v2007 = vunpack.c.l.s4 1934713408
    %v2008 = vunpack.c.0.s8 %v2007
    %v2009 = vlaneseq
    %v2010 = vshrl.u32 %v2009, 7
    %v2011 = vsub.s32 %v2008, %v2010
    %v2012 = vrot.slane %v1998, %v2011
    %v2013 = vcombine.high %v1989, 0.0
    %v2014 = vcombine.high %v1996, 0.0
    %v2015 = vcombine.high %v2005, 0.0
    %v2016 = vcombine.high %v2012, 0.0
    %2017 = vst.msk [vmem:[#allocation2 + $0x10] sm:$0xf] %vm190, %v1921
    %2018 = vst.msk [vmem:[#allocation2 + $0x30] sm:$0xf] %vm190, %v1945
    %2019 = vst.msk [vmem:[#allocation2 + $0x50] sm:$0xf] %vm190, %v1928
    %2020 = vst.msk [vmem:[#allocation2 + $0x70] sm:$0xf] %vm190, %v1946
    %2021 = vst.msk [vmem:[#allocation2 + $0x90] sm:$0xf] %vm190, %v1937
    %2022 = vst.msk [vmem:[#allocation2 + $0xb0] sm:$0xf] %vm190, %v1947
    %2023 = vst.msk [vmem:[#allocation2 + $0xd0] sm:$0xf] %vm190, %v1944
    %2024 = vst.msk [vmem:[#allocation2 + $0xf0] sm:$0xf] %vm190, %v1948
    %2025 = vst.msk [vmem:[#allocation2 + $0x110] sm:$0xf] %vm190, %v1989
    %2026 = vst.msk [vmem:[#allocation2 + $0x130] sm:$0xf] %vm190, %v2013
    %2027 = vst.msk [vmem:[#allocation2 + $0x150] sm:$0xf] %vm190, %v1996
    %2028 = vst.msk [vmem:[#allocation2 + $0x170] sm:$0xf] %vm190, %v2014
    %2029 = vst.msk [vmem:[#allocation2 + $0x190] sm:$0xf] %vm190, %v2005
    %2030 = vst.msk [vmem:[#allocation2 + $0x1b0] sm:$0xf] %vm190, %v2015
    %2031 = vst.msk [vmem:[#allocation2 + $0x1d0] sm:$0xf] %vm190, %v2012
    %2032 = vst.msk [vmem:[#allocation2 + $0x1f0] sm:$0xf] %vm190, %v2016
    %s2033 = scalar_lea.vmem [#allocation6], 32
    %v2034 = vld [vmem:[%s2033] sm:$0xff]
    %v2035 = vld [vmem:[%s2033 + $0x8] sm:$0xff]
    %v2037 = vsel %vm209, %v2034, 0
    %v2040 = vsel %vm209, %v2035, 0
    %2042 = vmatprep.subr.mxu0 0.0
    %2043 = vmatpush1.msra.mxu0 %v46
    %2044 = vmatprep.subr.mxu0 0.0
    %2045 = vmatpush1.msra.mxu0 %v47
    %2046 = vmatprep.subr.mxu0 0.0
    %2047 = vmatpush1.msra.mxu0 0.0
    %2048 = vmatprep.subr.mxu0 0.0
    %2049 = vmatpush1.msra.mxu0 0.0
    %2050 = vmatprep.subr.mxu0 0.0
    %2051 = vmatpush1.msra.mxu0 0.0
    %2052 = vmatprep.subr.mxu0 0.0
    %2053 = vmatpush1.msra.mxu0 0.0
    %2054 = vmatprep.subr.mxu0 0.0
    %2055 = vmatpush1.msra.mxu0 0.0
    %2056 = vmatprep.subr.mxu0 0.0
    %2057 = vmatpush1.msra.mxu0 0.0
    %2058 = vmatprep.subr.mxu0 0.0
    %2059 = vmatpush1.msra.mxu0 0.0
    %2060 = vmatprep.subr.mxu0 0.0
    %2061 = vmatpush1.msra.mxu0 0.0
    %2062 = vmatprep.subr.mxu0 0.0
    %2063 = vmatpush1.msra.mxu0 0.0
    %2064 = vmatprep.subr.mxu0 0.0
    %2065 = vmatpush1.msra.mxu0 0.0
    %2066 = vmatprep.subr.mxu0 0.0
    %2067 = vmatpush1.msra.mxu0 0.0
    %2068 = vmatprep.subr.mxu0 0.0
    %2069 = vmatpush1.msra.mxu0 0.0
    %2070 = vmatprep.subr.mxu0 0.0
    %2071 = vmatpush1.msra.mxu0 0.0
    %2072 = vmatprep.subr.mxu0 0.0
    %2073 = vmatpush1.msra.mxu0 0.0
    %2074 = vmatprep.subr.mxu0 0.0
    %2075 = vmatpush1.msra.mxu0 0.0
    %2076 = vmatprep.subr.mxu0 0.0
    %2077 = vmatpush1.msra.mxu0 0.0
    %2078 = vmatprep.subr.mxu0 0.0
    %2079 = vmatpush1.msra.mxu0 0.0
    %2080 = vmatprep.subr.mxu0 0.0
    %2081 = vmatpush1.msra.mxu0 0.0
    %2082 = vmatprep.subr.mxu0 0.0
    %2083 = vmatpush1.msra.mxu0 0.0
    %2084 = vmatprep.subr.mxu0 0.0
    %2085 = vmatpush1.msra.mxu0 0.0
    %2086 = vmatprep.subr.mxu0 0.0
    %2087 = vmatpush1.msra.mxu0 0.0
    %2088 = vmatprep.subr.mxu0 0.0
    %2089 = vmatpush1.msra.mxu0 0.0
    %2090 = vmatprep.subr.mxu0 0.0
    %2091 = vmatpush1.msra.mxu0 0.0
    %2092 = vmatprep.subr.mxu0 0.0
    %2093 = vmatpush1.msra.mxu0 0.0
    %2094 = vmatprep.subr.mxu0 0.0
    %2095 = vmatpush1.msra.mxu0 0.0
    %2096 = vmatprep.subr.mxu0 0.0
    %2097 = vmatpush1.msra.mxu0 0.0
    %2098 = vmatprep.subr.mxu0 0.0
    %2099 = vmatpush1.msra.mxu0 0.0
    %2100 = vmatprep.subr.mxu0 0.0
    %2101 = vmatpush1.msra.mxu0 0.0
    %2102 = vmatprep.subr.mxu0 0.0
    %2103 = vmatpush1.msra.mxu0 0.0
    %2104 = vmatprep.subr.mxu0 0.0
    %2105 = vmatpush1.msra.mxu0 0.0
    %2106 = vmatprep.mubr.f32.mxu0 0.0
    %2107 = vmatmul.mubr.f32.gmra.mrb[0].mxu0 %v2037
    %v2108 = vpop.f32.mrb[0].mxu0
    %v2109 = vadd.f32 0.0, %v2108
    %v2110 = vpop.f32.mrb[0].mxu0
    %2111 = vmatprep.mubr.f32.mxu0 0.0
    %2112 = vmatmul.mubr.f32.gmra.mrb[0].mxu0 %v2040
    %v2113 = vpop.f32.mrb[0].mxu0
    %v2114 = vadd.f32 0.0, %v2113
    %v2115 = vpop.f32.mrb[0].mxu0
    %2116 = vdwg.mxu0
    %2117 = vmatprep.subr.mxu0 0.0
    %2118 = vmatpush1.msra.mxu0 %v48
    %2119 = vmatprep.subr.mxu0 0.0
    %2120 = vmatpush1.msra.mxu0 %v49
    %2121 = vmatprep.subr.mxu0 0.0
    %2122 = vmatpush1.msra.mxu0 0.0
    %2123 = vmatprep.subr.mxu0 0.0
    %2124 = vmatpush1.msra.mxu0 0.0
    %2125 = vmatprep.subr.mxu0 0.0
    %2126 = vmatpush1.msra.mxu0 0.0
    %2127 = vmatprep.subr.mxu0 0.0
    %2128 = vmatpush1.msra.mxu0 0.0
    %2129 = vmatprep.subr.mxu0 0.0
    %2130 = vmatpush1.msra.mxu0 0.0
    %2131 = vmatprep.subr.mxu0 0.0
    %2132 = vmatpush1.msra.mxu0 0.0
    %2133 = vmatprep.subr.mxu0 0.0
    %2134 = vmatpush1.msra.mxu0 0.0
    %2135 = vmatprep.subr.mxu0 0.0
    %2136 = vmatpush1.msra.mxu0 0.0
    %2137 = vmatprep.subr.mxu0 0.0
    %2138 = vmatpush1.msra.mxu0 0.0
    %2139 = vmatprep.subr.mxu0 0.0
    %2140 = vmatpush1.msra.mxu0 0.0
    %2141 = vmatprep.subr.mxu0 0.0
    %2142 = vmatpush1.msra.mxu0 0.0
    %2143 = vmatprep.subr.mxu0 0.0
    %2144 = vmatpush1.msra.mxu0 0.0
    %2145 = vmatprep.subr.mxu0 0.0
    %2146 = vmatpush1.msra.mxu0 0.0
    %2147 = vmatprep.subr.mxu0 0.0
    %2148 = vmatpush1.msra.mxu0 0.0
    %2149 = vmatprep.subr.mxu0 0.0
    %2150 = vmatpush1.msra.mxu0 0.0
    %2151 = vmatprep.subr.mxu0 0.0
    %2152 = vmatpush1.msra.mxu0 0.0
    %2153 = vmatprep.subr.mxu0 0.0
    %2154 = vmatpush1.msra.mxu0 0.0
    %2155 = vmatprep.subr.mxu0 0.0
    %2156 = vmatpush1.msra.mxu0 0.0
    %2157 = vmatprep.subr.mxu0 0.0
    %2158 = vmatpush1.msra.mxu0 0.0
    %2159 = vmatprep.subr.mxu0 0.0
    %2160 = vmatpush1.msra.mxu0 0.0
    %2161 = vmatprep.subr.mxu0 0.0
    %2162 = vmatpush1.msra.mxu0 0.0
    %2163 = vmatprep.subr.mxu0 0.0
    %2164 = vmatpush1.msra.mxu0 0.0
    %2165 = vmatprep.subr.mxu0 0.0
    %2166 = vmatpush1.msra.mxu0 0.0
    %2167 = vmatprep.subr.mxu0 0.0
    %2168 = vmatpush1.msra.mxu0 0.0
    %2169 = vmatprep.subr.mxu0 0.0
    %2170 = vmatpush1.msra.mxu0 0.0
    %2171 = vmatprep.subr.mxu0 0.0
    %2172 = vmatpush1.msra.mxu0 0.0
    %2173 = vmatprep.subr.mxu0 0.0
    %2174 = vmatpush1.msra.mxu0 0.0
    %2175 = vmatprep.subr.mxu0 0.0
    %2176 = vmatpush1.msra.mxu0 0.0
    %2177 = vmatprep.subr.mxu0 0.0
    %2178 = vmatpush1.msra.mxu0 0.0
    %2179 = vmatprep.subr.mxu0 0.0
    %2180 = vmatpush1.msra.mxu0 0.0
    %2181 = vmatprep.mubr.f32.mxu0 0.0
    %2182 = vmatmul.mubr.f32.gmra.mrb[0].mxu0 %v2037
    %v2183 = vpop.f32.mrb[0].mxu0
    %v2184 = vadd.f32 0.0, %v2183
    %v2185 = vpop.f32.mrb[0].mxu0
    %2186 = vmatprep.mubr.f32.mxu0 0.0
    %2187 = vmatmul.mubr.f32.gmra.mrb[0].mxu0 %v2040
    %v2188 = vpop.f32.mrb[0].mxu0
    %v2189 = vadd.f32 0.0, %v2188
    %v2190 = vpop.f32.mrb[0].mxu0
    %2191 = vdwg.mxu0
    %2192 = vmatprep.subr.mxu0 0.0
    %2193 = vmatpush1.msra.mxu0 %v50
    %2194 = vmatprep.subr.mxu0 0.0
    %2195 = vmatpush1.msra.mxu0 %v51
    %2196 = vmatprep.subr.mxu0 0.0
    %2197 = vmatpush1.msra.mxu0 0.0
    %2198 = vmatprep.subr.mxu0 0.0
    %2199 = vmatpush1.msra.mxu0 0.0
    %2200 = vmatprep.subr.mxu0 0.0
    %2201 = vmatpush1.msra.mxu0 0.0
    %2202 = vmatprep.subr.mxu0 0.0
    %2203 = vmatpush1.msra.mxu0 0.0
    %2204 = vmatprep.subr.mxu0 0.0
    %2205 = vmatpush1.msra.mxu0 0.0
    %2206 = vmatprep.subr.mxu0 0.0
    %2207 = vmatpush1.msra.mxu0 0.0
    %2208 = vmatprep.subr.mxu0 0.0
    %2209 = vmatpush1.msra.mxu0 0.0
    %2210 = vmatprep.subr.mxu0 0.0
    %2211 = vmatpush1.msra.mxu0 0.0
    %2212 = vmatprep.subr.mxu0 0.0
    %2213 = vmatpush1.msra.mxu0 0.0
    %2214 = vmatprep.subr.mxu0 0.0
    %2215 = vmatpush1.msra.mxu0 0.0
    %2216 = vmatprep.subr.mxu0 0.0
    %2217 = vmatpush1.msra.mxu0 0.0
    %2218 = vmatprep.subr.mxu0 0.0
    %2219 = vmatpush1.msra.mxu0 0.0
    %2220 = vmatprep.subr.mxu0 0.0
    %2221 = vmatpush1.msra.mxu0 0.0
    %2222 = vmatprep.subr.mxu0 0.0
    %2223 = vmatpush1.msra.mxu0 0.0
    %2224 = vmatprep.subr.mxu0 0.0
    %2225 = vmatpush1.msra.mxu0 0.0
    %2226 = vmatprep.subr.mxu0 0.0
    %2227 = vmatpush1.msra.mxu0 0.0
    %2228 = vmatprep.subr.mxu0 0.0
    %2229 = vmatpush1.msra.mxu0 0.0
    %2230 = vmatprep.subr.mxu0 0.0
    %2231 = vmatpush1.msra.mxu0 0.0
    %2232 = vmatprep.subr.mxu0 0.0
    %2233 = vmatpush1.msra.mxu0 0.0
    %2234 = vmatprep.subr.mxu0 0.0
    %2235 = vmatpush1.msra.mxu0 0.0
    %2236 = vmatprep.subr.mxu0 0.0
    %2237 = vmatpush1.msra.mxu0 0.0
    %2238 = vmatprep.subr.mxu0 0.0
    %2239 = vmatpush1.msra.mxu0 0.0
    %2240 = vmatprep.subr.mxu0 0.0
    %2241 = vmatpush1.msra.mxu0 0.0
    %2242 = vmatprep.subr.mxu0 0.0
    %2243 = vmatpush1.msra.mxu0 0.0
    %2244 = vmatprep.subr.mxu0 0.0
    %2245 = vmatpush1.msra.mxu0 0.0
    %2246 = vmatprep.subr.mxu0 0.0
    %2247 = vmatpush1.msra.mxu0 0.0
    %2248 = vmatprep.subr.mxu0 0.0
    %2249 = vmatpush1.msra.mxu0 0.0
    %2250 = vmatprep.subr.mxu0 0.0
    %2251 = vmatpush1.msra.mxu0 0.0
    %2252 = vmatprep.subr.mxu0 0.0
    %2253 = vmatpush1.msra.mxu0 0.0
    %2254 = vmatprep.subr.mxu0 0.0
    %2255 = vmatpush1.msra.mxu0 0.0
    %2256 = vmatprep.mubr.f32.mxu0 0.0
    %2257 = vmatmul.mubr.f32.gmra.mrb[0].mxu0 %v2037
    %v2258 = vpop.f32.mrb[0].mxu0
    %v2259 = vadd.f32 0.0, %v2258
    %v2260 = vpop.f32.mrb[0].mxu0
    %2261 = vmatprep.mubr.f32.mxu0 0.0
    %2262 = vmatmul.mubr.f32.gmra.mrb[0].mxu0 %v2040
    %v2263 = vpop.f32.mrb[0].mxu0
    %v2264 = vadd.f32 0.0, %v2263
    %v2265 = vpop.f32.mrb[0].mxu0
    %2266 = vdwg.mxu0
    %2267 = vmatprep.subr.mxu0 0.0
    %2268 = vmatpush1.msra.mxu0 %v52
    %2269 = vmatprep.subr.mxu0 0.0
    %2270 = vmatpush1.msra.mxu0 %v53
    %2271 = vmatprep.subr.mxu0 0.0
    %2272 = vmatpush1.msra.mxu0 0.0
    %2273 = vmatprep.subr.mxu0 0.0
    %2274 = vmatpush1.msra.mxu0 0.0
    %2275 = vmatprep.subr.mxu0 0.0
    %2276 = vmatpush1.msra.mxu0 0.0
    %2277 = vmatprep.subr.mxu0 0.0
    %2278 = vmatpush1.msra.mxu0 0.0
    %2279 = vmatprep.subr.mxu0 0.0
    %2280 = vmatpush1.msra.mxu0 0.0
    %2281 = vmatprep.subr.mxu0 0.0
    %2282 = vmatpush1.msra.mxu0 0.0
    %2283 = vmatprep.subr.mxu0 0.0
    %2284 = vmatpush1.msra.mxu0 0.0
    %2285 = vmatprep.subr.mxu0 0.0
    %2286 = vmatpush1.msra.mxu0 0.0
    %2287 = vmatprep.subr.mxu0 0.0
    %2288 = vmatpush1.msra.mxu0 0.0
    %2289 = vmatprep.subr.mxu0 0.0
    %2290 = vmatpush1.msra.mxu0 0.0
    %2291 = vmatprep.subr.mxu0 0.0
    %2292 = vmatpush1.msra.mxu0 0.0
    %2293 = vmatprep.subr.mxu0 0.0
    %2294 = vmatpush1.msra.mxu0 0.0
    %2295 = vmatprep.subr.mxu0 0.0
    %2296 = vmatpush1.msra.mxu0 0.0
    %2297 = vmatprep.subr.mxu0 0.0
    %2298 = vmatpush1.msra.mxu0 0.0
    %2299 = vmatprep.subr.mxu0 0.0
    %2300 = vmatpush1.msra.mxu0 0.0
    %2301 = vmatprep.subr.mxu0 0.0
    %2302 = vmatpush1.msra.mxu0 0.0
    %2303 = vmatprep.subr.mxu0 0.0
    %2304 = vmatpush1.msra.mxu0 0.0
    %2305 = vmatprep.subr.mxu0 0.0
    %2306 = vmatpush1.msra.mxu0 0.0
    %2307 = vmatprep.subr.mxu0 0.0
    %2308 = vmatpush1.msra.mxu0 0.0
    %2309 = vmatprep.subr.mxu0 0.0
    %2310 = vmatpush1.msra.mxu0 0.0
    %2311 = vmatprep.subr.mxu0 0.0
    %2312 = vmatpush1.msra.mxu0 0.0
    %2313 = vmatprep.subr.mxu0 0.0
    %2314 = vmatpush1.msra.mxu0 0.0
    %2315 = vmatprep.subr.mxu0 0.0
    %2316 = vmatpush1.msra.mxu0 0.0
    %2317 = vmatprep.subr.mxu0 0.0
    %2318 = vmatpush1.msra.mxu0 0.0
    %2319 = vmatprep.subr.mxu0 0.0
    %2320 = vmatpush1.msra.mxu0 0.0
    %2321 = vmatprep.subr.mxu0 0.0
    %2322 = vmatpush1.msra.mxu0 0.0
    %2323 = vmatprep.subr.mxu0 0.0
    %2324 = vmatpush1.msra.mxu0 0.0
    %2325 = vmatprep.subr.mxu0 0.0
    %2326 = vmatpush1.msra.mxu0 0.0
    %2327 = vmatprep.subr.mxu0 0.0
    %2328 = vmatpush1.msra.mxu0 0.0
    %2329 = vmatprep.subr.mxu0 0.0
    %2330 = vmatpush1.msra.mxu0 0.0
    %2331 = vmatprep.mubr.f32.mxu0 0.0
    %2332 = vmatmul.mubr.f32.gmra.mrb[0].mxu0 %v2037
    %v2333 = vpop.f32.mrb[0].mxu0
    %v2334 = vadd.f32 0.0, %v2333
    %v2335 = vpop.f32.mrb[0].mxu0
    %2336 = vmatprep.mubr.f32.mxu0 0.0
    %2337 = vmatmul.mubr.f32.gmra.mrb[0].mxu0 %v2040
    %v2338 = vpop.f32.mrb[0].mxu0
    %v2339 = vadd.f32 0.0, %v2338
    %v2340 = vpop.f32.mrb[0].mxu0
    %2341 = vdwg.mxu0
    %v2342 = vcombine.low %v2109, %v2259
    %v2343 = vcombine.high %v2109, %v2259
    %v2345 = vunpack.c.l.s4 1983009808
    %v2346 = vunpack.c.0.s8 %v2345
    %v2347 = vlaneseq
    %v2348 = vshrl.u32 %v2347, 7
    %v2349 = vsub.s32 %v2346, %v2348
    %v2350 = vrot.slane %v2342, %v2349
    %v2352 = vunpack.c.l.s4 1983009808
    %v2353 = vunpack.c.0.s8 %v2352
    %v2354 = vlaneseq
    %v2355 = vshrl.u32 %v2354, 7
    %v2356 = vsub.s32 %v2353, %v2355
    %v2357 = vrot.slane %v2343, %v2356
    %v2358 = vcombine.low %v2184, %v2334
    %v2359 = vcombine.high %v2184, %v2334
    %v2361 = vunpack.c.l.s4 1983009808
    %v2362 = vunpack.c.0.s8 %v2361
    %v2363 = vlaneseq
    %v2364 = vshrl.u32 %v2363, 7
    %v2365 = vsub.s32 %v2362, %v2364
    %v2366 = vrot.slane %v2358, %v2365
    %v2368 = vunpack.c.l.s4 1983009808
    %v2369 = vunpack.c.0.s8 %v2368
    %v2370 = vlaneseq
    %v2371 = vshrl.u32 %v2370, 7
    %v2372 = vsub.s32 %v2369, %v2371
    %v2373 = vrot.slane %v2359, %v2372
    %v2374 = vcombine.low %v2350, %v2366
    %v2375 = vcombine.high %v2350, %v2366
    %v2377 = vunpack.c.l.s4 1934713408
    %v2378 = vunpack.c.0.s8 %v2377
    %v2379 = vlaneseq
    %v2380 = vshrl.u32 %v2379, 7
    %v2381 = vsub.s32 %v2378, %v2380
    %v2382 = vrot.slane %v2374, %v2381
    %v2384 = vunpack.c.l.s4 1934713408
    %v2385 = vunpack.c.0.s8 %v2384
    %v2386 = vlaneseq
    %v2387 = vshrl.u32 %v2386, 7
    %v2388 = vsub.s32 %v2385, %v2387
    %v2389 = vrot.slane %v2375, %v2388
    %v2390 = vcombine.low %v2357, %v2373
    %v2391 = vcombine.high %v2357, %v2373
    %v2393 = vunpack.c.l.s4 1934713408
    %v2394 = vunpack.c.0.s8 %v2393
    %v2395 = vlaneseq
    %v2396 = vshrl.u32 %v2395, 7
    %v2397 = vsub.s32 %v2394, %v2396
    %v2398 = vrot.slane %v2390, %v2397
    %v2400 = vunpack.c.l.s4 1934713408
    %v2401 = vunpack.c.0.s8 %v2400
    %v2402 = vlaneseq
    %v2403 = vshrl.u32 %v2402, 7
    %v2404 = vsub.s32 %v2401, %v2403
    %v2405 = vrot.slane %v2391, %v2404
    %v2406 = vcombine.high %v2382, 0.0
    %v2407 = vcombine.high %v2389, 0.0
    %v2408 = vcombine.high %v2398, 0.0
    %v2409 = vcombine.high %v2405, 0.0
    %v2410 = vcombine.low %v2114, %v2264
    %v2411 = vcombine.high %v2114, %v2264
    %v2413 = vunpack.c.l.s4 1983009808
    %v2414 = vunpack.c.0.s8 %v2413
    %v2415 = vlaneseq
    %v2416 = vshrl.u32 %v2415, 7
    %v2417 = vsub.s32 %v2414, %v2416
    %v2418 = vrot.slane %v2410, %v2417
    %v2420 = vunpack.c.l.s4 1983009808
    %v2421 = vunpack.c.0.s8 %v2420
    %v2422 = vlaneseq
    %v2423 = vshrl.u32 %v2422, 7
    %v2424 = vsub.s32 %v2421, %v2423
    %v2425 = vrot.slane %v2411, %v2424
    %v2426 = vcombine.low %v2189, %v2339
    %v2427 = vcombine.high %v2189, %v2339
    %v2429 = vunpack.c.l.s4 1983009808
    %v2430 = vunpack.c.0.s8 %v2429
    %v2431 = vlaneseq
    %v2432 = vshrl.u32 %v2431, 7
    %v2433 = vsub.s32 %v2430, %v2432
    %v2434 = vrot.slane %v2426, %v2433
    %v2436 = vunpack.c.l.s4 1983009808
    %v2437 = vunpack.c.0.s8 %v2436
    %v2438 = vlaneseq
    %v2439 = vshrl.u32 %v2438, 7
    %v2440 = vsub.s32 %v2437, %v2439
    %v2441 = vrot.slane %v2427, %v2440
    %v2442 = vcombine.low %v2418, %v2434
    %v2443 = vcombine.high %v2418, %v2434
    %v2445 = vunpack.c.l.s4 1934713408
    %v2446 = vunpack.c.0.s8 %v2445
    %v2447 = vlaneseq
    %v2448 = vshrl.u32 %v2447, 7
    %v2449 = vsub.s32 %v2446, %v2448
    %v2450 = vrot.slane %v2442, %v2449
    %v2452 = vunpack.c.l.s4 1934713408
    %v2453 = vunpack.c.0.s8 %v2452
    %v2454 = vlaneseq
    %v2455 = vshrl.u32 %v2454, 7
    %v2456 = vsub.s32 %v2453, %v2455
    %v2457 = vrot.slane %v2443, %v2456
    %v2458 = vcombine.low %v2425, %v2441
    %v2459 = vcombine.high %v2425, %v2441
    %v2461 = vunpack.c.l.s4 1934713408
    %v2462 = vunpack.c.0.s8 %v2461
    %v2463 = vlaneseq
    %v2464 = vshrl.u32 %v2463, 7
    %v2465 = vsub.s32 %v2462, %v2464
    %v2466 = vrot.slane %v2458, %v2465
    %v2468 = vunpack.c.l.s4 1934713408
    %v2469 = vunpack.c.0.s8 %v2468
    %v2470 = vlaneseq
    %v2471 = vshrl.u32 %v2470, 7
    %v2472 = vsub.s32 %v2469, %v2471
    %v2473 = vrot.slane %v2459, %v2472
    %v2474 = vcombine.high %v2450, 0.0
    %v2475 = vcombine.high %v2457, 0.0
    %v2476 = vcombine.high %v2466, 0.0
    %v2477 = vcombine.high %v2473, 0.0
    %2478 = vst.msk [vmem:[#allocation2 + $0x14] sm:$0xf] %vm190, %v2382
    %2479 = vst.msk [vmem:[#allocation2 + $0x34] sm:$0xf] %vm190, %v2406
    %2480 = vst.msk [vmem:[#allocation2 + $0x54] sm:$0xf] %vm190, %v2389
    %2481 = vst.msk [vmem:[#allocation2 + $0x74] sm:$0xf] %vm190, %v2407
    %2482 = vst.msk [vmem:[#allocation2 + $0x94] sm:$0xf] %vm190, %v2398
    %2483 = vst.msk [vmem:[#allocation2 + $0xb4] sm:$0xf] %vm190, %v2408
    %2484 = vst.msk [vmem:[#allocation2 + $0xd4] sm:$0xf] %vm190, %v2405
    %2485 = vst.msk [vmem:[#allocation2 + $0xf4] sm:$0xf] %vm190, %v2409
    %2486 = vst.msk [vmem:[#allocation2 + $0x114] sm:$0xf] %vm190, %v2450
    %2487 = vst.msk [vmem:[#allocation2 + $0x134] sm:$0xf] %vm190, %v2474
    %2488 = vst.msk [vmem:[#allocation2 + $0x154] sm:$0xf] %vm190, %v2457
    %2489 = vst.msk [vmem:[#allocation2 + $0x174] sm:$0xf] %vm190, %v2475
    %2490 = vst.msk [vmem:[#allocation2 + $0x194] sm:$0xf] %vm190, %v2466
    %2491 = vst.msk [vmem:[#allocation2 + $0x1b4] sm:$0xf] %vm190, %v2476
    %2492 = vst.msk [vmem:[#allocation2 + $0x1d4] sm:$0xf] %vm190, %v2473
    %2493 = vst.msk [vmem:[#allocation2 + $0x1f4] sm:$0xf] %vm190, %v2477
    %2494 = vmatprep.subr.mxu0 0.0
    %2495 = vmatpush1.msra.mxu0 %v2109
    %2496 = vmatprep.subr.mxu0 0.0
    %2497 = vmatpush1.msra.mxu0 %v2114
    %2498 = vmatprep.subr.mxu0 0.0
    %2499 = vmatpush1.msra.mxu0 0.0
    %2500 = vmatprep.subr.mxu0 0.0
    %2501 = vmatpush1.msra.mxu0 0.0
    %2502 = vmatprep.subr.mxu0 0.0
    %2503 = vmatpush1.msra.mxu0 0.0
    %2504 = vmatprep.subr.mxu0 0.0
    %2505 = vmatpush1.msra.mxu0 0.0
    %2506 = vmatprep.subr.mxu0 0.0
    %2507 = vmatpush1.msra.mxu0 0.0
    %2508 = vmatprep.subr.mxu0 0.0
    %2509 = vmatpush1.msra.mxu0 0.0
    %2510 = vmatprep.subr.mxu0 0.0
    %2511 = vmatpush1.msra.mxu0 0.0
    %2512 = vmatprep.subr.mxu0 0.0
    %2513 = vmatpush1.msra.mxu0 0.0
    %2514 = vmatprep.subr.mxu0 0.0
    %2515 = vmatpush1.msra.mxu0 0.0
    %2516 = vmatprep.subr.mxu0 0.0
    %2517 = vmatpush1.msra.mxu0 0.0
    %2518 = vmatprep.subr.mxu0 0.0
    %2519 = vmatpush1.msra.mxu0 0.0
    %2520 = vmatprep.subr.mxu0 0.0
    %2521 = vmatpush1.msra.mxu0 0.0
    %2522 = vmatprep.subr.mxu0 0.0
    %2523 = vmatpush1.msra.mxu0 0.0
    %2524 = vmatprep.subr.mxu0 0.0
    %2525 = vmatpush1.msra.mxu0 0.0
    %2526 = vmatprep.subr.mxu0 0.0
    %2527 = vmatpush1.msra.mxu0 0.0
    %2528 = vmatprep.subr.mxu0 0.0
    %2529 = vmatpush1.msra.mxu0 0.0
    %2530 = vmatprep.subr.mxu0 0.0
    %2531 = vmatpush1.msra.mxu0 0.0
    %2532 = vmatprep.subr.mxu0 0.0
    %2533 = vmatpush1.msra.mxu0 0.0
    %2534 = vmatprep.subr.mxu0 0.0
    %2535 = vmatpush1.msra.mxu0 0.0
    %2536 = vmatprep.subr.mxu0 0.0
    %2537 = vmatpush1.msra.mxu0 0.0
    %2538 = vmatprep.subr.mxu0 0.0
    %2539 = vmatpush1.msra.mxu0 0.0
    %2540 = vmatprep.subr.mxu0 0.0
    %2541 = vmatpush1.msra.mxu0 0.0
    %2542 = vmatprep.subr.mxu0 0.0
    %2543 = vmatpush1.msra.mxu0 0.0
    %2544 = vmatprep.subr.mxu0 0.0
    %2545 = vmatpush1.msra.mxu0 0.0
    %2546 = vmatprep.subr.mxu0 0.0
    %2547 = vmatpush1.msra.mxu0 0.0
    %2548 = vmatprep.subr.mxu0 0.0
    %2549 = vmatpush1.msra.mxu0 0.0
    %2550 = vmatprep.subr.mxu0 0.0
    %2551 = vmatpush1.msra.mxu0 0.0
    %2552 = vmatprep.subr.mxu0 0.0
    %2553 = vmatpush1.msra.mxu0 0.0
    %2554 = vmatprep.subr.mxu0 0.0
    %2555 = vmatpush1.msra.mxu0 0.0
    %2556 = vmatprep.subr.mxu0 0.0
    %2557 = vmatpush1.msra.mxu0 0.0
    %2558 = vmatprep.mubr.f32.mxu0 0.0
    %2559 = vmatmul.mubr.f32.gmra.mrb[0].mxu0 %v2037
    %v2560 = vpop.f32.mrb[0].mxu0
    %v2561 = vadd.f32 0.0, %v2560
    %v2562 = vpop.f32.mrb[0].mxu0
    %2563 = vmatprep.mubr.f32.mxu0 0.0
    %2564 = vmatmul.mubr.f32.gmra.mrb[0].mxu0 %v2040
    %v2565 = vpop.f32.mrb[0].mxu0
    %v2566 = vadd.f32 0.0, %v2565
    %v2567 = vpop.f32.mrb[0].mxu0
    %2568 = vdwg.mxu0
    %2569 = vmatprep.subr.mxu0 0.0
    %2570 = vmatpush1.msra.mxu0 %v2184
    %2571 = vmatprep.subr.mxu0 0.0
    %2572 = vmatpush1.msra.mxu0 %v2189
    %2573 = vmatprep.subr.mxu0 0.0
    %2574 = vmatpush1.msra.mxu0 0.0
    %2575 = vmatprep.subr.mxu0 0.0
    %2576 = vmatpush1.msra.mxu0 0.0
    %2577 = vmatprep.subr.mxu0 0.0
    %2578 = vmatpush1.msra.mxu0 0.0
    %2579 = vmatprep.subr.mxu0 0.0
    %2580 = vmatpush1.msra.mxu0 0.0
    %2581 = vmatprep.subr.mxu0 0.0
    %2582 = vmatpush1.msra.mxu0 0.0
    %2583 = vmatprep.subr.mxu0 0.0
    %2584 = vmatpush1.msra.mxu0 0.0
    %2585 = vmatprep.subr.mxu0 0.0
    %2586 = vmatpush1.msra.mxu0 0.0
    %2587 = vmatprep.subr.mxu0 0.0
    %2588 = vmatpush1.msra.mxu0 0.0
    %2589 = vmatprep.subr.mxu0 0.0
    %2590 = vmatpush1.msra.mxu0 0.0
    %2591 = vmatprep.subr.mxu0 0.0
    %2592 = vmatpush1.msra.mxu0 0.0
    %2593 = vmatprep.subr.mxu0 0.0
    %2594 = vmatpush1.msra.mxu0 0.0
    %2595 = vmatprep.subr.mxu0 0.0
    %2596 = vmatpush1.msra.mxu0 0.0
    %2597 = vmatprep.subr.mxu0 0.0
    %2598 = vmatpush1.msra.mxu0 0.0
    %2599 = vmatprep.subr.mxu0 0.0
    %2600 = vmatpush1.msra.mxu0 0.0
    %2601 = vmatprep.subr.mxu0 0.0
    %2602 = vmatpush1.msra.mxu0 0.0
    %2603 = vmatprep.subr.mxu0 0.0
    %2604 = vmatpush1.msra.mxu0 0.0
    %2605 = vmatprep.subr.mxu0 0.0
    %2606 = vmatpush1.msra.mxu0 0.0
    %2607 = vmatprep.subr.mxu0 0.0
    %2608 = vmatpush1.msra.mxu0 0.0
    %2609 = vmatprep.subr.mxu0 0.0
    %2610 = vmatpush1.msra.mxu0 0.0
    %2611 = vmatprep.subr.mxu0 0.0
    %2612 = vmatpush1.msra.mxu0 0.0
    %2613 = vmatprep.subr.mxu0 0.0
    %2614 = vmatpush1.msra.mxu0 0.0
    %2615 = vmatprep.subr.mxu0 0.0
    %2616 = vmatpush1.msra.mxu0 0.0
    %2617 = vmatprep.subr.mxu0 0.0
    %2618 = vmatpush1.msra.mxu0 0.0
    %2619 = vmatprep.subr.mxu0 0.0
    %2620 = vmatpush1.msra.mxu0 0.0
    %2621 = vmatprep.subr.mxu0 0.0
    %2622 = vmatpush1.msra.mxu0 0.0
    %2623 = vmatprep.subr.mxu0 0.0
    %2624 = vmatpush1.msra.mxu0 0.0
    %2625 = vmatprep.subr.mxu0 0.0
    %2626 = vmatpush1.msra.mxu0 0.0
    %2627 = vmatprep.subr.mxu0 0.0
    %2628 = vmatpush1.msra.mxu0 0.0
    %2629 = vmatprep.subr.mxu0 0.0
    %2630 = vmatpush1.msra.mxu0 0.0
    %2631 = vmatprep.subr.mxu0 0.0
    %2632 = vmatpush1.msra.mxu0 0.0
    %2633 = vmatprep.mubr.f32.mxu0 0.0
    %2634 = vmatmul.mubr.f32.gmra.mrb[0].mxu0 %v2037
    %v2635 = vpop.f32.mrb[0].mxu0
    %v2636 = vadd.f32 0.0, %v2635
    %v2637 = vpop.f32.mrb[0].mxu0
    %2638 = vmatprep.mubr.f32.mxu0 0.0
    %2639 = vmatmul.mubr.f32.gmra.mrb[0].mxu0 %v2040
    %v2640 = vpop.f32.mrb[0].mxu0
    %v2641 = vadd.f32 0.0, %v2640
    %v2642 = vpop.f32.mrb[0].mxu0
    %2643 = vdwg.mxu0
    %2644 = vmatprep.subr.mxu0 0.0
    %2645 = vmatpush1.msra.mxu0 %v2259
    %2646 = vmatprep.subr.mxu0 0.0
    %2647 = vmatpush1.msra.mxu0 %v2264
    %2648 = vmatprep.subr.mxu0 0.0
    %2649 = vmatpush1.msra.mxu0 0.0
    %2650 = vmatprep.subr.mxu0 0.0
    %2651 = vmatpush1.msra.mxu0 0.0
    %2652 = vmatprep.subr.mxu0 0.0
    %2653 = vmatpush1.msra.mxu0 0.0
    %2654 = vmatprep.subr.mxu0 0.0
    %2655 = vmatpush1.msra.mxu0 0.0
    %2656 = vmatprep.subr.mxu0 0.0
    %2657 = vmatpush1.msra.mxu0 0.0
    %2658 = vmatprep.subr.mxu0 0.0
    %2659 = vmatpush1.msra.mxu0 0.0
    %2660 = vmatprep.subr.mxu0 0.0
    %2661 = vmatpush1.msra.mxu0 0.0
    %2662 = vmatprep.subr.mxu0 0.0
    %2663 = vmatpush1.msra.mxu0 0.0
    %2664 = vmatprep.subr.mxu0 0.0
    %2665 = vmatpush1.msra.mxu0 0.0
    %2666 = vmatprep.subr.mxu0 0.0
    %2667 = vmatpush1.msra.mxu0 0.0
    %2668 = vmatprep.subr.mxu0 0.0
    %2669 = vmatpush1.msra.mxu0 0.0
    %2670 = vmatprep.subr.mxu0 0.0
    %2671 = vmatpush1.msra.mxu0 0.0
    %2672 = vmatprep.subr.mxu0 0.0
    %2673 = vmatpush1.msra.mxu0 0.0
    %2674 = vmatprep.subr.mxu0 0.0
    %2675 = vmatpush1.msra.mxu0 0.0
    %2676 = vmatprep.subr.mxu0 0.0
    %2677 = vmatpush1.msra.mxu0 0.0
    %2678 = vmatprep.subr.mxu0 0.0
    %2679 = vmatpush1.msra.mxu0 0.0
    %2680 = vmatprep.subr.mxu0 0.0
    %2681 = vmatpush1.msra.mxu0 0.0
    %2682 = vmatprep.subr.mxu0 0.0
    %2683 = vmatpush1.msra.mxu0 0.0
    %2684 = vmatprep.subr.mxu0 0.0
    %2685 = vmatpush1.msra.mxu0 0.0
    %2686 = vmatprep.subr.mxu0 0.0
    %2687 = vmatpush1.msra.mxu0 0.0
    %2688 = vmatprep.subr.mxu0 0.0
    %2689 = vmatpush1.msra.mxu0 0.0
    %2690 = vmatprep.subr.mxu0 0.0
    %2691 = vmatpush1.msra.mxu0 0.0
    %2692 = vmatprep.subr.mxu0 0.0
    %2693 = vmatpush1.msra.mxu0 0.0
    %2694 = vmatprep.subr.mxu0 0.0
    %2695 = vmatpush1.msra.mxu0 0.0
    %2696 = vmatprep.subr.mxu0 0.0
    %2697 = vmatpush1.msra.mxu0 0.0
    %2698 = vmatprep.subr.mxu0 0.0
    %2699 = vmatpush1.msra.mxu0 0.0
    %2700 = vmatprep.subr.mxu0 0.0
    %2701 = vmatpush1.msra.mxu0 0.0
    %2702 = vmatprep.subr.mxu0 0.0
    %2703 = vmatpush1.msra.mxu0 0.0
    %2704 = vmatprep.subr.mxu0 0.0
    %2705 = vmatpush1.msra.mxu0 0.0
    %2706 = vmatprep.subr.mxu0 0.0
    %2707 = vmatpush1.msra.mxu0 0.0
    %2708 = vmatprep.mubr.f32.mxu0 0.0
    %2709 = vmatmul.mubr.f32.gmra.mrb[0].mxu0 %v2037
    %v2710 = vpop.f32.mrb[0].mxu0
    %v2711 = vadd.f32 0.0, %v2710
    %v2712 = vpop.f32.mrb[0].mxu0
    %2713 = vmatprep.mubr.f32.mxu0 0.0
    %2714 = vmatmul.mubr.f32.gmra.mrb[0].mxu0 %v2040
    %v2715 = vpop.f32.mrb[0].mxu0
    %v2716 = vadd.f32 0.0, %v2715
    %v2717 = vpop.f32.mrb[0].mxu0
    %2718 = vdwg.mxu0
    %2719 = vmatprep.subr.mxu0 0.0
    %2720 = vmatpush1.msra.mxu0 %v2334
    %2721 = vmatprep.subr.mxu0 0.0
    %2722 = vmatpush1.msra.mxu0 %v2339
    %2723 = vmatprep.subr.mxu0 0.0
    %2724 = vmatpush1.msra.mxu0 0.0
    %2725 = vmatprep.subr.mxu0 0.0
    %2726 = vmatpush1.msra.mxu0 0.0
    %2727 = vmatprep.subr.mxu0 0.0
    %2728 = vmatpush1.msra.mxu0 0.0
    %2729 = vmatprep.subr.mxu0 0.0
    %2730 = vmatpush1.msra.mxu0 0.0
    %2731 = vmatprep.subr.mxu0 0.0
    %2732 = vmatpush1.msra.mxu0 0.0
    %2733 = vmatprep.subr.mxu0 0.0
    %2734 = vmatpush1.msra.mxu0 0.0
    %2735 = vmatprep.subr.mxu0 0.0
    %2736 = vmatpush1.msra.mxu0 0.0
    %2737 = vmatprep.subr.mxu0 0.0
    %2738 = vmatpush1.msra.mxu0 0.0
    %2739 = vmatprep.subr.mxu0 0.0
    %2740 = vmatpush1.msra.mxu0 0.0
    %2741 = vmatprep.subr.mxu0 0.0
    %2742 = vmatpush1.msra.mxu0 0.0
    %2743 = vmatprep.subr.mxu0 0.0
    %2744 = vmatpush1.msra.mxu0 0.0
    %2745 = vmatprep.subr.mxu0 0.0
    %2746 = vmatpush1.msra.mxu0 0.0
    %2747 = vmatprep.subr.mxu0 0.0
    %2748 = vmatpush1.msra.mxu0 0.0
    %2749 = vmatprep.subr.mxu0 0.0
    %2750 = vmatpush1.msra.mxu0 0.0
    %2751 = vmatprep.subr.mxu0 0.0
    %2752 = vmatpush1.msra.mxu0 0.0
    %2753 = vmatprep.subr.mxu0 0.0
    %2754 = vmatpush1.msra.mxu0 0.0
    %2755 = vmatprep.subr.mxu0 0.0
    %2756 = vmatpush1.msra.mxu0 0.0
    %2757 = vmatprep.subr.mxu0 0.0
    %2758 = vmatpush1.msra.mxu0 0.0
    %2759 = vmatprep.subr.mxu0 0.0
    %2760 = vmatpush1.msra.mxu0 0.0
    %2761 = vmatprep.subr.mxu0 0.0
    %2762 = vmatpush1.msra.mxu0 0.0
    %2763 = vmatprep.subr.mxu0 0.0
    %2764 = vmatpush1.msra.mxu0 0.0
    %2765 = vmatprep.subr.mxu0 0.0
    %2766 = vmatpush1.msra.mxu0 0.0
    %2767 = vmatprep.subr.mxu0 0.0
    %2768 = vmatpush1.msra.mxu0 0.0
    %2769 = vmatprep.subr.mxu0 0.0
    %2770 = vmatpush1.msra.mxu0 0.0
    %2771 = vmatprep.subr.mxu0 0.0
    %2772 = vmatpush1.msra.mxu0 0.0
    %2773 = vmatprep.subr.mxu0 0.0
    %2774 = vmatpush1.msra.mxu0 0.0
    %2775 = vmatprep.subr.mxu0 0.0
    %2776 = vmatpush1.msra.mxu0 0.0
    %2777 = vmatprep.subr.mxu0 0.0
    %2778 = vmatpush1.msra.mxu0 0.0
    %2779 = vmatprep.subr.mxu0 0.0
    %2780 = vmatpush1.msra.mxu0 0.0
    %2781 = vmatprep.subr.mxu0 0.0
    %2782 = vmatpush1.msra.mxu0 0.0
    %2783 = vmatprep.mubr.f32.mxu0 0.0
    %2784 = vmatmul.mubr.f32.gmra.mrb[0].mxu0 %v2037
    %v2785 = vpop.f32.mrb[0].mxu0
    %v2786 = vadd.f32 0.0, %v2785
    %v2787 = vpop.f32.mrb[0].mxu0
    %2788 = vmatprep.mubr.f32.mxu0 0.0
    %2789 = vmatmul.mubr.f32.gmra.mrb[0].mxu0 %v2040
    %v2790 = vpop.f32.mrb[0].mxu0
    %v2791 = vadd.f32 0.0, %v2790
    %v2792 = vpop.f32.mrb[0].mxu0
    %2793 = vdwg.mxu0
    %v2794 = vcombine.low %v2561, %v2711
    %v2795 = vcombine.high %v2561, %v2711
    %v2797 = vunpack.c.l.s4 1983009808
    %v2798 = vunpack.c.0.s8 %v2797
    %v2799 = vlaneseq
    %v2800 = vshrl.u32 %v2799, 7
    %v2801 = vsub.s32 %v2798, %v2800
    %v2802 = vrot.slane %v2794, %v2801
    %v2804 = vunpack.c.l.s4 1983009808
    %v2805 = vunpack.c.0.s8 %v2804
    %v2806 = vlaneseq
    %v2807 = vshrl.u32 %v2806, 7
    %v2808 = vsub.s32 %v2805, %v2807
    %v2809 = vrot.slane %v2795, %v2808
    %v2810 = vcombine.low %v2636, %v2786
    %v2811 = vcombine.high %v2636, %v2786
    %v2813 = vunpack.c.l.s4 1983009808
    %v2814 = vunpack.c.0.s8 %v2813
    %v2815 = vlaneseq
    %v2816 = vshrl.u32 %v2815, 7
    %v2817 = vsub.s32 %v2814, %v2816
    %v2818 = vrot.slane %v2810, %v2817
    %v2820 = vunpack.c.l.s4 1983009808
    %v2821 = vunpack.c.0.s8 %v2820
    %v2822 = vlaneseq
    %v2823 = vshrl.u32 %v2822, 7
    %v2824 = vsub.s32 %v2821, %v2823
    %v2825 = vrot.slane %v2811, %v2824
    %v2826 = vcombine.low %v2802, %v2818
    %v2827 = vcombine.high %v2802, %v2818
    %v2829 = vunpack.c.l.s4 1934713408
    %v2830 = vunpack.c.0.s8 %v2829
    %v2831 = vlaneseq
    %v2832 = vshrl.u32 %v2831, 7
    %v2833 = vsub.s32 %v2830, %v2832
    %v2834 = vrot.slane %v2826, %v2833
    %v2836 = vunpack.c.l.s4 1934713408
    %v2837 = vunpack.c.0.s8 %v2836
    %v2838 = vlaneseq
    %v2839 = vshrl.u32 %v2838, 7
    %v2840 = vsub.s32 %v2837, %v2839
    %v2841 = vrot.slane %v2827, %v2840
    %v2842 = vcombine.low %v2809, %v2825
    %v2843 = vcombine.high %v2809, %v2825
    %v2845 = vunpack.c.l.s4 1934713408
    %v2846 = vunpack.c.0.s8 %v2845
    %v2847 = vlaneseq
    %v2848 = vshrl.u32 %v2847, 7
    %v2849 = vsub.s32 %v2846, %v2848
    %v2850 = vrot.slane %v2842, %v2849
    %v2852 = vunpack.c.l.s4 1934713408
    %v2853 = vunpack.c.0.s8 %v2852
    %v2854 = vlaneseq
    %v2855 = vshrl.u32 %v2854, 7
    %v2856 = vsub.s32 %v2853, %v2855
    %v2857 = vrot.slane %v2843, %v2856
    %v2858 = vcombine.high %v2834, 0.0
    %v2859 = vcombine.high %v2841, 0.0
    %v2860 = vcombine.high %v2850, 0.0
    %v2861 = vcombine.high %v2857, 0.0
    %v2862 = vcombine.low %v2566, %v2716
    %v2863 = vcombine.high %v2566, %v2716
    %v2865 = vunpack.c.l.s4 1983009808
    %v2866 = vunpack.c.0.s8 %v2865
    %v2867 = vlaneseq
    %v2868 = vshrl.u32 %v2867, 7
    %v2869 = vsub.s32 %v2866, %v2868
    %v2870 = vrot.slane %v2862, %v2869
    %v2872 = vunpack.c.l.s4 1983009808
    %v2873 = vunpack.c.0.s8 %v2872
    %v2874 = vlaneseq
    %v2875 = vshrl.u32 %v2874, 7
    %v2876 = vsub.s32 %v2873, %v2875
    %v2877 = vrot.slane %v2863, %v2876
    %v2878 = vcombine.low %v2641, %v2791
    %v2879 = vcombine.high %v2641, %v2791
    %v2881 = vunpack.c.l.s4 1983009808
    %v2882 = vunpack.c.0.s8 %v2881
    %v2883 = vlaneseq
    %v2884 = vshrl.u32 %v2883, 7
    %v2885 = vsub.s32 %v2882, %v2884
    %v2886 = vrot.slane %v2878, %v2885
    %v2888 = vunpack.c.l.s4 1983009808
    %v2889 = vunpack.c.0.s8 %v2888
    %v2890 = vlaneseq
    %v2891 = vshrl.u32 %v2890, 7
    %v2892 = vsub.s32 %v2889, %v2891
    %v2893 = vrot.slane %v2879, %v2892
    %v2894 = vcombine.low %v2870, %v2886
    %v2895 = vcombine.high %v2870, %v2886
    %v2897 = vunpack.c.l.s4 1934713408
    %v2898 = vunpack.c.0.s8 %v2897
    %v2899 = vlaneseq
    %v2900 = vshrl.u32 %v2899, 7
    %v2901 = vsub.s32 %v2898, %v2900
    %v2902 = vrot.slane %v2894, %v2901
    %v2904 = vunpack.c.l.s4 1934713408
    %v2905 = vunpack.c.0.s8 %v2904
    %v2906 = vlaneseq
    %v2907 = vshrl.u32 %v2906, 7
    %v2908 = vsub.s32 %v2905, %v2907
    %v2909 = vrot.slane %v2895, %v2908
    %v2910 = vcombine.low %v2877, %v2893
    %v2911 = vcombine.high %v2877, %v2893
    %v2913 = vunpack.c.l.s4 1934713408
    %v2914 = vunpack.c.0.s8 %v2913
    %v2915 = vlaneseq
    %v2916 = vshrl.u32 %v2915, 7
    %v2917 = vsub.s32 %v2914, %v2916
    %v2918 = vrot.slane %v2910, %v2917
    %v2920 = vunpack.c.l.s4 1934713408
    %v2921 = vunpack.c.0.s8 %v2920
    %v2922 = vlaneseq
    %v2923 = vshrl.u32 %v2922, 7
    %v2924 = vsub.s32 %v2921, %v2923
    %v2925 = vrot.slane %v2911, %v2924
    %v2926 = vcombine.high %v2902, 0.0
    %v2927 = vcombine.high %v2909, 0.0
    %v2928 = vcombine.high %v2918, 0.0
    %v2929 = vcombine.high %v2925, 0.0
    %2930 = vst.msk [vmem:[#allocation2 + $0x18] sm:$0xf] %vm190, %v2834
    %2931 = vst.msk [vmem:[#allocation2 + $0x38] sm:$0xf] %vm190, %v2858
    %2932 = vst.msk [vmem:[#allocation2 + $0x58] sm:$0xf] %vm190, %v2841
    %2933 = vst.msk [vmem:[#allocation2 + $0x78] sm:$0xf] %vm190, %v2859
    %2934 = vst.msk [vmem:[#allocation2 + $0x98] sm:$0xf] %vm190, %v2850
    %2935 = vst.msk [vmem:[#allocation2 + $0xb8] sm:$0xf] %vm190, %v2860
    %2936 = vst.msk [vmem:[#allocation2 + $0xd8] sm:$0xf] %vm190, %v2857
    %2937 = vst.msk [vmem:[#allocation2 + $0xf8] sm:$0xf] %vm190, %v2861
    %2938 = vst.msk [vmem:[#allocation2 + $0x118] sm:$0xf] %vm190, %v2902
    %2939 = vst.msk [vmem:[#allocation2 + $0x138] sm:$0xf] %vm190, %v2926
    %2940 = vst.msk [vmem:[#allocation2 + $0x158] sm:$0xf] %vm190, %v2909
    %2941 = vst.msk [vmem:[#allocation2 + $0x178] sm:$0xf] %vm190, %v2927
    %2942 = vst.msk [vmem:[#allocation2 + $0x198] sm:$0xf] %vm190, %v2918
    %2943 = vst.msk [vmem:[#allocation2 + $0x1b8] sm:$0xf] %vm190, %v2928
    %2944 = vst.msk [vmem:[#allocation2 + $0x1d8] sm:$0xf] %vm190, %v2925
    %2945 = vst.msk [vmem:[#allocation2 + $0x1f8] sm:$0xf] %vm190, %v2929
    %v2946 = vld [vmem:[#allocation2] sm:$0xff]
    %v2947 = vld [vmem:[#allocation2 + $0x8] sm:$0xff]
    %v2948 = vld [vmem:[#allocation2 + $0x10] sm:$0xff]
    %v2949 = vld [vmem:[#allocation2 + $0x18] sm:$0xf]
    %v2950 = vld [vmem:[#allocation2 + $0x20] sm:$0xff]
    %v2951 = vld [vmem:[#allocation2 + $0x28] sm:$0xff]
    %v2952 = vld [vmem:[#allocation2 + $0x30] sm:$0xff]
    %v2953 = vld [vmem:[#allocation2 + $0x38] sm:$0xf]
    %v2954 = vld [vmem:[#allocation2 + $0x40] sm:$0xff]
    %v2955 = vld [vmem:[#allocation2 + $0x48] sm:$0xff]
    %v2956 = vld [vmem:[#allocation2 + $0x50] sm:$0xff]
    %v2957 = vld [vmem:[#allocation2 + $0x58] sm:$0xf]
    %v2958 = vld [vmem:[#allocation2 + $0x60] sm:$0xff]
    %v2959 = vld [vmem:[#allocation2 + $0x68] sm:$0xff]
    %v2960 = vld [vmem:[#allocation2 + $0x70] sm:$0xff]
    %v2961 = vld [vmem:[#allocation2 + $0x78] sm:$0xf]
    %v2962 = vld [vmem:[#allocation2 + $0x80] sm:$0xff]
    %v2963 = vld [vmem:[#allocation2 + $0x88] sm:$0xff]
    %v2964 = vld [vmem:[#allocation2 + $0x90] sm:$0xff]
    %v2965 = vld [vmem:[#allocation2 + $0x98] sm:$0xf]
    %v2966 = vld [vmem:[#allocation2 + $0xa0] sm:$0xff]
    %v2967 = vld [vmem:[#allocation2 + $0xa8] sm:$0xff]
    %v2968 = vld [vmem:[#allocation2 + $0xb0] sm:$0xff]
    %v2969 = vld [vmem:[#allocation2 + $0xb8] sm:$0xf]
    %v2970 = vld [vmem:[#allocation2 + $0xc0] sm:$0xff]
    %v2971 = vld [vmem:[#allocation2 + $0xc8] sm:$0xff]
    %v2972 = vld [vmem:[#allocation2 + $0xd0] sm:$0xff]
    %v2973 = vld [vmem:[#allocation2 + $0xd8] sm:$0xf]
    %v2974 = vld [vmem:[#allocation2 + $0xe0] sm:$0xff]
    %v2975 = vld [vmem:[#allocation2 + $0xe8] sm:$0xff]
    %v2976 = vld [vmem:[#allocation2 + $0xf0] sm:$0xff]
    %v2977 = vld [vmem:[#allocation2 + $0xf8] sm:$0xf]
    %v2978 = vld [vmem:[#allocation2 + $0x100] sm:$0xff]
    %v2979 = vld [vmem:[#allocation2 + $0x108] sm:$0xff]
    %v2980 = vld [vmem:[#allocation2 + $0x110] sm:$0xff]
    %v2981 = vld [vmem:[#allocation2 + $0x118] sm:$0xf]
    %v2982 = vld [vmem:[#allocation2 + $0x120] sm:$0xff]
    %v2983 = vld [vmem:[#allocation2 + $0x128] sm:$0xff]
    %v2984 = vld [vmem:[#allocation2 + $0x130] sm:$0xff]
    %v2985 = vld [vmem:[#allocation2 + $0x138] sm:$0xf]
    %v2986 = vld [vmem:[#allocation2 + $0x140] sm:$0xff]
    %v2987 = vld [vmem:[#allocation2 + $0x148] sm:$0xff]
    %v2988 = vld [vmem:[#allocation2 + $0x150] sm:$0xff]
    %v2989 = vld [vmem:[#allocation2 + $0x158] sm:$0xf]
    %v2990 = vld [vmem:[#allocation2 + $0x160] sm:$0xff]
    %v2991 = vld [vmem:[#allocation2 + $0x168] sm:$0xff]
    %v2992 = vld [vmem:[#allocation2 + $0x170] sm:$0xff]
    %v2993 = vld [vmem:[#allocation2 + $0x178] sm:$0xf]
    %v2994 = vld [vmem:[#allocation2 + $0x180] sm:$0xff]
    %v2995 = vld [vmem:[#allocation2 + $0x188] sm:$0xff]
    %v2996 = vld [vmem:[#allocation2 + $0x190] sm:$0xff]
    %v2997 = vld [vmem:[#allocation2 + $0x198] sm:$0xf]
    %v2998 = vld [vmem:[#allocation2 + $0x1a0] sm:$0xff]
    %v2999 = vld [vmem:[#allocation2 + $0x1a8] sm:$0xff]
    %v3000 = vld [vmem:[#allocation2 + $0x1b0] sm:$0xff]
    %v3001 = vld [vmem:[#allocation2 + $0x1b8] sm:$0xf]
    %v3002 = vld [vmem:[#allocation2 + $0x1c0] sm:$0xff]
    %v3003 = vld [vmem:[#allocation2 + $0x1c8] sm:$0xff]
    %v3004 = vld [vmem:[#allocation2 + $0x1d0] sm:$0xff]
    %v3005 = vld [vmem:[#allocation2 + $0x1d8] sm:$0xf]
    %v3006 = vld [vmem:[#allocation2 + $0x1e0] sm:$0xff]
    %v3007 = vld [vmem:[#allocation2 + $0x1e8] sm:$0xff]
    %v3008 = vld [vmem:[#allocation2 + $0x1f0] sm:$0xff]
    %v3009 = vld [vmem:[#allocation2 + $0x1f8] sm:$0xf]
    %v3010 = vld [vmem:[%s2] sm:$0xff]
    %v3011 = vld [vmem:[%s3] sm:$0xff]
    %3013 = vset.pattern.permute.xlu0 0
    %3014 = vperm.xlu0 %3013, %v3011
    %v3015 = vpop.permute.xlu0 %3014
    %vm3017 = vcmask 228352
    %v3019 = vsel %vm3017, %v3010, 0
    %vm3021 = vcmask 1043456
    %v3023 = vsel %vm3021, %v2949, 0
    %3025 = vmatprep.subr.mxu0 0.0
    %3026 = vmatpush1.msra.mxu0 %v2946
    %3027 = vmatprep.subr.mxu0 0.0
    %3028 = vmatpush1.msra.mxu0 %v2947
    %3029 = vmatprep.subr.mxu0 0.0
    %3030 = vmatpush1.msra.mxu0 %v2948
    %3031 = vmatprep.subr.mxu0 0.0
    %3032 = vmatpush1.msra.mxu0 %v3023
    %3033 = vmatprep.subr.mxu0 0.0
    %3034 = vmatpush1.msra.mxu0 0.0
    %3035 = vmatprep.subr.mxu0 0.0
    %3036 = vmatpush1.msra.mxu0 0.0
    %3037 = vmatprep.subr.mxu0 0.0
    %3038 = vmatpush1.msra.mxu0 0.0
    %3039 = vmatprep.subr.mxu0 0.0
    %3040 = vmatpush1.msra.mxu0 0.0
    %3041 = vmatprep.subr.mxu0 0.0
    %3042 = vmatpush1.msra.mxu0 0.0
    %3043 = vmatprep.subr.mxu0 0.0
    %3044 = vmatpush1.msra.mxu0 0.0
    %3045 = vmatprep.subr.mxu0 0.0
    %3046 = vmatpush1.msra.mxu0 0.0
    %3047 = vmatprep.subr.mxu0 0.0
    %3048 = vmatpush1.msra.mxu0 0.0
    %3049 = vmatprep.subr.mxu0 0.0
    %3050 = vmatpush1.msra.mxu0 0.0
    %3051 = vmatprep.subr.mxu0 0.0
    %3052 = vmatpush1.msra.mxu0 0.0
    %3053 = vmatprep.subr.mxu0 0.0
    %3054 = vmatpush1.msra.mxu0 0.0
    %3055 = vmatprep.subr.mxu0 0.0
    %3056 = vmatpush1.msra.mxu0 0.0
    %3057 = vmatprep.subr.mxu0 0.0
    %3058 = vmatpush1.msra.mxu0 0.0
    %3059 = vmatprep.subr.mxu0 0.0
    %3060 = vmatpush1.msra.mxu0 0.0
    %3061 = vmatprep.subr.mxu0 0.0
    %3062 = vmatpush1.msra.mxu0 0.0
    %3063 = vmatprep.subr.mxu0 0.0
    %3064 = vmatpush1.msra.mxu0 0.0
    %3065 = vmatprep.subr.mxu0 0.0
    %3066 = vmatpush1.msra.mxu0 0.0
    %3067 = vmatprep.subr.mxu0 0.0
    %3068 = vmatpush1.msra.mxu0 0.0
    %3069 = vmatprep.subr.mxu0 0.0
    %3070 = vmatpush1.msra.mxu0 0.0
    %3071 = vmatprep.subr.mxu0 0.0
    %3072 = vmatpush1.msra.mxu0 0.0
    %3073 = vmatprep.subr.mxu0 0.0
    %3074 = vmatpush1.msra.mxu0 0.0
    %3075 = vmatprep.subr.mxu0 0.0
    %3076 = vmatpush1.msra.mxu0 0.0
    %3077 = vmatprep.subr.mxu0 0.0
    %3078 = vmatpush1.msra.mxu0 0.0
    %3079 = vmatprep.subr.mxu0 0.0
    %3080 = vmatpush1.msra.mxu0 0.0
    %3081 = vmatprep.subr.mxu0 0.0
    %3082 = vmatpush1.msra.mxu0 0.0
    %3083 = vmatprep.subr.mxu0 0.0
    %3084 = vmatpush1.msra.mxu0 0.0
    %3085 = vmatprep.subr.mxu0 0.0
    %3086 = vmatpush1.msra.mxu0 0.0
    %3087 = vmatprep.subr.mxu0 0.0
    %3088 = vmatpush1.msra.mxu0 0.0
    %3089 = vmatprep.mubr.f32.mxu0 0.0
    %3090 = vmatmul.mubr.f32.gmra.mrb[0].mxu0 %v3019
    %v3091 = vpop.f32.mrb[0].mxu0
    %v3092 = vadd.f32 %v3015, %v3091
    %v3093 = vpop.f32.mrb[0].mxu0
    %3094 = vdwg.mxu0
    %v3096 = vsel %vm3021, %v2953, 0
    %3098 = vmatprep.subr.mxu0 0.0
    %3099 = vmatpush1.msra.mxu0 %v2950
    %3100 = vmatprep.subr.mxu0 0.0
    %3101 = vmatpush1.msra.mxu0 %v2951
    %3102 = vmatprep.subr.mxu0 0.0
    %3103 = vmatpush1.msra.mxu0 %v2952
    %3104 = vmatprep.subr.mxu0 0.0
    %3105 = vmatpush1.msra.mxu0 %v3096
    %3106 = vmatprep.subr.mxu0 0.0
    %3107 = vmatpush1.msra.mxu0 0.0
    %3108 = vmatprep.subr.mxu0 0.0
    %3109 = vmatpush1.msra.mxu0 0.0
    %3110 = vmatprep.subr.mxu0 0.0
    %3111 = vmatpush1.msra.mxu0 0.0
    %3112 = vmatprep.subr.mxu0 0.0
    %3113 = vmatpush1.msra.mxu0 0.0
    %3114 = vmatprep.subr.mxu0 0.0
    %3115 = vmatpush1.msra.mxu0 0.0
    %3116 = vmatprep.subr.mxu0 0.0
    %3117 = vmatpush1.msra.mxu0 0.0
    %3118 = vmatprep.subr.mxu0 0.0
    %3119 = vmatpush1.msra.mxu0 0.0
    %3120 = vmatprep.subr.mxu0 0.0
    %3121 = vmatpush1.msra.mxu0 0.0
    %3122 = vmatprep.subr.mxu0 0.0
    %3123 = vmatpush1.msra.mxu0 0.0
    %3124 = vmatprep.subr.mxu0 0.0
    %3125 = vmatpush1.msra.mxu0 0.0
    %3126 = vmatprep.subr.mxu0 0.0
    %3127 = vmatpush1.msra.mxu0 0.0
    %3128 = vmatprep.subr.mxu0 0.0
    %3129 = vmatpush1.msra.mxu0 0.0
    %3130 = vmatprep.subr.mxu0 0.0
    %3131 = vmatpush1.msra.mxu0 0.0
    %3132 = vmatprep.subr.mxu0 0.0
    %3133 = vmatpush1.msra.mxu0 0.0
    %3134 = vmatprep.subr.mxu0 0.0
    %3135 = vmatpush1.msra.mxu0 0.0
    %3136 = vmatprep.subr.mxu0 0.0
    %3137 = vmatpush1.msra.mxu0 0.0
    %3138 = vmatprep.subr.mxu0 0.0
    %3139 = vmatpush1.msra.mxu0 0.0
    %3140 = vmatprep.subr.mxu0 0.0
    %3141 = vmatpush1.msra.mxu0 0.0
    %3142 = vmatprep.subr.mxu0 0.0
    %3143 = vmatpush1.msra.mxu0 0.0
    %3144 = vmatprep.subr.mxu0 0.0
    %3145 = vmatpush1.msra.mxu0 0.0
    %3146 = vmatprep.subr.mxu0 0.0
    %3147 = vmatpush1.msra.mxu0 0.0
    %3148 = vmatprep.subr.mxu0 0.0
    %3149 = vmatpush1.msra.mxu0 0.0
    %3150 = vmatprep.subr.mxu0 0.0
    %3151 = vmatpush1.msra.mxu0 0.0
    %3152 = vmatprep.subr.mxu0 0.0
    %3153 = vmatpush1.msra.mxu0 0.0
    %3154 = vmatprep.subr.mxu0 0.0
    %3155 = vmatpush1.msra.mxu0 0.0
    %3156 = vmatprep.subr.mxu0 0.0
    %3157 = vmatpush1.msra.mxu0 0.0
    %3158 = vmatprep.subr.mxu0 0.0
    %3159 = vmatpush1.msra.mxu0 0.0
    %3160 = vmatprep.subr.mxu0 0.0
    %3161 = vmatpush1.msra.mxu0 0.0
    %3162 = vmatprep.mubr.f32.mxu0 0.0
    %3163 = vmatmul.mubr.f32.gmra.mrb[0].mxu0 %v3019
    %v3164 = vpop.f32.mrb[0].mxu0
    %v3165 = vadd.f32 %v3015, %v3164
    %v3166 = vpop.f32.mrb[0].mxu0
    %3167 = vdwg.mxu0
    %v3169 = vsel %vm3021, %v2957, 0
    %3171 = vmatprep.subr.mxu0 0.0
    %3172 = vmatpush1.msra.mxu0 %v2954
    %3173 = vmatprep.subr.mxu0 0.0
    %3174 = vmatpush1.msra.mxu0 %v2955
    %3175 = vmatprep.subr.mxu0 0.0
    %3176 = vmatpush1.msra.mxu0 %v2956
    %3177 = vmatprep.subr.mxu0 0.0
    %3178 = vmatpush1.msra.mxu0 %v3169
    %3179 = vmatprep.subr.mxu0 0.0
    %3180 = vmatpush1.msra.mxu0 0.0
    %3181 = vmatprep.subr.mxu0 0.0
    %3182 = vmatpush1.msra.mxu0 0.0
    %3183 = vmatprep.subr.mxu0 0.0
    %3184 = vmatpush1.msra.mxu0 0.0
    %3185 = vmatprep.subr.mxu0 0.0
    %3186 = vmatpush1.msra.mxu0 0.0
    %3187 = vmatprep.subr.mxu0 0.0
    %3188 = vmatpush1.msra.mxu0 0.0
    %3189 = vmatprep.subr.mxu0 0.0
    %3190 = vmatpush1.msra.mxu0 0.0
    %3191 = vmatprep.subr.mxu0 0.0
    %3192 = vmatpush1.msra.mxu0 0.0
    %3193 = vmatprep.subr.mxu0 0.0
    %3194 = vmatpush1.msra.mxu0 0.0
    %3195 = vmatprep.subr.mxu0 0.0
    %3196 = vmatpush1.msra.mxu0 0.0
    %3197 = vmatprep.subr.mxu0 0.0
    %3198 = vmatpush1.msra.mxu0 0.0
    %3199 = vmatprep.subr.mxu0 0.0
    %3200 = vmatpush1.msra.mxu0 0.0
    %3201 = vmatprep.subr.mxu0 0.0
    %3202 = vmatpush1.msra.mxu0 0.0
    %3203 = vmatprep.subr.mxu0 0.0
    %3204 = vmatpush1.msra.mxu0 0.0
    %3205 = vmatprep.subr.mxu0 0.0
    %3206 = vmatpush1.msra.mxu0 0.0
    %3207 = vmatprep.subr.mxu0 0.0
    %3208 = vmatpush1.msra.mxu0 0.0
    %3209 = vmatprep.subr.mxu0 0.0
    %3210 = vmatpush1.msra.mxu0 0.0
    %3211 = vmatprep.subr.mxu0 0.0
    %3212 = vmatpush1.msra.mxu0 0.0
    %3213 = vmatprep.subr.mxu0 0.0
    %3214 = vmatpush1.msra.mxu0 0.0
    %3215 = vmatprep.subr.mxu0 0.0
    %3216 = vmatpush1.msra.mxu0 0.0
    %3217 = vmatprep.subr.mxu0 0.0
    %3218 = vmatpush1.msra.mxu0 0.0
    %3219 = vmatprep.subr.mxu0 0.0
    %3220 = vmatpush1.msra.mxu0 0.0
    %3221 = vmatprep.subr.mxu0 0.0
    %3222 = vmatpush1.msra.mxu0 0.0
    %3223 = vmatprep.subr.mxu0 0.0
    %3224 = vmatpush1.msra.mxu0 0.0
    %3225 = vmatprep.subr.mxu0 0.0
    %3226 = vmatpush1.msra.mxu0 0.0
    %3227 = vmatprep.subr.mxu0 0.0
    %3228 = vmatpush1.msra.mxu0 0.0
    %3229 = vmatprep.subr.mxu0 0.0
    %3230 = vmatpush1.msra.mxu0 0.0
    %3231 = vmatprep.subr.mxu0 0.0
    %3232 = vmatpush1.msra.mxu0 0.0
    %3233 = vmatprep.subr.mxu0 0.0
    %3234 = vmatpush1.msra.mxu0 0.0
    %3235 = vmatprep.mubr.f32.mxu0 0.0
    %3236 = vmatmul.mubr.f32.gmra.mrb[0].mxu0 %v3019
    %v3237 = vpop.f32.mrb[0].mxu0
    %v3238 = vadd.f32 %v3015, %v3237
    %v3239 = vpop.f32.mrb[0].mxu0
    %3240 = vdwg.mxu0
    %v3242 = vsel %vm3021, %v2961, 0
    %3244 = vmatprep.subr.mxu0 0.0
    %3245 = vmatpush1.msra.mxu0 %v2958
    %3246 = vmatprep.subr.mxu0 0.0
    %3247 = vmatpush1.msra.mxu0 %v2959
    %3248 = vmatprep.subr.mxu0 0.0
    %3249 = vmatpush1.msra.mxu0 %v2960
    %3250 = vmatprep.subr.mxu0 0.0
    %3251 = vmatpush1.msra.mxu0 %v3242
    %3252 = vmatprep.subr.mxu0 0.0
    %3253 = vmatpush1.msra.mxu0 0.0
    %3254 = vmatprep.subr.mxu0 0.0
    %3255 = vmatpush1.msra.mxu0 0.0
    %3256 = vmatprep.subr.mxu0 0.0
    %3257 = vmatpush1.msra.mxu0 0.0
    %3258 = vmatprep.subr.mxu0 0.0
    %3259 = vmatpush1.msra.mxu0 0.0
    %3260 = vmatprep.subr.mxu0 0.0
    %3261 = vmatpush1.msra.mxu0 0.0
    %3262 = vmatprep.subr.mxu0 0.0
    %3263 = vmatpush1.msra.mxu0 0.0
    %3264 = vmatprep.subr.mxu0 0.0
    %3265 = vmatpush1.msra.mxu0 0.0
    %3266 = vmatprep.subr.mxu0 0.0
    %3267 = vmatpush1.msra.mxu0 0.0
    %3268 = vmatprep.subr.mxu0 0.0
    %3269 = vmatpush1.msra.mxu0 0.0
    %3270 = vmatprep.subr.mxu0 0.0
    %3271 = vmatpush1.msra.mxu0 0.0
    %3272 = vmatprep.subr.mxu0 0.0
    %3273 = vmatpush1.msra.mxu0 0.0
    %3274 = vmatprep.subr.mxu0 0.0
    %3275 = vmatpush1.msra.mxu0 0.0
    %3276 = vmatprep.subr.mxu0 0.0
    %3277 = vmatpush1.msra.mxu0 0.0
    %3278 = vmatprep.subr.mxu0 0.0
    %3279 = vmatpush1.msra.mxu0 0.0
    %3280 = vmatprep.subr.mxu0 0.0
    %3281 = vmatpush1.msra.mxu0 0.0
    %3282 = vmatprep.subr.mxu0 0.0
    %3283 = vmatpush1.msra.mxu0 0.0
    %3284 = vmatprep.subr.mxu0 0.0
    %3285 = vmatpush1.msra.mxu0 0.0
    %3286 = vmatprep.subr.mxu0 0.0
    %3287 = vmatpush1.msra.mxu0 0.0
    %3288 = vmatprep.subr.mxu0 0.0
    %3289 = vmatpush1.msra.mxu0 0.0
    %3290 = vmatprep.subr.mxu0 0.0
    %3291 = vmatpush1.msra.mxu0 0.0
    %3292 = vmatprep.subr.mxu0 0.0
    %3293 = vmatpush1.msra.mxu0 0.0
    %3294 = vmatprep.subr.mxu0 0.0
    %3295 = vmatpush1.msra.mxu0 0.0
    %3296 = vmatprep.subr.mxu0 0.0
    %3297 = vmatpush1.msra.mxu0 0.0
    %3298 = vmatprep.subr.mxu0 0.0
    %3299 = vmatpush1.msra.mxu0 0.0
    %3300 = vmatprep.subr.mxu0 0.0
    %3301 = vmatpush1.msra.mxu0 0.0
    %3302 = vmatprep.subr.mxu0 0.0
    %3303 = vmatpush1.msra.mxu0 0.0
    %3304 = vmatprep.subr.mxu0 0.0
    %3305 = vmatpush1.msra.mxu0 0.0
    %3306 = vmatprep.subr.mxu0 0.0
    %3307 = vmatpush1.msra.mxu0 0.0
    %3308 = vmatprep.mubr.f32.mxu0 0.0
    %3309 = vmatmul.mubr.f32.gmra.mrb[0].mxu0 %v3019
    %v3310 = vpop.f32.mrb[0].mxu0
    %v3311 = vadd.f32 %v3015, %v3310
    %v3312 = vpop.f32.mrb[0].mxu0
    %3313 = vdwg.mxu0
    %v3315 = vsel %vm3021, %v2965, 0
    %3317 = vmatprep.subr.mxu0 0.0
    %3318 = vmatpush1.msra.mxu0 %v2962
    %3319 = vmatprep.subr.mxu0 0.0
    %3320 = vmatpush1.msra.mxu0 %v2963
    %3321 = vmatprep.subr.mxu0 0.0
    %3322 = vmatpush1.msra.mxu0 %v2964
    %3323 = vmatprep.subr.mxu0 0.0
    %3324 = vmatpush1.msra.mxu0 %v3315
    %3325 = vmatprep.subr.mxu0 0.0
    %3326 = vmatpush1.msra.mxu0 0.0
    %3327 = vmatprep.subr.mxu0 0.0
    %3328 = vmatpush1.msra.mxu0 0.0
    %3329 = vmatprep.subr.mxu0 0.0
    %3330 = vmatpush1.msra.mxu0 0.0
    %3331 = vmatprep.subr.mxu0 0.0
    %3332 = vmatpush1.msra.mxu0 0.0
    %3333 = vmatprep.subr.mxu0 0.0
    %3334 = vmatpush1.msra.mxu0 0.0
    %3335 = vmatprep.subr.mxu0 0.0
    %3336 = vmatpush1.msra.mxu0 0.0
    %3337 = vmatprep.subr.mxu0 0.0
    %3338 = vmatpush1.msra.mxu0 0.0
    %3339 = vmatprep.subr.mxu0 0.0
    %3340 = vmatpush1.msra.mxu0 0.0
    %3341 = vmatprep.subr.mxu0 0.0
    %3342 = vmatpush1.msra.mxu0 0.0
    %3343 = vmatprep.subr.mxu0 0.0
    %3344 = vmatpush1.msra.mxu0 0.0
    %3345 = vmatprep.subr.mxu0 0.0
    %3346 = vmatpush1.msra.mxu0 0.0
    %3347 = vmatprep.subr.mxu0 0.0
    %3348 = vmatpush1.msra.mxu0 0.0
    %3349 = vmatprep.subr.mxu0 0.0
    %3350 = vmatpush1.msra.mxu0 0.0
    %3351 = vmatprep.subr.mxu0 0.0
    %3352 = vmatpush1.msra.mxu0 0.0
    %3353 = vmatprep.subr.mxu0 0.0
    %3354 = vmatpush1.msra.mxu0 0.0
    %3355 = vmatprep.subr.mxu0 0.0
    %3356 = vmatpush1.msra.mxu0 0.0
    %3357 = vmatprep.subr.mxu0 0.0
    %3358 = vmatpush1.msra.mxu0 0.0
    %3359 = vmatprep.subr.mxu0 0.0
    %3360 = vmatpush1.msra.mxu0 0.0
    %3361 = vmatprep.subr.mxu0 0.0
    %3362 = vmatpush1.msra.mxu0 0.0
    %3363 = vmatprep.subr.mxu0 0.0
    %3364 = vmatpush1.msra.mxu0 0.0
    %3365 = vmatprep.subr.mxu0 0.0
    %3366 = vmatpush1.msra.mxu0 0.0
    %3367 = vmatprep.subr.mxu0 0.0
    %3368 = vmatpush1.msra.mxu0 0.0
    %3369 = vmatprep.subr.mxu0 0.0
    %3370 = vmatpush1.msra.mxu0 0.0
    %3371 = vmatprep.subr.mxu0 0.0
    %3372 = vmatpush1.msra.mxu0 0.0
    %3373 = vmatprep.subr.mxu0 0.0
    %3374 = vmatpush1.msra.mxu0 0.0
    %3375 = vmatprep.subr.mxu0 0.0
    %3376 = vmatpush1.msra.mxu0 0.0
    %3377 = vmatprep.subr.mxu0 0.0
    %3378 = vmatpush1.msra.mxu0 0.0
    %3379 = vmatprep.subr.mxu0 0.0
    %3380 = vmatpush1.msra.mxu0 0.0
    %3381 = vmatprep.mubr.f32.mxu0 0.0
    %3382 = vmatmul.mubr.f32.gmra.mrb[0].mxu0 %v3019
    %v3383 = vpop.f32.mrb[0].mxu0
    %v3384 = vadd.f32 %v3015, %v3383
    %v3385 = vpop.f32.mrb[0].mxu0
    %3386 = vdwg.mxu0
    %v3388 = vsel %vm3021, %v2969, 0
    %3390 = vmatprep.subr.mxu0 0.0
    %3391 = vmatpush1.msra.mxu0 %v2966
    %3392 = vmatprep.subr.mxu0 0.0
    %3393 = vmatpush1.msra.mxu0 %v2967
    %3394 = vmatprep.subr.mxu0 0.0
    %3395 = vmatpush1.msra.mxu0 %v2968
    %3396 = vmatprep.subr.mxu0 0.0
    %3397 = vmatpush1.msra.mxu0 %v3388
    %3398 = vmatprep.subr.mxu0 0.0
    %3399 = vmatpush1.msra.mxu0 0.0
    %3400 = vmatprep.subr.mxu0 0.0
    %3401 = vmatpush1.msra.mxu0 0.0
    %3402 = vmatprep.subr.mxu0 0.0
    %3403 = vmatpush1.msra.mxu0 0.0
    %3404 = vmatprep.subr.mxu0 0.0
    %3405 = vmatpush1.msra.mxu0 0.0
    %3406 = vmatprep.subr.mxu0 0.0
    %3407 = vmatpush1.msra.mxu0 0.0
    %3408 = vmatprep.subr.mxu0 0.0
    %3409 = vmatpush1.msra.mxu0 0.0
    %3410 = vmatprep.subr.mxu0 0.0
    %3411 = vmatpush1.msra.mxu0 0.0
    %3412 = vmatprep.subr.mxu0 0.0
    %3413 = vmatpush1.msra.mxu0 0.0
    %3414 = vmatprep.subr.mxu0 0.0
    %3415 = vmatpush1.msra.mxu0 0.0
    %3416 = vmatprep.subr.mxu0 0.0
    %3417 = vmatpush1.msra.mxu0 0.0
    %3418 = vmatprep.subr.mxu0 0.0
    %3419 = vmatpush1.msra.mxu0 0.0
    %3420 = vmatprep.subr.mxu0 0.0
    %3421 = vmatpush1.msra.mxu0 0.0
    %3422 = vmatprep.subr.mxu0 0.0
    %3423 = vmatpush1.msra.mxu0 0.0
    %3424 = vmatprep.subr.mxu0 0.0
    %3425 = vmatpush1.msra.mxu0 0.0
    %3426 = vmatprep.subr.mxu0 0.0
    %3427 = vmatpush1.msra.mxu0 0.0
    %3428 = vmatprep.subr.mxu0 0.0
    %3429 = vmatpush1.msra.mxu0 0.0
    %3430 = vmatprep.subr.mxu0 0.0
    %3431 = vmatpush1.msra.mxu0 0.0
    %3432 = vmatprep.subr.mxu0 0.0
    %3433 = vmatpush1.msra.mxu0 0.0
    %3434 = vmatprep.subr.mxu0 0.0
    %3435 = vmatpush1.msra.mxu0 0.0
    %3436 = vmatprep.subr.mxu0 0.0
    %3437 = vmatpush1.msra.mxu0 0.0
    %3438 = vmatprep.subr.mxu0 0.0
    %3439 = vmatpush1.msra.mxu0 0.0
    %3440 = vmatprep.subr.mxu0 0.0
    %3441 = vmatpush1.msra.mxu0 0.0
    %3442 = vmatprep.subr.mxu0 0.0
    %3443 = vmatpush1.msra.mxu0 0.0
    %3444 = vmatprep.subr.mxu0 0.0
    %3445 = vmatpush1.msra.mxu0 0.0
    %3446 = vmatprep.subr.mxu0 0.0
    %3447 = vmatpush1.msra.mxu0 0.0
    %3448 = vmatprep.subr.mxu0 0.0
    %3449 = vmatpush1.msra.mxu0 0.0
    %3450 = vmatprep.subr.mxu0 0.0
    %3451 = vmatpush1.msra.mxu0 0.0
    %3452 = vmatprep.subr.mxu0 0.0
    %3453 = vmatpush1.msra.mxu0 0.0
    %3454 = vmatprep.mubr.f32.mxu0 0.0
    %3455 = vmatmul.mubr.f32.gmra.mrb[0].mxu0 %v3019
    %v3456 = vpop.f32.mrb[0].mxu0
    %v3457 = vadd.f32 %v3015, %v3456
    %v3458 = vpop.f32.mrb[0].mxu0
    %3459 = vdwg.mxu0
    %v3461 = vsel %vm3021, %v2973, 0
    %3463 = vmatprep.subr.mxu0 0.0
    %3464 = vmatpush1.msra.mxu0 %v2970
    %3465 = vmatprep.subr.mxu0 0.0
    %3466 = vmatpush1.msra.mxu0 %v2971
    %3467 = vmatprep.subr.mxu0 0.0
    %3468 = vmatpush1.msra.mxu0 %v2972
    %3469 = vmatprep.subr.mxu0 0.0
    %3470 = vmatpush1.msra.mxu0 %v3461
    %3471 = vmatprep.subr.mxu0 0.0
    %3472 = vmatpush1.msra.mxu0 0.0
    %3473 = vmatprep.subr.mxu0 0.0
    %3474 = vmatpush1.msra.mxu0 0.0
    %3475 = vmatprep.subr.mxu0 0.0
    %3476 = vmatpush1.msra.mxu0 0.0
    %3477 = vmatprep.subr.mxu0 0.0
    %3478 = vmatpush1.msra.mxu0 0.0
    %3479 = vmatprep.subr.mxu0 0.0
    %3480 = vmatpush1.msra.mxu0 0.0
    %3481 = vmatprep.subr.mxu0 0.0
    %3482 = vmatpush1.msra.mxu0 0.0
    %3483 = vmatprep.subr.mxu0 0.0
    %3484 = vmatpush1.msra.mxu0 0.0
    %3485 = vmatprep.subr.mxu0 0.0
    %3486 = vmatpush1.msra.mxu0 0.0
    %3487 = vmatprep.subr.mxu0 0.0
    %3488 = vmatpush1.msra.mxu0 0.0
    %3489 = vmatprep.subr.mxu0 0.0
    %3490 = vmatpush1.msra.mxu0 0.0
    %3491 = vmatprep.subr.mxu0 0.0
    %3492 = vmatpush1.msra.mxu0 0.0
    %3493 = vmatprep.subr.mxu0 0.0
    %3494 = vmatpush1.msra.mxu0 0.0
    %3495 = vmatprep.subr.mxu0 0.0
    %3496 = vmatpush1.msra.mxu0 0.0
    %3497 = vmatprep.subr.mxu0 0.0
    %3498 = vmatpush1.msra.mxu0 0.0
    %3499 = vmatprep.subr.mxu0 0.0
    %3500 = vmatpush1.msra.mxu0 0.0
    %3501 = vmatprep.subr.mxu0 0.0
    %3502 = vmatpush1.msra.mxu0 0.0
    %3503 = vmatprep.subr.mxu0 0.0
    %3504 = vmatpush1.msra.mxu0 0.0
    %3505 = vmatprep.subr.mxu0 0.0
    %3506 = vmatpush1.msra.mxu0 0.0
    %3507 = vmatprep.subr.mxu0 0.0
    %3508 = vmatpush1.msra.mxu0 0.0
    %3509 = vmatprep.subr.mxu0 0.0
    %3510 = vmatpush1.msra.mxu0 0.0
    %3511 = vmatprep.subr.mxu0 0.0
    %3512 = vmatpush1.msra.mxu0 0.0
    %3513 = vmatprep.subr.mxu0 0.0
    %3514 = vmatpush1.msra.mxu0 0.0
    %3515 = vmatprep.subr.mxu0 0.0
    %3516 = vmatpush1.msra.mxu0 0.0
    %3517 = vmatprep.subr.mxu0 0.0
    %3518 = vmatpush1.msra.mxu0 0.0
    %3519 = vmatprep.subr.mxu0 0.0
    %3520 = vmatpush1.msra.mxu0 0.0
    %3521 = vmatprep.subr.mxu0 0.0
    %3522 = vmatpush1.msra.mxu0 0.0
    %3523 = vmatprep.subr.mxu0 0.0
    %3524 = vmatpush1.msra.mxu0 0.0
    %3525 = vmatprep.subr.mxu0 0.0
    %3526 = vmatpush1.msra.mxu0 0.0
    %3527 = vmatprep.mubr.f32.mxu0 0.0
    %3528 = vmatmul.mubr.f32.gmra.mrb[0].mxu0 %v3019
    %v3529 = vpop.f32.mrb[0].mxu0
    %v3530 = vadd.f32 %v3015, %v3529
    %v3531 = vpop.f32.mrb[0].mxu0
    %3532 = vdwg.mxu0
    %v3534 = vsel %vm3021, %v2977, 0
    %3536 = vmatprep.subr.mxu0 0.0
    %3537 = vmatpush1.msra.mxu0 %v2974
    %3538 = vmatprep.subr.mxu0 0.0
    %3539 = vmatpush1.msra.mxu0 %v2975
    %3540 = vmatprep.subr.mxu0 0.0
    %3541 = vmatpush1.msra.mxu0 %v2976
    %3542 = vmatprep.subr.mxu0 0.0
    %3543 = vmatpush1.msra.mxu0 %v3534
    %3544 = vmatprep.subr.mxu0 0.0
    %3545 = vmatpush1.msra.mxu0 0.0
    %3546 = vmatprep.subr.mxu0 0.0
    %3547 = vmatpush1.msra.mxu0 0.0
    %3548 = vmatprep.subr.mxu0 0.0
    %3549 = vmatpush1.msra.mxu0 0.0
    %3550 = vmatprep.subr.mxu0 0.0
    %3551 = vmatpush1.msra.mxu0 0.0
    %3552 = vmatprep.subr.mxu0 0.0
    %3553 = vmatpush1.msra.mxu0 0.0
    %3554 = vmatprep.subr.mxu0 0.0
    %3555 = vmatpush1.msra.mxu0 0.0
    %3556 = vmatprep.subr.mxu0 0.0
    %3557 = vmatpush1.msra.mxu0 0.0
    %3558 = vmatprep.subr.mxu0 0.0
    %3559 = vmatpush1.msra.mxu0 0.0
    %3560 = vmatprep.subr.mxu0 0.0
    %3561 = vmatpush1.msra.mxu0 0.0
    %3562 = vmatprep.subr.mxu0 0.0
    %3563 = vmatpush1.msra.mxu0 0.0
    %3564 = vmatprep.subr.mxu0 0.0
    %3565 = vmatpush1.msra.mxu0 0.0
    %3566 = vmatprep.subr.mxu0 0.0
    %3567 = vmatpush1.msra.mxu0 0.0
    %3568 = vmatprep.subr.mxu0 0.0
    %3569 = vmatpush1.msra.mxu0 0.0
    %3570 = vmatprep.subr.mxu0 0.0
    %3571 = vmatpush1.msra.mxu0 0.0
    %3572 = vmatprep.subr.mxu0 0.0
    %3573 = vmatpush1.msra.mxu0 0.0
    %3574 = vmatprep.subr.mxu0 0.0
    %3575 = vmatpush1.msra.mxu0 0.0
    %3576 = vmatprep.subr.mxu0 0.0
    %3577 = vmatpush1.msra.mxu0 0.0
    %3578 = vmatprep.subr.mxu0 0.0
    %3579 = vmatpush1.msra.mxu0 0.0
    %3580 = vmatprep.subr.mxu0 0.0
    %3581 = vmatpush1.msra.mxu0 0.0
    %3582 = vmatprep.subr.mxu0 0.0
    %3583 = vmatpush1.msra.mxu0 0.0
    %3584 = vmatprep.subr.mxu0 0.0
    %3585 = vmatpush1.msra.mxu0 0.0
    %3586 = vmatprep.subr.mxu0 0.0
    %3587 = vmatpush1.msra.mxu0 0.0
    %3588 = vmatprep.subr.mxu0 0.0
    %3589 = vmatpush1.msra.mxu0 0.0
    %3590 = vmatprep.subr.mxu0 0.0
    %3591 = vmatpush1.msra.mxu0 0.0
    %3592 = vmatprep.subr.mxu0 0.0
    %3593 = vmatpush1.msra.mxu0 0.0
    %3594 = vmatprep.subr.mxu0 0.0
    %3595 = vmatpush1.msra.mxu0 0.0
    %3596 = vmatprep.subr.mxu0 0.0
    %3597 = vmatpush1.msra.mxu0 0.0
    %3598 = vmatprep.subr.mxu0 0.0
    %3599 = vmatpush1.msra.mxu0 0.0
    %3600 = vmatprep.mubr.f32.mxu0 0.0
    %3601 = vmatmul.mubr.f32.gmra.mrb[0].mxu0 %v3019
    %v3602 = vpop.f32.mrb[0].mxu0
    %v3603 = vadd.f32 %v3015, %v3602
    %v3604 = vpop.f32.mrb[0].mxu0
    %3605 = vdwg.mxu0
    %v3607 = vsel %vm3021, %v2981, 0
    %3609 = vmatprep.subr.mxu0 0.0
    %3610 = vmatpush1.msra.mxu0 %v2978
    %3611 = vmatprep.subr.mxu0 0.0
    %3612 = vmatpush1.msra.mxu0 %v2979
    %3613 = vmatprep.subr.mxu0 0.0
    %3614 = vmatpush1.msra.mxu0 %v2980
    %3615 = vmatprep.subr.mxu0 0.0
    %3616 = vmatpush1.msra.mxu0 %v3607
    %3617 = vmatprep.subr.mxu0 0.0
    %3618 = vmatpush1.msra.mxu0 0.0
    %3619 = vmatprep.subr.mxu0 0.0
    %3620 = vmatpush1.msra.mxu0 0.0
    %3621 = vmatprep.subr.mxu0 0.0
    %3622 = vmatpush1.msra.mxu0 0.0
    %3623 = vmatprep.subr.mxu0 0.0
    %3624 = vmatpush1.msra.mxu0 0.0
    %3625 = vmatprep.subr.mxu0 0.0
    %3626 = vmatpush1.msra.mxu0 0.0
    %3627 = vmatprep.subr.mxu0 0.0
    %3628 = vmatpush1.msra.mxu0 0.0
    %3629 = vmatprep.subr.mxu0 0.0
    %3630 = vmatpush1.msra.mxu0 0.0
    %3631 = vmatprep.subr.mxu0 0.0
    %3632 = vmatpush1.msra.mxu0 0.0
    %3633 = vmatprep.subr.mxu0 0.0
    %3634 = vmatpush1.msra.mxu0 0.0
    %3635 = vmatprep.subr.mxu0 0.0
    %3636 = vmatpush1.msra.mxu0 0.0
    %3637 = vmatprep.subr.mxu0 0.0
    %3638 = vmatpush1.msra.mxu0 0.0
    %3639 = vmatprep.subr.mxu0 0.0
    %3640 = vmatpush1.msra.mxu0 0.0
    %3641 = vmatprep.subr.mxu0 0.0
    %3642 = vmatpush1.msra.mxu0 0.0
    %3643 = vmatprep.subr.mxu0 0.0
    %3644 = vmatpush1.msra.mxu0 0.0
    %3645 = vmatprep.subr.mxu0 0.0
    %3646 = vmatpush1.msra.mxu0 0.0
    %3647 = vmatprep.subr.mxu0 0.0
    %3648 = vmatpush1.msra.mxu0 0.0
    %3649 = vmatprep.subr.mxu0 0.0
    %3650 = vmatpush1.msra.mxu0 0.0
    %3651 = vmatprep.subr.mxu0 0.0
    %3652 = vmatpush1.msra.mxu0 0.0
    %3653 = vmatprep.subr.mxu0 0.0
    %3654 = vmatpush1.msra.mxu0 0.0
    %3655 = vmatprep.subr.mxu0 0.0
    %3656 = vmatpush1.msra.mxu0 0.0
    %3657 = vmatprep.subr.mxu0 0.0
    %3658 = vmatpush1.msra.mxu0 0.0
    %3659 = vmatprep.subr.mxu0 0.0
    %3660 = vmatpush1.msra.mxu0 0.0
    %3661 = vmatprep.subr.mxu0 0.0
    %3662 = vmatpush1.msra.mxu0 0.0
    %3663 = vmatprep.subr.mxu0 0.0
    %3664 = vmatpush1.msra.mxu0 0.0
    %3665 = vmatprep.subr.mxu0 0.0
    %3666 = vmatpush1.msra.mxu0 0.0
    %3667 = vmatprep.subr.mxu0 0.0
    %3668 = vmatpush1.msra.mxu0 0.0
    %3669 = vmatprep.subr.mxu0 0.0
    %3670 = vmatpush1.msra.mxu0 0.0
    %3671 = vmatprep.subr.mxu0 0.0
    %3672 = vmatpush1.msra.mxu0 0.0
    %3673 = vmatprep.mubr.f32.mxu0 0.0
    %3674 = vmatmul.mubr.f32.gmra.mrb[0].mxu0 %v3019
    %v3675 = vpop.f32.mrb[0].mxu0
    %v3676 = vadd.f32 %v3015, %v3675
    %v3677 = vpop.f32.mrb[0].mxu0
    %3678 = vdwg.mxu0
    %v3680 = vsel %vm3021, %v2985, 0
    %3682 = vmatprep.subr.mxu0 0.0
    %3683 = vmatpush1.msra.mxu0 %v2982
    %3684 = vmatprep.subr.mxu0 0.0
    %3685 = vmatpush1.msra.mxu0 %v2983
    %3686 = vmatprep.subr.mxu0 0.0
    %3687 = vmatpush1.msra.mxu0 %v2984
    %3688 = vmatprep.subr.mxu0 0.0
    %3689 = vmatpush1.msra.mxu0 %v3680
    %3690 = vmatprep.subr.mxu0 0.0
    %3691 = vmatpush1.msra.mxu0 0.0
    %3692 = vmatprep.subr.mxu0 0.0
    %3693 = vmatpush1.msra.mxu0 0.0
    %3694 = vmatprep.subr.mxu0 0.0
    %3695 = vmatpush1.msra.mxu0 0.0
    %3696 = vmatprep.subr.mxu0 0.0
    %3697 = vmatpush1.msra.mxu0 0.0
    %3698 = vmatprep.subr.mxu0 0.0
    %3699 = vmatpush1.msra.mxu0 0.0
    %3700 = vmatprep.subr.mxu0 0.0
    %3701 = vmatpush1.msra.mxu0 0.0
    %3702 = vmatprep.subr.mxu0 0.0
    %3703 = vmatpush1.msra.mxu0 0.0
    %3704 = vmatprep.subr.mxu0 0.0
    %3705 = vmatpush1.msra.mxu0 0.0
    %3706 = vmatprep.subr.mxu0 0.0
    %3707 = vmatpush1.msra.mxu0 0.0
    %3708 = vmatprep.subr.mxu0 0.0
    %3709 = vmatpush1.msra.mxu0 0.0
    %3710 = vmatprep.subr.mxu0 0.0
    %3711 = vmatpush1.msra.mxu0 0.0
    %3712 = vmatprep.subr.mxu0 0.0
    %3713 = vmatpush1.msra.mxu0 0.0
    %3714 = vmatprep.subr.mxu0 0.0
    %3715 = vmatpush1.msra.mxu0 0.0
    %3716 = vmatprep.subr.mxu0 0.0
    %3717 = vmatpush1.msra.mxu0 0.0
    %3718 = vmatprep.subr.mxu0 0.0
    %3719 = vmatpush1.msra.mxu0 0.0
    %3720 = vmatprep.subr.mxu0 0.0
    %3721 = vmatpush1.msra.mxu0 0.0
    %3722 = vmatprep.subr.mxu0 0.0
    %3723 = vmatpush1.msra.mxu0 0.0
    %3724 = vmatprep.subr.mxu0 0.0
    %3725 = vmatpush1.msra.mxu0 0.0
    %3726 = vmatprep.subr.mxu0 0.0
    %3727 = vmatpush1.msra.mxu0 0.0
    %3728 = vmatprep.subr.mxu0 0.0
    %3729 = vmatpush1.msra.mxu0 0.0
    %3730 = vmatprep.subr.mxu0 0.0
    %3731 = vmatpush1.msra.mxu0 0.0
    %3732 = vmatprep.subr.mxu0 0.0
    %3733 = vmatpush1.msra.mxu0 0.0
    %3734 = vmatprep.subr.mxu0 0.0
    %3735 = vmatpush1.msra.mxu0 0.0
    %3736 = vmatprep.subr.mxu0 0.0
    %3737 = vmatpush1.msra.mxu0 0.0
    %3738 = vmatprep.subr.mxu0 0.0
    %3739 = vmatpush1.msra.mxu0 0.0
    %3740 = vmatprep.subr.mxu0 0.0
    %3741 = vmatpush1.msra.mxu0 0.0
    %3742 = vmatprep.subr.mxu0 0.0
    %3743 = vmatpush1.msra.mxu0 0.0
    %3744 = vmatprep.subr.mxu0 0.0
    %3745 = vmatpush1.msra.mxu0 0.0
    %3746 = vmatprep.mubr.f32.mxu0 0.0
    %3747 = vmatmul.mubr.f32.gmra.mrb[0].mxu0 %v3019
    %v3748 = vpop.f32.mrb[0].mxu0
    %v3749 = vadd.f32 %v3015, %v3748
    %v3750 = vpop.f32.mrb[0].mxu0
    %3751 = vdwg.mxu0
    %v3753 = vsel %vm3021, %v2989, 0
    %3755 = vmatprep.subr.mxu0 0.0
    %3756 = vmatpush1.msra.mxu0 %v2986
    %3757 = vmatprep.subr.mxu0 0.0
    %3758 = vmatpush1.msra.mxu0 %v2987
    %3759 = vmatprep.subr.mxu0 0.0
    %3760 = vmatpush1.msra.mxu0 %v2988
    %3761 = vmatprep.subr.mxu0 0.0
    %3762 = vmatpush1.msra.mxu0 %v3753
    %3763 = vmatprep.subr.mxu0 0.0
    %3764 = vmatpush1.msra.mxu0 0.0
    %3765 = vmatprep.subr.mxu0 0.0
    %3766 = vmatpush1.msra.mxu0 0.0
    %3767 = vmatprep.subr.mxu0 0.0
    %3768 = vmatpush1.msra.mxu0 0.0
    %3769 = vmatprep.subr.mxu0 0.0
    %3770 = vmatpush1.msra.mxu0 0.0
    %3771 = vmatprep.subr.mxu0 0.0
    %3772 = vmatpush1.msra.mxu0 0.0
    %3773 = vmatprep.subr.mxu0 0.0
    %3774 = vmatpush1.msra.mxu0 0.0
    %3775 = vmatprep.subr.mxu0 0.0
    %3776 = vmatpush1.msra.mxu0 0.0
    %3777 = vmatprep.subr.mxu0 0.0
    %3778 = vmatpush1.msra.mxu0 0.0
    %3779 = vmatprep.subr.mxu0 0.0
    %3780 = vmatpush1.msra.mxu0 0.0
    %3781 = vmatprep.subr.mxu0 0.0
    %3782 = vmatpush1.msra.mxu0 0.0
    %3783 = vmatprep.subr.mxu0 0.0
    %3784 = vmatpush1.msra.mxu0 0.0
    %3785 = vmatprep.subr.mxu0 0.0
    %3786 = vmatpush1.msra.mxu0 0.0
    %3787 = vmatprep.subr.mxu0 0.0
    %3788 = vmatpush1.msra.mxu0 0.0
    %3789 = vmatprep.subr.mxu0 0.0
    %3790 = vmatpush1.msra.mxu0 0.0
    %3791 = vmatprep.subr.mxu0 0.0
    %3792 = vmatpush1.msra.mxu0 0.0
    %3793 = vmatprep.subr.mxu0 0.0
    %3794 = vmatpush1.msra.mxu0 0.0
    %3795 = vmatprep.subr.mxu0 0.0
    %3796 = vmatpush1.msra.mxu0 0.0
    %3797 = vmatprep.subr.mxu0 0.0
    %3798 = vmatpush1.msra.mxu0 0.0
    %3799 = vmatprep.subr.mxu0 0.0
    %3800 = vmatpush1.msra.mxu0 0.0
    %3801 = vmatprep.subr.mxu0 0.0
    %3802 = vmatpush1.msra.mxu0 0.0
    %3803 = vmatprep.subr.mxu0 0.0
    %3804 = vmatpush1.msra.mxu0 0.0
    %3805 = vmatprep.subr.mxu0 0.0
    %3806 = vmatpush1.msra.mxu0 0.0
    %3807 = vmatprep.subr.mxu0 0.0
    %3808 = vmatpush1.msra.mxu0 0.0
    %3809 = vmatprep.subr.mxu0 0.0
    %3810 = vmatpush1.msra.mxu0 0.0
    %3811 = vmatprep.subr.mxu0 0.0
    %3812 = vmatpush1.msra.mxu0 0.0
    %3813 = vmatprep.subr.mxu0 0.0
    %3814 = vmatpush1.msra.mxu0 0.0
    %3815 = vmatprep.subr.mxu0 0.0
    %3816 = vmatpush1.msra.mxu0 0.0
    %3817 = vmatprep.subr.mxu0 0.0
    %3818 = vmatpush1.msra.mxu0 0.0
    %3819 = vmatprep.mubr.f32.mxu0 0.0
    %3820 = vmatmul.mubr.f32.gmra.mrb[0].mxu0 %v3019
    %v3821 = vpop.f32.mrb[0].mxu0
    %v3822 = vadd.f32 %v3015, %v3821
    %v3823 = vpop.f32.mrb[0].mxu0
    %3824 = vdwg.mxu0
    %v3826 = vsel %vm3021, %v2993, 0
    %3828 = vmatprep.subr.mxu0 0.0
    %3829 = vmatpush1.msra.mxu0 %v2990
    %3830 = vmatprep.subr.mxu0 0.0
    %3831 = vmatpush1.msra.mxu0 %v2991
    %3832 = vmatprep.subr.mxu0 0.0
    %3833 = vmatpush1.msra.mxu0 %v2992
    %3834 = vmatprep.subr.mxu0 0.0
    %3835 = vmatpush1.msra.mxu0 %v3826
    %3836 = vmatprep.subr.mxu0 0.0
    %3837 = vmatpush1.msra.mxu0 0.0
    %3838 = vmatprep.subr.mxu0 0.0
    %3839 = vmatpush1.msra.mxu0 0.0
    %3840 = vmatprep.subr.mxu0 0.0
    %3841 = vmatpush1.msra.mxu0 0.0
    %3842 = vmatprep.subr.mxu0 0.0
    %3843 = vmatpush1.msra.mxu0 0.0
    %3844 = vmatprep.subr.mxu0 0.0
    %3845 = vmatpush1.msra.mxu0 0.0
    %3846 = vmatprep.subr.mxu0 0.0
    %3847 = vmatpush1.msra.mxu0 0.0
    %3848 = vmatprep.subr.mxu0 0.0
    %3849 = vmatpush1.msra.mxu0 0.0
    %3850 = vmatprep.subr.mxu0 0.0
    %3851 = vmatpush1.msra.mxu0 0.0
    %3852 = vmatprep.subr.mxu0 0.0
    %3853 = vmatpush1.msra.mxu0 0.0
    %3854 = vmatprep.subr.mxu0 0.0
    %3855 = vmatpush1.msra.mxu0 0.0
    %3856 = vmatprep.subr.mxu0 0.0
    %3857 = vmatpush1.msra.mxu0 0.0
    %3858 = vmatprep.subr.mxu0 0.0
    %3859 = vmatpush1.msra.mxu0 0.0
    %3860 = vmatprep.subr.mxu0 0.0
    %3861 = vmatpush1.msra.mxu0 0.0
    %3862 = vmatprep.subr.mxu0 0.0
    %3863 = vmatpush1.msra.mxu0 0.0
    %3864 = vmatprep.subr.mxu0 0.0
    %3865 = vmatpush1.msra.mxu0 0.0
    %3866 = vmatprep.subr.mxu0 0.0
    %3867 = vmatpush1.msra.mxu0 0.0
    %3868 = vmatprep.subr.mxu0 0.0
    %3869 = vmatpush1.msra.mxu0 0.0
    %3870 = vmatprep.subr.mxu0 0.0
    %3871 = vmatpush1.msra.mxu0 0.0
    %3872 = vmatprep.subr.mxu0 0.0
    %3873 = vmatpush1.msra.mxu0 0.0
    %3874 = vmatprep.subr.mxu0 0.0
    %3875 = vmatpush1.msra.mxu0 0.0
    %3876 = vmatprep.subr.mxu0 0.0
    %3877 = vmatpush1.msra.mxu0 0.0
    %3878 = vmatprep.subr.mxu0 0.0
    %3879 = vmatpush1.msra.mxu0 0.0
    %3880 = vmatprep.subr.mxu0 0.0
    %3881 = vmatpush1.msra.mxu0 0.0
    %3882 = vmatprep.subr.mxu0 0.0
    %3883 = vmatpush1.msra.mxu0 0.0
    %3884 = vmatprep.subr.mxu0 0.0
    %3885 = vmatpush1.msra.mxu0 0.0
    %3886 = vmatprep.subr.mxu0 0.0
    %3887 = vmatpush1.msra.mxu0 0.0
    %3888 = vmatprep.subr.mxu0 0.0
    %3889 = vmatpush1.msra.mxu0 0.0
    %3890 = vmatprep.subr.mxu0 0.0
    %3891 = vmatpush1.msra.mxu0 0.0
    %3892 = vmatprep.mubr.f32.mxu0 0.0
    %3893 = vmatmul.mubr.f32.gmra.mrb[0].mxu0 %v3019
    %v3894 = vpop.f32.mrb[0].mxu0
    %v3895 = vadd.f32 %v3015, %v3894
    %v3896 = vpop.f32.mrb[0].mxu0
    %3897 = vdwg.mxu0
    %v3899 = vsel %vm3021, %v2997, 0
    %3901 = vmatprep.subr.mxu0 0.0
    %3902 = vmatpush1.msra.mxu0 %v2994
    %3903 = vmatprep.subr.mxu0 0.0
    %3904 = vmatpush1.msra.mxu0 %v2995
    %3905 = vmatprep.subr.mxu0 0.0
    %3906 = vmatpush1.msra.mxu0 %v2996
    %3907 = vmatprep.subr.mxu0 0.0
    %3908 = vmatpush1.msra.mxu0 %v3899
    %3909 = vmatprep.subr.mxu0 0.0
    %3910 = vmatpush1.msra.mxu0 0.0
    %3911 = vmatprep.subr.mxu0 0.0
    %3912 = vmatpush1.msra.mxu0 0.0
    %3913 = vmatprep.subr.mxu0 0.0
    %3914 = vmatpush1.msra.mxu0 0.0
    %3915 = vmatprep.subr.mxu0 0.0
    %3916 = vmatpush1.msra.mxu0 0.0
    %3917 = vmatprep.subr.mxu0 0.0
    %3918 = vmatpush1.msra.mxu0 0.0
    %3919 = vmatprep.subr.mxu0 0.0
    %3920 = vmatpush1.msra.mxu0 0.0
    %3921 = vmatprep.subr.mxu0 0.0
    %3922 = vmatpush1.msra.mxu0 0.0
    %3923 = vmatprep.subr.mxu0 0.0
    %3924 = vmatpush1.msra.mxu0 0.0
    %3925 = vmatprep.subr.mxu0 0.0
    %3926 = vmatpush1.msra.mxu0 0.0
    %3927 = vmatprep.subr.mxu0 0.0
    %3928 = vmatpush1.msra.mxu0 0.0
    %3929 = vmatprep.subr.mxu0 0.0
    %3930 = vmatpush1.msra.mxu0 0.0
    %3931 = vmatprep.subr.mxu0 0.0
    %3932 = vmatpush1.msra.mxu0 0.0
    %3933 = vmatprep.subr.mxu0 0.0
    %3934 = vmatpush1.msra.mxu0 0.0
    %3935 = vmatprep.subr.mxu0 0.0
    %3936 = vmatpush1.msra.mxu0 0.0
    %3937 = vmatprep.subr.mxu0 0.0
    %3938 = vmatpush1.msra.mxu0 0.0
    %3939 = vmatprep.subr.mxu0 0.0
    %3940 = vmatpush1.msra.mxu0 0.0
    %3941 = vmatprep.subr.mxu0 0.0
    %3942 = vmatpush1.msra.mxu0 0.0
    %3943 = vmatprep.subr.mxu0 0.0
    %3944 = vmatpush1.msra.mxu0 0.0
    %3945 = vmatprep.subr.mxu0 0.0
    %3946 = vmatpush1.msra.mxu0 0.0
    %3947 = vmatprep.subr.mxu0 0.0
    %3948 = vmatpush1.msra.mxu0 0.0
    %3949 = vmatprep.subr.mxu0 0.0
    %3950 = vmatpush1.msra.mxu0 0.0
    %3951 = vmatprep.subr.mxu0 0.0
    %3952 = vmatpush1.msra.mxu0 0.0
    %3953 = vmatprep.subr.mxu0 0.0
    %3954 = vmatpush1.msra.mxu0 0.0
    %3955 = vmatprep.subr.mxu0 0.0
    %3956 = vmatpush1.msra.mxu0 0.0
    %3957 = vmatprep.subr.mxu0 0.0
    %3958 = vmatpush1.msra.mxu0 0.0
    %3959 = vmatprep.subr.mxu0 0.0
    %3960 = vmatpush1.msra.mxu0 0.0
    %3961 = vmatprep.subr.mxu0 0.0
    %3962 = vmatpush1.msra.mxu0 0.0
    %3963 = vmatprep.subr.mxu0 0.0
    %3964 = vmatpush1.msra.mxu0 0.0
    %3965 = vmatprep.mubr.f32.mxu0 0.0
    %3966 = vmatmul.mubr.f32.gmra.mrb[0].mxu0 %v3019
    %v3967 = vpop.f32.mrb[0].mxu0
    %v3968 = vadd.f32 %v3015, %v3967
    %v3969 = vpop.f32.mrb[0].mxu0
    %3970 = vdwg.mxu0
    %v3972 = vsel %vm3021, %v3001, 0
    %3974 = vmatprep.subr.mxu0 0.0
    %3975 = vmatpush1.msra.mxu0 %v2998
    %3976 = vmatprep.subr.mxu0 0.0
    %3977 = vmatpush1.msra.mxu0 %v2999
    %3978 = vmatprep.subr.mxu0 0.0
    %3979 = vmatpush1.msra.mxu0 %v3000
    %3980 = vmatprep.subr.mxu0 0.0
    %3981 = vmatpush1.msra.mxu0 %v3972
    %3982 = vmatprep.subr.mxu0 0.0
    %3983 = vmatpush1.msra.mxu0 0.0
    %3984 = vmatprep.subr.mxu0 0.0
    %3985 = vmatpush1.msra.mxu0 0.0
    %3986 = vmatprep.subr.mxu0 0.0
    %3987 = vmatpush1.msra.mxu0 0.0
    %3988 = vmatprep.subr.mxu0 0.0
    %3989 = vmatpush1.msra.mxu0 0.0
    %3990 = vmatprep.subr.mxu0 0.0
    %3991 = vmatpush1.msra.mxu0 0.0
    %3992 = vmatprep.subr.mxu0 0.0
    %3993 = vmatpush1.msra.mxu0 0.0
    %3994 = vmatprep.subr.mxu0 0.0
    %3995 = vmatpush1.msra.mxu0 0.0
    %3996 = vmatprep.subr.mxu0 0.0
    %3997 = vmatpush1.msra.mxu0 0.0
    %3998 = vmatprep.subr.mxu0 0.0
    %3999 = vmatpush1.msra.mxu0 0.0
    %4000 = vmatprep.subr.mxu0 0.0
    %4001 = vmatpush1.msra.mxu0 0.0
    %4002 = vmatprep.subr.mxu0 0.0
    %4003 = vmatpush1.msra.mxu0 0.0
    %4004 = vmatprep.subr.mxu0 0.0
    %4005 = vmatpush1.msra.mxu0 0.0
    %4006 = vmatprep.subr.mxu0 0.0
    %4007 = vmatpush1.msra.mxu0 0.0
    %4008 = vmatprep.subr.mxu0 0.0
    %4009 = vmatpush1.msra.mxu0 0.0
    %4010 = vmatprep.subr.mxu0 0.0
    %4011 = vmatpush1.msra.mxu0 0.0
    %4012 = vmatprep.subr.mxu0 0.0
    %4013 = vmatpush1.msra.mxu0 0.0
    %4014 = vmatprep.subr.mxu0 0.0
    %4015 = vmatpush1.msra.mxu0 0.0
    %4016 = vmatprep.subr.mxu0 0.0
    %4017 = vmatpush1.msra.mxu0 0.0
    %4018 = vmatprep.subr.mxu0 0.0
    %4019 = vmatpush1.msra.mxu0 0.0
    %4020 = vmatprep.subr.mxu0 0.0
    %4021 = vmatpush1.msra.mxu0 0.0
    %4022 = vmatprep.subr.mxu0 0.0
    %4023 = vmatpush1.msra.mxu0 0.0
    %4024 = vmatprep.subr.mxu0 0.0
    %4025 = vmatpush1.msra.mxu0 0.0
    %4026 = vmatprep.subr.mxu0 0.0
    %4027 = vmatpush1.msra.mxu0 0.0
    %4028 = vmatprep.subr.mxu0 0.0
    %4029 = vmatpush1.msra.mxu0 0.0
    %4030 = vmatprep.subr.mxu0 0.0
    %4031 = vmatpush1.msra.mxu0 0.0
    %4032 = vmatprep.subr.mxu0 0.0
    %4033 = vmatpush1.msra.mxu0 0.0
    %4034 = vmatprep.subr.mxu0 0.0
    %4035 = vmatpush1.msra.mxu0 0.0
    %4036 = vmatprep.subr.mxu0 0.0
    %4037 = vmatpush1.msra.mxu0 0.0
    %4038 = vmatprep.mubr.f32.mxu0 0.0
    %4039 = vmatmul.mubr.f32.gmra.mrb[0].mxu0 %v3019
    %v4040 = vpop.f32.mrb[0].mxu0
    %v4041 = vadd.f32 %v3015, %v4040
    %v4042 = vpop.f32.mrb[0].mxu0
    %4043 = vdwg.mxu0
    %v4045 = vsel %vm3021, %v3005, 0
    %4047 = vmatprep.subr.mxu0 0.0
    %4048 = vmatpush1.msra.mxu0 %v3002
    %4049 = vmatprep.subr.mxu0 0.0
    %4050 = vmatpush1.msra.mxu0 %v3003
    %4051 = vmatprep.subr.mxu0 0.0
    %4052 = vmatpush1.msra.mxu0 %v3004
    %4053 = vmatprep.subr.mxu0 0.0
    %4054 = vmatpush1.msra.mxu0 %v4045
    %4055 = vmatprep.subr.mxu0 0.0
    %4056 = vmatpush1.msra.mxu0 0.0
    %4057 = vmatprep.subr.mxu0 0.0
    %4058 = vmatpush1.msra.mxu0 0.0
    %4059 = vmatprep.subr.mxu0 0.0
    %4060 = vmatpush1.msra.mxu0 0.0
    %4061 = vmatprep.subr.mxu0 0.0
    %4062 = vmatpush1.msra.mxu0 0.0
    %4063 = vmatprep.subr.mxu0 0.0
    %4064 = vmatpush1.msra.mxu0 0.0
    %4065 = vmatprep.subr.mxu0 0.0
    %4066 = vmatpush1.msra.mxu0 0.0
    %4067 = vmatprep.subr.mxu0 0.0
    %4068 = vmatpush1.msra.mxu0 0.0
    %4069 = vmatprep.subr.mxu0 0.0
    %4070 = vmatpush1.msra.mxu0 0.0
    %4071 = vmatprep.subr.mxu0 0.0
    %4072 = vmatpush1.msra.mxu0 0.0
    %4073 = vmatprep.subr.mxu0 0.0
    %4074 = vmatpush1.msra.mxu0 0.0
    %4075 = vmatprep.subr.mxu0 0.0
    %4076 = vmatpush1.msra.mxu0 0.0
    %4077 = vmatprep.subr.mxu0 0.0
    %4078 = vmatpush1.msra.mxu0 0.0
    %4079 = vmatprep.subr.mxu0 0.0
    %4080 = vmatpush1.msra.mxu0 0.0
    %4081 = vmatprep.subr.mxu0 0.0
    %4082 = vmatpush1.msra.mxu0 0.0
    %4083 = vmatprep.subr.mxu0 0.0
    %4084 = vmatpush1.msra.mxu0 0.0
    %4085 = vmatprep.subr.mxu0 0.0
    %4086 = vmatpush1.msra.mxu0 0.0
    %4087 = vmatprep.subr.mxu0 0.0
    %4088 = vmatpush1.msra.mxu0 0.0
    %4089 = vmatprep.subr.mxu0 0.0
    %4090 = vmatpush1.msra.mxu0 0.0
    %4091 = vmatprep.subr.mxu0 0.0
    %4092 = vmatpush1.msra.mxu0 0.0
    %4093 = vmatprep.subr.mxu0 0.0
    %4094 = vmatpush1.msra.mxu0 0.0
    %4095 = vmatprep.subr.mxu0 0.0
    %4096 = vmatpush1.msra.mxu0 0.0
    %4097 = vmatprep.subr.mxu0 0.0
    %4098 = vmatpush1.msra.mxu0 0.0
    %4099 = vmatprep.subr.mxu0 0.0
    %4100 = vmatpush1.msra.mxu0 0.0
    %4101 = vmatprep.subr.mxu0 0.0
    %4102 = vmatpush1.msra.mxu0 0.0
    %4103 = vmatprep.subr.mxu0 0.0
    %4104 = vmatpush1.msra.mxu0 0.0
    %4105 = vmatprep.subr.mxu0 0.0
    %4106 = vmatpush1.msra.mxu0 0.0
    %4107 = vmatprep.subr.mxu0 0.0
    %4108 = vmatpush1.msra.mxu0 0.0
    %4109 = vmatprep.subr.mxu0 0.0
    %4110 = vmatpush1.msra.mxu0 0.0
    %4111 = vmatprep.mubr.f32.mxu0 0.0
    %4112 = vmatmul.mubr.f32.gmra.mrb[0].mxu0 %v3019
    %v4113 = vpop.f32.mrb[0].mxu0
    %v4114 = vadd.f32 %v3015, %v4113
    %v4115 = vpop.f32.mrb[0].mxu0
    %4116 = vdwg.mxu0
    %v4118 = vsel %vm3021, %v3009, 0
    %4120 = vmatprep.subr.mxu0 0.0
    %4121 = vmatpush1.msra.mxu0 %v3006
    %4122 = vmatprep.subr.mxu0 0.0
    %4123 = vmatpush1.msra.mxu0 %v3007
    %4124 = vmatprep.subr.mxu0 0.0
    %4125 = vmatpush1.msra.mxu0 %v3008
    %4126 = vmatprep.subr.mxu0 0.0
    %4127 = vmatpush1.msra.mxu0 %v4118
    %4128 = vmatprep.subr.mxu0 0.0
    %4129 = vmatpush1.msra.mxu0 0.0
    %4130 = vmatprep.subr.mxu0 0.0
    %4131 = vmatpush1.msra.mxu0 0.0
    %4132 = vmatprep.subr.mxu0 0.0
    %4133 = vmatpush1.msra.mxu0 0.0
    %4134 = vmatprep.subr.mxu0 0.0
    %4135 = vmatpush1.msra.mxu0 0.0
    %4136 = vmatprep.subr.mxu0 0.0
    %4137 = vmatpush1.msra.mxu0 0.0
    %4138 = vmatprep.subr.mxu0 0.0
    %4139 = vmatpush1.msra.mxu0 0.0
    %4140 = vmatprep.subr.mxu0 0.0
    %4141 = vmatpush1.msra.mxu0 0.0
    %4142 = vmatprep.subr.mxu0 0.0
    %4143 = vmatpush1.msra.mxu0 0.0
    %4144 = vmatprep.subr.mxu0 0.0
    %4145 = vmatpush1.msra.mxu0 0.0
    %4146 = vmatprep.subr.mxu0 0.0
    %4147 = vmatpush1.msra.mxu0 0.0
    %4148 = vmatprep.subr.mxu0 0.0
    %4149 = vmatpush1.msra.mxu0 0.0
    %4150 = vmatprep.subr.mxu0 0.0
    %4151 = vmatpush1.msra.mxu0 0.0
    %4152 = vmatprep.subr.mxu0 0.0
    %4153 = vmatpush1.msra.mxu0 0.0
    %4154 = vmatprep.subr.mxu0 0.0
    %4155 = vmatpush1.msra.mxu0 0.0
    %4156 = vmatprep.subr.mxu0 0.0
    %4157 = vmatpush1.msra.mxu0 0.0
    %4158 = vmatprep.subr.mxu0 0.0
    %4159 = vmatpush1.msra.mxu0 0.0
    %4160 = vmatprep.subr.mxu0 0.0
    %4161 = vmatpush1.msra.mxu0 0.0
    %4162 = vmatprep.subr.mxu0 0.0
    %4163 = vmatpush1.msra.mxu0 0.0
    %4164 = vmatprep.subr.mxu0 0.0
    %4165 = vmatpush1.msra.mxu0 0.0
    %4166 = vmatprep.subr.mxu0 0.0
    %4167 = vmatpush1.msra.mxu0 0.0
    %4168 = vmatprep.subr.mxu0 0.0
    %4169 = vmatpush1.msra.mxu0 0.0
    %4170 = vmatprep.subr.mxu0 0.0
    %4171 = vmatpush1.msra.mxu0 0.0
    %4172 = vmatprep.subr.mxu0 0.0
    %4173 = vmatpush1.msra.mxu0 0.0
    %4174 = vmatprep.subr.mxu0 0.0
    %4175 = vmatpush1.msra.mxu0 0.0
    %4176 = vmatprep.subr.mxu0 0.0
    %4177 = vmatpush1.msra.mxu0 0.0
    %4178 = vmatprep.subr.mxu0 0.0
    %4179 = vmatpush1.msra.mxu0 0.0
    %4180 = vmatprep.subr.mxu0 0.0
    %4181 = vmatpush1.msra.mxu0 0.0
    %4182 = vmatprep.subr.mxu0 0.0
    %4183 = vmatpush1.msra.mxu0 0.0
    %4184 = vmatprep.mubr.f32.mxu0 0.0
    %4185 = vmatmul.mubr.f32.gmra.mrb[0].mxu0 %v3019
    %v4186 = vpop.f32.mrb[0].mxu0
    %v4187 = vadd.f32 %v3015, %v4186
    %v4188 = vpop.f32.mrb[0].mxu0
    %4189 = vdwg.mxu0
    %vm4190 = vcmask 261120
    %4191 = vst.msk [vmem:[#allocation8] sm:$0xff] %vm4190, %v3092
    %4192 = vst.msk [vmem:[#allocation8 + $0x8] sm:$0xff] %vm4190, %v3165
    %4193 = vst.msk [vmem:[#allocation8 + $0x10] sm:$0xff] %vm4190, %v3238
    %4194 = vst.msk [vmem:[#allocation8 + $0x18] sm:$0xff] %vm4190, %v3311
    %4195 = vst.msk [vmem:[#allocation8 + $0x20] sm:$0xff] %vm4190, %v3384
    %4196 = vst.msk [vmem:[#allocation8 + $0x28] sm:$0xff] %vm4190, %v3457
    %4197 = vst.msk [vmem:[#allocation8 + $0x30] sm:$0xff] %vm4190, %v3530
    %4198 = vst.msk [vmem:[#allocation8 + $0x38] sm:$0xff] %vm4190, %v3603
    %4199 = vst.msk [vmem:[#allocation8 + $0x40] sm:$0xff] %vm4190, %v3676
    %4200 = vst.msk [vmem:[#allocation8 + $0x48] sm:$0xff] %vm4190, %v3749
    %4201 = vst.msk [vmem:[#allocation8 + $0x50] sm:$0xff] %vm4190, %v3822
    %4202 = vst.msk [vmem:[#allocation8 + $0x58] sm:$0xff] %vm4190, %v3895
    %4203 = vst.msk [vmem:[#allocation8 + $0x60] sm:$0xff] %vm4190, %v3968
    %4204 = vst.msk [vmem:[#allocation8 + $0x68] sm:$0xff] %vm4190, %v4041
    %4205 = vst.msk [vmem:[#allocation8 + $0x70] sm:$0xff] %vm4190, %v4114
    %4206 = vst.msk [vmem:[#allocation8 + $0x78] sm:$0xff] %vm4190, %v4187
    // Predicated region
    $region26: #{tpu_custom_call.1} parent=1 // pred_check
      _
    $region27: #{tpu_custom_call.1} parent=1 // pred_check_branch
      %4208 = sbr.rel (0) target = $region29
    $region28: #{tpu_custom_call.1} parent=1 // pred_region
      %s4210 = ssub.s32 2048, 2048
      %4211 = vsyncadd [#allocation5], %s4210
      %s4212 = sshll.u32 [#allocation8], 4
      %s4213 = int_to_ptr.vmem [resolvable:$true] %s4212
      %4218 = dma.vmem_to_hbm [thread:$0]  %s4213, 2048, %s4, [#allocation5], 128, 128, 8
    $region29: #{tpu_custom_call.1} parent=1 // pred_fallthru
      _
    // Predicated region
    $region30: #{tpu_custom_call.1} parent=1 // pred_check
      _
    $region31: #{tpu_custom_call.1} parent=1 // pred_check_branch
      %4220 = sbr.rel (0) target = $region33
    $region32: #{tpu_custom_call.1} parent=1 // pred_region
      %4221 = dma.done [#allocation5], 2048
    $region33: #{tpu_custom_call.1} parent=1 // pred_fallthru
      _
    %4222 = vsyncpa [#allocation4], 1
    %4223 = vsyncpa [#allocation7], 1
    %4224 = vsyncpa [#allocation5], 1

</llo_original>
